<compile_context>
chip_gen: v6e
topology: v6e:2x2x1
jax: 0.10.0
libtpu: 0.0.40
codegen_flags: <defaults>
</compile_context>

<pallas_src>
import jax
import jax.numpy as jnp
from jax import lax
from jax.experimental import pallas as pl
from jax.experimental.pallas import tpu as pltpu


def _bilstm_kernel(x_ref, len_ref,
                   wih_ref, whh_ref, b_ref,
                   wfc_ref, bfc_ref,
                   out_ref):
    T, B, E = x_ref.shape            # x is (T, B, E) bf16 (time-major, no transpose needed)
    H8 = wih_ref.shape[1]            # 8H (fused gates, both directions)
    H = H8 // 8
    H2 = 2 * H

    lens = len_ref[...]                                   # (B, 1) int32

    # ---- fused input pre-projection: both directions in ONE bf16 MXU matmul ----
    x2d = x_ref[...].reshape(T * B, E)                    # bf16 operands, f32 accumulate
    xg = (jnp.dot(x2d, wih_ref[...], preferred_element_type=jnp.float32)
          + b_ref[...]).reshape(T, B, H8)                 # (T, B, 8H) f32

    whh = whh_ref[...]                                    # (2H, 8H) f32, block-diagonal

    # ---- hoisted lane / length masks (nothing rebuilt inside the recurrence) ----
    # Gate columns are gate-major, direction-minor: [i_f,i_b,f_f,f_b,g_f,g_b,o_f,o_b].
    lane8 = lax.broadcasted_iota(jnp.int32, (1, H8), 1)
    fwd8 = (lane8 % H2) < H                               # (1, 8H): forward-direction gate lanes
    lane2 = lax.broadcasted_iota(jnp.int32, (1, H2), 1)
    fwd2 = lane2 < H                                      # (1, 2H): forward half of the state

    t_iota = lax.broadcasted_iota(jnp.int32, (T, B, H2), 0)
    lane_t = lax.broadcasted_iota(jnp.int32, (T, B, H2), 2)
    lens_b = lens[None]                                   # (1, B, 1)
    # forward: capture h at t == len-1 (forward lanes only)
    cap = (lane_t < H) & (t_iota == (lens_b - 1))         # (T, B, 2H)
    # backward: at step s the bwd time index is T-1-s; update only while t < len
    upd = (lane_t < H) | ((T - 1 - t_iota) < lens_b)      # (T, B, 2H)

    h = jnp.zeros((B, H2), jnp.float32)                   # [h_fwd | h_bwd]
    c = jnp.zeros((B, H2), jnp.float32)
    out = jnp.zeros((B, H2), jnp.float32)

    # ---- fused bidirectional recurrence, fully unrolled (T static & small) ----
    for s in range(T):
        # fwd lanes take time s, bwd lanes take time T-1-s (static slices).
        xg_t = jnp.where(fwd8, xg[s], xg[T - 1 - s])      # (B, 8H)
        if s == 0:
            gates = xg_t                                  # h == 0: skip the first matmul
        else:
            gates = xg_t + jnp.dot(h, whh, preferred_element_type=jnp.float32)
        i_g = jax.nn.sigmoid(gates[:, 0 * H2:1 * H2])     # (B, 2H), vreg-aligned slices
        f_g = jax.nn.sigmoid(gates[:, 1 * H2:2 * H2])
        g_g = jnp.tanh(gates[:, 2 * H2:3 * H2])
        o_g = jax.nn.sigmoid(gates[:, 3 * H2:4 * H2])
        c_new = f_g * c + i_g * g_g
        h_new = o_g * jnp.tanh(c_new)
        out = jnp.where(cap[s], h_new, out)               # capture forward output
        h = jnp.where(upd[s], h_new, h)                   # bwd half frozen while padded
        c = jnp.where(upd[s], c_new, c)

    # feats = [out_forward | h_backward(at t=0)] without any concat / sub-vreg slice.
    feats = jnp.where(fwd2, out, h)                       # (B, 2H)
    # TODO(synk): nn.Dropout(p=0.5) is identity in eval mode; applied as a no-op.

    logits = (jnp.dot(feats, wfc_ref[...], preferred_element_type=jnp.float32)
              + bfc_ref[...])                             # (B, O_pad); padded lanes ~ -1e30
    m = jnp.max(logits, axis=1, keepdims=True)
    e = jnp.exp(logits - m)
    inv = pl.reciprocal(jnp.sum(e, axis=1, keepdims=True), approx=True)
    out_ref[...] = e * inv


def _fuse_gate_blocks(wf, wb, H):
    """[i,f,g,o] per direction -> gate-major, direction-minor [i_f,i_b,f_f,f_b,...]."""
    blocks = []
    for g in range(4):
        blocks.append(wf[:, g * H:(g + 1) * H])
        blocks.append(wb[:, g * H:(g + 1) * H])
    return jnp.concatenate(blocks, axis=1)


def bilstm_forward(params, tokens, text_len, *, b_blk=None, o_pad=128):
    emb = params["embedding"][tokens]                     # embedding gather (plain-JAX glue)
    B, T, E = emb.shape
    H = params["whh_f"].shape[0]
    O = params["wfc"].shape[1]
    O_pad = max(o_pad, O)

    lens = text_len.astype(jnp.int32).reshape(B, 1)

    # ---- host-side layout prep (traced XLA ops, outside the kernel) ----------
    # Time-major bf16 activations: one fused bf16 projection, no in-kernel transpose.
    x_tbe = jnp.transpose(emb, (1, 0, 2)).astype(jnp.bfloat16)          # (T, B, E)
    wih_cat = _fuse_gate_blocks(params["wih_f"], params["wih_b"], H).astype(jnp.bfloat16)
    zf = jnp.zeros_like(params["whh_f"])
    whh_cat = _fuse_gate_blocks(                                         # block-diagonal (2H, 8H)
        jnp.concatenate([params["whh_f"], zf], axis=0),
        jnp.concatenate([zf, params["whh_b"]], axis=0), H)
    b_cat = _fuse_gate_blocks(params["b_f"], params["b_b"], H)           # (1, 8H)

    # Lane-dense FC output: pad O -> O_pad; padded logits pushed to -1e30 so softmax
    # over the padded lanes contributes exactly 0.
    wfc = jnp.zeros((2 * H, O_pad), jnp.float32).at[:, :O].set(params["wfc"])
    bfc = jnp.full((1, O_pad), -1e30, jnp.float32).at[:, :O].set(params["bfc"])

    if b_blk is None:
        b_blk = B                      # toy sizes fit VMEM; shrink for production B
    assert B % b_blk == 0
    grid = (B // b_blk,)

    def _resident(arr):                # weights: constant index_map, stay resident
        n = arr.ndim
        return pl.BlockSpec(arr.shape, lambda i, _n=n: (0,) * _n)

    out_padded = pl.pallas_call(
        _bilstm_kernel,
        out_shape=jax.ShapeDtypeStruct((B, O_pad), jnp.float32),
        grid=grid,
        in_specs=[
            pl.BlockSpec((T, b_blk, E), lambda i: (0, i, 0)),   # activations, batch-blocked
            pl.BlockSpec((b_blk, 1), lambda i: (i, 0)),         # lengths
            _resident(wih_cat), _resident(whh_cat), _resident(b_cat),
            _resident(wfc), _resident(bfc),
        ],
        out_specs=pl.BlockSpec((b_blk, O_pad), lambda i: (i, 0)),
        compiler_params=pltpu.CompilerParams(
            dimension_semantics=("parallel",)),                 # batch blocks across TCs (v7x)
    )(x_tbe, lens, wih_cat, whh_cat, b_cat, wfc, bfc)
    return out_padded[:, :O]


def init_params(key, vocab_size, emb_dim=300, hidden=128, output_dim=2):
    ks = jax.random.split(key, 11)
    b_lstm = 1.0 / float(hidden) ** 0.5
    b_fc = 1.0 / float(2 * hidden) ** 0.5

    def u(k, shape, b):
        return jax.random.uniform(k, shape, jnp.float32, -b, b)

    return {
        "embedding": jax.random.normal(ks[0], (vocab_size, emb_dim), jnp.float32),
        "wih_f": u(ks[1], (emb_dim, 4 * hidden), b_lstm),
        "whh_f": u(ks[2], (hidden, 4 * hidden), b_lstm),
        # b_ih + b_hh folded (sum of two uniforms, matching torch.nn.LSTM init stats)
        "b_f":   u(ks[3], (1, 4 * hidden), b_lstm) + u(ks[4], (1, 4 * hidden), b_lstm),
        "wih_b": u(ks[5], (emb_dim, 4 * hidden), b_lstm),
        "whh_b": u(ks[6], (hidden, 4 * hidden), b_lstm),
        "b_b":   u(ks[7], (1, 4 * hidden), b_lstm) + u(ks[8], (1, 4 * hidden), b_lstm),
        "wfc":   u(ks[9], (2 * hidden, output_dim), b_fc),
        "bfc":   u(ks[10], (1, output_dim), b_fc),
    }


def reference_forward(params, tokens, text_len):
    """Pure-JAX f32 reference with identical packed-sequence semantics."""
    emb = params["embedding"][tokens]
    B, T, E = emb.shape
    H = params["whh_f"].shape[0]
    lens = text_len.astype(jnp.int32).reshape(B, 1)

    def cell(gx, h, c, whh):
        gates = gx + h @ whh
        i = jax.nn.sigmoid(gates[:, :H])
        f = jax.nn.sigmoid(gates[:, H:2 * H])
        g = jnp.tanh(gates[:, 2 * H:3 * H])
        o = jax.nn.sigmoid(gates[:, 3 * H:])
        c = f * c + i * g
        return o * jnp.tanh(c), c

    x2d = emb.reshape(B * T, E)
    xg_f = (x2d @ params["wih_f"] + params["b_f"]).reshape(B, T, 4 * H)
    xg_b = (x2d @ params["wih_b"] + params["b_b"]).reshape(B, T, 4 * H)

    h = c = jnp.zeros((B, H)); out_f = jnp.zeros((B, H))
    for t in range(T):
        h, c = cell(xg_f[:, t], h, c, params["whh_f"])
        out_f = jnp.where(t == lens - 1, h, out_f)

    hb = cb = jnp.zeros((B, H))
    for t in range(T - 1, -1, -1):
        hn, cn = cell(xg_b[:, t], hb, cb, params["whh_b"])
        hb = jnp.where(t < lens, hn, hb)
        cb = jnp.where(t < lens, cn, cb)

    feats = jnp.concatenate([out_f, hb], axis=1)
    logits = feats @ params["wfc"] + params["bfc"]
    return jax.nn.softmax(logits, axis=1)


if __name__ == "__main__":
    B, T, VOCAB, H, O = 2, 8, 50, 128, 2    # dimension=128 per the module default
    key = jax.random.PRNGKey(0)
    kp, kt = jax.random.split(key)

    params = init_params(kp, VOCAB, emb_dim=300, hidden=H, output_dim=O)
    tokens = jax.random.randint(kt, (B, T), 0, VOCAB, dtype=jnp.int32)
    text_len = jnp.array([T, 5], dtype=jnp.int32)   # variable lengths, max == T

    out = jax.block_until_ready(bilstm_forward(params, tokens, text_len))
    ref = reference_forward(params, tokens, text_len)

    assert out.shape == (B, O)
    assert bool(jnp.all(jnp.isfinite(out)))
    assert bool(jnp.allclose(jnp.sum(out, axis=1), 1.0, atol=5e-3))
    assert bool(jnp.allclose(out, ref, atol=1e-2, rtol=1e-2)), (out, ref)
    print("KERNEL_OK")
</pallas_src>

<mosaic_0001>
module attributes {stable_mosaic.version = 11 : i64} {
  func.func @_bilstm_kernel(%arg0: i32, %arg1: memref<8x2x300xbf16, #tpu.memory_space<vmem>>, %arg2: memref<2x1xi32, #tpu.memory_space<vmem>>, %arg3: memref<300x1024xbf16, #tpu.memory_space<vmem>>, %arg4: memref<256x1024xf32, #tpu.memory_space<vmem>>, %arg5: memref<1x1024xf32, #tpu.memory_space<vmem>>, %arg6: memref<256x128xf32, #tpu.memory_space<vmem>>, %arg7: memref<1x128xf32, #tpu.memory_space<vmem>>, %arg8: memref<2x128xf32, #tpu.memory_space<vmem>>) attributes {dimension_semantics = [#tpu.dimension_semantics<parallel>], iteration_bounds = array<i64: 1>, scalar_prefetch = 0 : i64, scratch_operands = 0 : i64, tpu.core_type = #tpu.core_type<tc>, window_params = [{transform_indices = @transform_0, window_bounds = array<i64: 8, 2, 300>}, {transform_indices = @transform_1, window_bounds = array<i64: 2, 1>}, {pipeline_mode = #tpu.pipeline_mode<synchronous>, transform_indices = @transform_2, window_bounds = array<i64: 300, 1024>}, {pipeline_mode = #tpu.pipeline_mode<synchronous>, transform_indices = @transform_3, window_bounds = array<i64: 256, 1024>}, {pipeline_mode = #tpu.pipeline_mode<synchronous>, transform_indices = @transform_4, window_bounds = array<i64: 1, 1024>}, {pipeline_mode = #tpu.pipeline_mode<synchronous>, transform_indices = @transform_5, window_bounds = array<i64: 256, 128>}, {pipeline_mode = #tpu.pipeline_mode<synchronous>, transform_indices = @transform_6, window_bounds = array<i64: 1, 128>}, {transform_indices = @transform_7, window_bounds = array<i64: 2, 128>}]} {
    %c0 = arith.constant 0 : index
    %c0_0 = arith.constant 0 : index
    %0 = vector.load %arg2[%c0, %c0_0] : memref<2x1xi32, #tpu.memory_space<vmem>>, vector<2x1xi32>
    %c0_1 = arith.constant 0 : index
    %c0_2 = arith.constant 0 : index
    %c0_3 = arith.constant 0 : index
    %1 = vector.load %arg1[%c0_1, %c0_2, %c0_3] : memref<8x2x300xbf16, #tpu.memory_space<vmem>>, vector<8x2x300xbf16>
    %2 = vector.shape_cast %1 : vector<8x2x300xbf16> to vector<16x300xbf16>
    %c0_4 = arith.constant 0 : index
    %c0_5 = arith.constant 0 : index
    %3 = vector.load %arg3[%c0_4, %c0_5] : memref<300x1024xbf16, #tpu.memory_space<vmem>>, vector<300x1024xbf16>
    %cst = arith.constant dense<0.000000e+00> : vector<16x1024xf32>
    %4 = tpu.matmul %2, %3, %cst {dimension_numbers = #tpu.dot_dimension_numbers<[1], [0], [0], [1], [0, 0, 1, 1], [], []>} : vector<16x300xbf16>, vector<300x1024xbf16>, vector<16x1024xf32> -> vector<16x1024xf32>
    %c0_6 = arith.constant 0 : index
    %c0_7 = arith.constant 0 : index
    %5 = vector.load %arg5[%c0_6, %c0_7] : memref<1x1024xf32, #tpu.memory_space<vmem>>, vector<1x1024xf32>
    %6 = vector.broadcast %5 : vector<1x1024xf32> to vector<16x1024xf32>
    %7 = arith.addf %4, %6 : vector<16x1024xf32>
    %8 = vector.shape_cast %7 : vector<16x1024xf32> to vector<8x2x1024xf32>
    %c0_8 = arith.constant 0 : index
    %c0_9 = arith.constant 0 : index
    %9 = vector.load %arg4[%c0_8, %c0_9] : memref<256x1024xf32, #tpu.memory_space<vmem>>, vector<256x1024xf32>
    %10 = tpu.iota {dimensions = array<i32: 1>} : vector<1x1024xi32>
    %c256_i32 = arith.constant 256 : i32
    %c0_i32 = arith.constant 0 : i32
    %11 = arith.cmpi eq, %c256_i32, %c0_i32 : i32
    %c1_i32 = arith.constant 1 : i32
    %12 = arith.select %11, %c1_i32, %c256_i32 : i32
    %13 = vector.broadcast %12 : i32 to vector<1x1024xi32>
    %14 = arith.remsi %10, %13 : vector<1x1024xi32>
    %c0_i32_10 = arith.constant 0 : i32
    %15 = vector.broadcast %c0_i32_10 : i32 to vector<1x1024xi32>
    %16 = arith.cmpi ne, %14, %15 : vector<1x1024xi32>
    %c0_i32_11 = arith.constant 0 : i32
    %17 = vector.broadcast %c0_i32_11 : i32 to vector<1x1024xi32>
    %18 = arith.cmpi slt, %14, %17 : vector<1x1024xi32>
    %c0_i32_12 = arith.constant 0 : i32
    %19 = arith.cmpi slt, %12, %c0_i32_12 : i32
    %20 = vector.broadcast %19 : i1 to vector<1x1024xi1>
    %21 = vector.broadcast %20 : vector<1x1024xi1> to vector<1x1024xi1>
    %22 = arith.xori %18, %21 : vector<1x1024xi1>
    %23 = arith.andi %22, %16 : vector<1x1024xi1>
    %24 = vector.broadcast %12 : i32 to vector<1x1024xi32>
    %25 = arith.addi %14, %24 : vector<1x1024xi32>
    %26 = arith.select %23, %25, %14 : vector<1x1024xi1>, vector<1x1024xi32>
    %c128_i32 = arith.constant 128 : i32
    %27 = vector.broadcast %c128_i32 : i32 to vector<1x1024xi32>
    %28 = arith.cmpi slt, %26, %27 : vector<1x1024xi32>
    %29 = tpu.iota {dimensions = array<i32: 1>} : vector<1x256xi32>
    %c128_i32_13 = arith.constant 128 : i32
    %30 = vector.broadcast %c128_i32_13 : i32 to vector<1x256xi32>
    %31 = arith.cmpi slt, %29, %30 : vector<1x256xi32>
    %32 = tpu.iota {dimensions = array<i32: 0>} : vector<8x2x256xi32>
    %33 = tpu.iota {dimensions = array<i32: 2>} : vector<8x2x256xi32>
    %34 = vector.shape_cast %0 : vector<2x1xi32> to vector<1x2x1xi32>
    %c128_i32_14 = arith.constant 128 : i32
    %35 = vector.broadcast %c128_i32_14 : i32 to vector<8x2x256xi32>
    %36 = arith.cmpi slt, %33, %35 : vector<8x2x256xi32>
    %c1_i32_15 = arith.constant 1 : i32
    %37 = vector.broadcast %c1_i32_15 : i32 to vector<1x2x1xi32>
    %38 = arith.subi %34, %37 : vector<1x2x1xi32>
    %39 = vector.broadcast %38 : vector<1x2x1xi32> to vector<8x2x256xi32>
    %40 = arith.cmpi eq, %32, %39 : vector<8x2x256xi32>
    %41 = arith.andi %36, %40 : vector<8x2x256xi1>
    %c128_i32_16 = arith.constant 128 : i32
    %42 = vector.broadcast %c128_i32_16 : i32 to vector<8x2x256xi32>
    %43 = arith.cmpi slt, %33, %42 : vector<8x2x256xi32>
    %c7_i32 = arith.constant 7 : i32
    %44 = vector.broadcast %c7_i32 : i32 to vector<8x2x256xi32>
    %45 = arith.subi %44, %32 : vector<8x2x256xi32>
    %46 = vector.broadcast %34 : vector<1x2x1xi32> to vector<8x2x256xi32>
    %47 = arith.cmpi slt, %45, %46 : vector<8x2x256xi32>
    %48 = arith.ori %43, %47 : vector<8x2x256xi1>
    %cst_17 = arith.constant 0.000000e+00 : f32
    %49 = vector.broadcast %cst_17 : f32 to vector<2x256xf32>
    %cst_18 = arith.constant 0.000000e+00 : f32
    %50 = vector.broadcast %cst_18 : f32 to vector<2x256xf32>
    %cst_19 = arith.constant 0.000000e+00 : f32
    %51 = vector.broadcast %cst_19 : f32 to vector<2x256xf32>
    %52 = vector.extract_strided_slice %8 {offsets = [0, 0, 0], sizes = [1, 2, 1024], strides = [1, 1, 1]} : vector<8x2x1024xf32> to vector<1x2x1024xf32>
    %53 = vector.shape_cast %52 : vector<1x2x1024xf32> to vector<2x1024xf32>
    %54 = vector.extract_strided_slice %8 {offsets = [7, 0, 0], sizes = [1, 2, 1024], strides = [1, 1, 1]} : vector<8x2x1024xf32> to vector<1x2x1024xf32>
    %55 = vector.shape_cast %54 : vector<1x2x1024xf32> to vector<2x1024xf32>
    %56 = vector.shape_cast %28 : vector<1x1024xi1> to vector<1x1024xi1>
    %57 = vector.broadcast %56 : vector<1x1024xi1> to vector<2x1024xi1>
    %58 = arith.select %57, %53, %55 : vector<2x1024xi1>, vector<2x1024xf32>
    %59 = vector.extract_strided_slice %58 {offsets = [0, 0], sizes = [2, 256], strides = [1, 1]} : vector<2x1024xf32> to vector<2x256xf32>
    %60 = arith.negf %59 : vector<2x256xf32>
    %61 = math.exp %60 : vector<2x256xf32>
    %cst_20 = arith.constant 1.000000e+00 : f32
    %62 = vector.broadcast %cst_20 : f32 to vector<2x256xf32>
    %63 = arith.addf %62, %61 : vector<2x256xf32>
    %64 = arith.divf %62, %63 : vector<2x256xf32>
    %65 = vector.extract_strided_slice %58 {offsets = [0, 256], sizes = [2, 256], strides = [1, 1]} : vector<2x1024xf32> to vector<2x256xf32>
    %66 = arith.negf %65 : vector<2x256xf32>
    %67 = math.exp %66 : vector<2x256xf32>
    %cst_21 = arith.constant 1.000000e+00 : f32
    %68 = vector.broadcast %cst_21 : f32 to vector<2x256xf32>
    %69 = arith.addf %68, %67 : vector<2x256xf32>
    %70 = arith.divf %68, %69 : vector<2x256xf32>
    %71 = vector.extract_strided_slice %58 {offsets = [0, 512], sizes = [2, 256], strides = [1, 1]} : vector<2x1024xf32> to vector<2x256xf32>
    %72 = math.tanh %71 : vector<2x256xf32>
    %73 = vector.extract_strided_slice %58 {offsets = [0, 768], sizes = [2, 256], strides = [1, 1]} : vector<2x1024xf32> to vector<2x256xf32>
    %74 = arith.negf %73 : vector<2x256xf32>
    %75 = math.exp %74 : vector<2x256xf32>
    %cst_22 = arith.constant 1.000000e+00 : f32
    %76 = vector.broadcast %cst_22 : f32 to vector<2x256xf32>
    %77 = arith.addf %76, %75 : vector<2x256xf32>
    %78 = arith.divf %76, %77 : vector<2x256xf32>
    %79 = arith.mulf %70, %50 : vector<2x256xf32>
    %80 = arith.mulf %64, %72 : vector<2x256xf32>
    %81 = arith.addf %79, %80 : vector<2x256xf32>
    %82 = math.tanh %81 : vector<2x256xf32>
    %83 = arith.mulf %78, %82 : vector<2x256xf32>
    %84 = vector.extract_strided_slice %41 {offsets = [0, 0, 0], sizes = [1, 2, 256], strides = [1, 1, 1]} : vector<8x2x256xi1> to vector<1x2x256xi1>
    %85 = vector.shape_cast %84 : vector<1x2x256xi1> to vector<2x256xi1>
    %86 = arith.select %85, %83, %51 : vector<2x256xi1>, vector<2x256xf32>
    %87 = vector.extract_strided_slice %48 {offsets = [0, 0, 0], sizes = [1, 2, 256], strides = [1, 1, 1]} : vector<8x2x256xi1> to vector<1x2x256xi1>
    %88 = vector.shape_cast %87 : vector<1x2x256xi1> to vector<2x256xi1>
    %89 = arith.select %88, %83, %49 : vector<2x256xi1>, vector<2x256xf32>
    %90 = vector.extract_strided_slice %48 {offsets = [0, 0, 0], sizes = [1, 2, 256], strides = [1, 1, 1]} : vector<8x2x256xi1> to vector<1x2x256xi1>
    %91 = vector.shape_cast %90 : vector<1x2x256xi1> to vector<2x256xi1>
    %92 = arith.select %91, %81, %50 : vector<2x256xi1>, vector<2x256xf32>
    %93 = vector.extract_strided_slice %8 {offsets = [1, 0, 0], sizes = [1, 2, 1024], strides = [1, 1, 1]} : vector<8x2x1024xf32> to vector<1x2x1024xf32>
    %94 = vector.shape_cast %93 : vector<1x2x1024xf32> to vector<2x1024xf32>
    %95 = vector.extract_strided_slice %8 {offsets = [6, 0, 0], sizes = [1, 2, 1024], strides = [1, 1, 1]} : vector<8x2x1024xf32> to vector<1x2x1024xf32>
    %96 = vector.shape_cast %95 : vector<1x2x1024xf32> to vector<2x1024xf32>
    %97 = vector.shape_cast %28 : vector<1x1024xi1> to vector<1x1024xi1>
    %98 = vector.broadcast %97 : vector<1x1024xi1> to vector<2x1024xi1>
    %99 = arith.select %98, %94, %96 : vector<2x1024xi1>, vector<2x1024xf32>
    %cst_23 = arith.constant dense<0.000000e+00> : vector<2x1024xf32>
    %100 = tpu.matmul %89, %9, %cst_23 {dimension_numbers = #tpu.dot_dimension_numbers<[1], [0], [0], [1], [0, 0, 1, 1], [], []>} : vector<2x256xf32>, vector<256x1024xf32>, vector<2x1024xf32> -> vector<2x1024xf32>
    %101 = arith.addf %99, %100 : vector<2x1024xf32>
    %102 = vector.extract_strided_slice %101 {offsets = [0, 0], sizes = [2, 256], strides = [1, 1]} : vector<2x1024xf32> to vector<2x256xf32>
    %103 = arith.negf %102 : vector<2x256xf32>
    %104 = math.exp %103 : vector<2x256xf32>
    %cst_24 = arith.constant 1.000000e+00 : f32
    %105 = vector.broadcast %cst_24 : f32 to vector<2x256xf32>
    %106 = arith.addf %105, %104 : vector<2x256xf32>
    %107 = arith.divf %105, %106 : vector<2x256xf32>
    %108 = vector.extract_strided_slice %101 {offsets = [0, 256], sizes = [2, 256], strides = [1, 1]} : vector<2x1024xf32> to vector<2x256xf32>
    %109 = arith.negf %108 : vector<2x256xf32>
    %110 = math.exp %109 : vector<2x256xf32>
    %cst_25 = arith.constant 1.000000e+00 : f32
    %111 = vector.broadcast %cst_25 : f32 to vector<2x256xf32>
    %112 = arith.addf %111, %110 : vector<2x256xf32>
    %113 = arith.divf %111, %112 : vector<2x256xf32>
    %114 = vector.extract_strided_slice %101 {offsets = [0, 512], sizes = [2, 256], strides = [1, 1]} : vector<2x1024xf32> to vector<2x256xf32>
    %115 = math.tanh %114 : vector<2x256xf32>
    %116 = vector.extract_strided_slice %101 {offsets = [0, 768], sizes = [2, 256], strides = [1, 1]} : vector<2x1024xf32> to vector<2x256xf32>
    %117 = arith.negf %116 : vector<2x256xf32>
    %118 = math.exp %117 : vector<2x256xf32>
    %cst_26 = arith.constant 1.000000e+00 : f32
    %119 = vector.broadcast %cst_26 : f32 to vector<2x256xf32>
    %120 = arith.addf %119, %118 : vector<2x256xf32>
    %121 = arith.divf %119, %120 : vector<2x256xf32>
    %122 = arith.mulf %113, %92 : vector<2x256xf32>
    %123 = arith.mulf %107, %115 : vector<2x256xf32>
    %124 = arith.addf %122, %123 : vector<2x256xf32>
    %125 = math.tanh %124 : vector<2x256xf32>
    %126 = arith.mulf %121, %125 : vector<2x256xf32>
    %127 = vector.extract_strided_slice %41 {offsets = [1, 0, 0], sizes = [1, 2, 256], strides = [1, 1, 1]} : vector<8x2x256xi1> to vector<1x2x256xi1>
    %128 = vector.shape_cast %127 : vector<1x2x256xi1> to vector<2x256xi1>
    %129 = arith.select %128, %126, %86 : vector<2x256xi1>, vector<2x256xf32>
    %130 = vector.extract_strided_slice %48 {offsets = [1, 0, 0], sizes = [1, 2, 256], strides = [1, 1, 1]} : vector<8x2x256xi1> to vector<1x2x256xi1>
    %131 = vector.shape_cast %130 : vector<1x2x256xi1> to vector<2x256xi1>
    %132 = arith.select %131, %126, %89 : vector<2x256xi1>, vector<2x256xf32>
    %133 = vector.extract_strided_slice %48 {offsets = [1, 0, 0], sizes = [1, 2, 256], strides = [1, 1, 1]} : vector<8x2x256xi1> to vector<1x2x256xi1>
    %134 = vector.shape_cast %133 : vector<1x2x256xi1> to vector<2x256xi1>
    %135 = arith.select %134, %124, %92 : vector<2x256xi1>, vector<2x256xf32>
    %136 = vector.extract_strided_slice %8 {offsets = [2, 0, 0], sizes = [1, 2, 1024], strides = [1, 1, 1]} : vector<8x2x1024xf32> to vector<1x2x1024xf32>
    %137 = vector.shape_cast %136 : vector<1x2x1024xf32> to vector<2x1024xf32>
    %138 = vector.extract_strided_slice %8 {offsets = [5, 0, 0], sizes = [1, 2, 1024], strides = [1, 1, 1]} : vector<8x2x1024xf32> to vector<1x2x1024xf32>
    %139 = vector.shape_cast %138 : vector<1x2x1024xf32> to vector<2x1024xf32>
    %140 = vector.shape_cast %28 : vector<1x1024xi1> to vector<1x1024xi1>
    %141 = vector.broadcast %140 : vector<1x1024xi1> to vector<2x1024xi1>
    %142 = arith.select %141, %137, %139 : vector<2x1024xi1>, vector<2x1024xf32>
    %cst_27 = arith.constant dense<0.000000e+00> : vector<2x1024xf32>
    %143 = tpu.matmul %132, %9, %cst_27 {dimension_numbers = #tpu.dot_dimension_numbers<[1], [0], [0], [1], [0, 0, 1, 1], [], []>} : vector<2x256xf32>, vector<256x1024xf32>, vector<2x1024xf32> -> vector<2x1024xf32>
    %144 = arith.addf %142, %143 : vector<2x1024xf32>
    %145 = vector.extract_strided_slice %144 {offsets = [0, 0], sizes = [2, 256], strides = [1, 1]} : vector<2x1024xf32> to vector<2x256xf32>
    %146 = arith.negf %145 : vector<2x256xf32>
    %147 = math.exp %146 : vector<2x256xf32>
    %cst_28 = arith.constant 1.000000e+00 : f32
    %148 = vector.broadcast %cst_28 : f32 to vector<2x256xf32>
    %149 = arith.addf %148, %147 : vector<2x256xf32>
    %150 = arith.divf %148, %149 : vector<2x256xf32>
    %151 = vector.extract_strided_slice %144 {offsets = [0, 256], sizes = [2, 256], strides = [1, 1]} : vector<2x1024xf32> to vector<2x256xf32>
    %152 = arith.negf %151 : vector<2x256xf32>
    %153 = math.exp %152 : vector<2x256xf32>
    %cst_29 = arith.constant 1.000000e+00 : f32
    %154 = vector.broadcast %cst_29 : f32 to vector<2x256xf32>
    %155 = arith.addf %154, %153 : vector<2x256xf32>
    %156 = arith.divf %154, %155 : vector<2x256xf32>
    %157 = vector.extract_strided_slice %144 {offsets = [0, 512], sizes = [2, 256], strides = [1, 1]} : vector<2x1024xf32> to vector<2x256xf32>
    %158 = math.tanh %157 : vector<2x256xf32>
    %159 = vector.extract_strided_slice %144 {offsets = [0, 768], sizes = [2, 256], strides = [1, 1]} : vector<2x1024xf32> to vector<2x256xf32>
    %160 = arith.negf %159 : vector<2x256xf32>
    %161 = math.exp %160 : vector<2x256xf32>
    %cst_30 = arith.constant 1.000000e+00 : f32
    %162 = vector.broadcast %cst_30 : f32 to vector<2x256xf32>
    %163 = arith.addf %162, %161 : vector<2x256xf32>
    %164 = arith.divf %162, %163 : vector<2x256xf32>
    %165 = arith.mulf %156, %135 : vector<2x256xf32>
    %166 = arith.mulf %150, %158 : vector<2x256xf32>
    %167 = arith.addf %165, %166 : vector<2x256xf32>
    %168 = math.tanh %167 : vector<2x256xf32>
    %169 = arith.mulf %164, %168 : vector<2x256xf32>
    %170 = vector.extract_strided_slice %41 {offsets = [2, 0, 0], sizes = [1, 2, 256], strides = [1, 1, 1]} : vector<8x2x256xi1> to vector<1x2x256xi1>
    %171 = vector.shape_cast %170 : vector<1x2x256xi1> to vector<2x256xi1>
    %172 = arith.select %171, %169, %129 : vector<2x256xi1>, vector<2x256xf32>
    %173 = vector.extract_strided_slice %48 {offsets = [2, 0, 0], sizes = [1, 2, 256], strides = [1, 1, 1]} : vector<8x2x256xi1> to vector<1x2x256xi1>
    %174 = vector.shape_cast %173 : vector<1x2x256xi1> to vector<2x256xi1>
    %175 = arith.select %174, %169, %132 : vector<2x256xi1>, vector<2x256xf32>
    %176 = vector.extract_strided_slice %48 {offsets = [2, 0, 0], sizes = [1, 2, 256], strides = [1, 1, 1]} : vector<8x2x256xi1> to vector<1x2x256xi1>
    %177 = vector.shape_cast %176 : vector<1x2x256xi1> to vector<2x256xi1>
    %178 = arith.select %177, %167, %135 : vector<2x256xi1>, vector<2x256xf32>
    %179 = vector.extract_strided_slice %8 {offsets = [3, 0, 0], sizes = [1, 2, 1024], strides = [1, 1, 1]} : vector<8x2x1024xf32> to vector<1x2x1024xf32>
    %180 = vector.shape_cast %179 : vector<1x2x1024xf32> to vector<2x1024xf32>
    %181 = vector.extract_strided_slice %8 {offsets = [4, 0, 0], sizes = [1, 2, 1024], strides = [1, 1, 1]} : vector<8x2x1024xf32> to vector<1x2x1024xf32>
    %182 = vector.shape_cast %181 : vector<1x2x1024xf32> to vector<2x1024xf32>
    %183 = vector.shape_cast %28 : vector<1x1024xi1> to vector<1x1024xi1>
    %184 = vector.broadcast %183 : vector<1x1024xi1> to vector<2x1024xi1>
    %185 = arith.select %184, %180, %182 : vector<2x1024xi1>, vector<2x1024xf32>
    %cst_31 = arith.constant dense<0.000000e+00> : vector<2x1024xf32>
    %186 = tpu.matmul %175, %9, %cst_31 {dimension_numbers = #tpu.dot_dimension_numbers<[1], [0], [0], [1], [0, 0, 1, 1], [], []>} : vector<2x256xf32>, vector<256x1024xf32>, vector<2x1024xf32> -> vector<2x1024xf32>
    %187 = arith.addf %185, %186 : vector<2x1024xf32>
    %188 = vector.extract_strided_slice %187 {offsets = [0, 0], sizes = [2, 256], strides = [1, 1]} : vector<2x1024xf32> to vector<2x256xf32>
    %189 = arith.negf %188 : vector<2x256xf32>
    %190 = math.exp %189 : vector<2x256xf32>
    %cst_32 = arith.constant 1.000000e+00 : f32
    %191 = vector.broadcast %cst_32 : f32 to vector<2x256xf32>
    %192 = arith.addf %191, %190 : vector<2x256xf32>
    %193 = arith.divf %191, %192 : vector<2x256xf32>
    %194 = vector.extract_strided_slice %187 {offsets = [0, 256], sizes = [2, 256], strides = [1, 1]} : vector<2x1024xf32> to vector<2x256xf32>
    %195 = arith.negf %194 : vector<2x256xf32>
    %196 = math.exp %195 : vector<2x256xf32>
    %cst_33 = arith.constant 1.000000e+00 : f32
    %197 = vector.broadcast %cst_33 : f32 to vector<2x256xf32>
    %198 = arith.addf %197, %196 : vector<2x256xf32>
    %199 = arith.divf %197, %198 : vector<2x256xf32>
    %200 = vector.extract_strided_slice %187 {offsets = [0, 512], sizes = [2, 256], strides = [1, 1]} : vector<2x1024xf32> to vector<2x256xf32>
    %201 = math.tanh %200 : vector<2x256xf32>
    %202 = vector.extract_strided_slice %187 {offsets = [0, 768], sizes = [2, 256], strides = [1, 1]} : vector<2x1024xf32> to vector<2x256xf32>
    %203 = arith.negf %202 : vector<2x256xf32>
    %204 = math.exp %203 : vector<2x256xf32>
    %cst_34 = arith.constant 1.000000e+00 : f32
    %205 = vector.broadcast %cst_34 : f32 to vector<2x256xf32>
    %206 = arith.addf %205, %204 : vector<2x256xf32>
    %207 = arith.divf %205, %206 : vector<2x256xf32>
    %208 = arith.mulf %199, %178 : vector<2x256xf32>
    %209 = arith.mulf %193, %201 : vector<2x256xf32>
    %210 = arith.addf %208, %209 : vector<2x256xf32>
    %211 = math.tanh %210 : vector<2x256xf32>
    %212 = arith.mulf %207, %211 : vector<2x256xf32>
    %213 = vector.extract_strided_slice %41 {offsets = [3, 0, 0], sizes = [1, 2, 256], strides = [1, 1, 1]} : vector<8x2x256xi1> to vector<1x2x256xi1>
    %214 = vector.shape_cast %213 : vector<1x2x256xi1> to vector<2x256xi1>
    %215 = arith.select %214, %212, %172 : vector<2x256xi1>, vector<2x256xf32>
    %216 = vector.extract_strided_slice %48 {offsets = [3, 0, 0], sizes = [1, 2, 256], strides = [1, 1, 1]} : vector<8x2x256xi1> to vector<1x2x256xi1>
    %217 = vector.shape_cast %216 : vector<1x2x256xi1> to vector<2x256xi1>
    %218 = arith.select %217, %212, %175 : vector<2x256xi1>, vector<2x256xf32>
    %219 = vector.extract_strided_slice %48 {offsets = [3, 0, 0], sizes = [1, 2, 256], strides = [1, 1, 1]} : vector<8x2x256xi1> to vector<1x2x256xi1>
    %220 = vector.shape_cast %219 : vector<1x2x256xi1> to vector<2x256xi1>
    %221 = arith.select %220, %210, %178 : vector<2x256xi1>, vector<2x256xf32>
    %222 = vector.extract_strided_slice %8 {offsets = [4, 0, 0], sizes = [1, 2, 1024], strides = [1, 1, 1]} : vector<8x2x1024xf32> to vector<1x2x1024xf32>
    %223 = vector.shape_cast %222 : vector<1x2x1024xf32> to vector<2x1024xf32>
    %224 = vector.extract_strided_slice %8 {offsets = [3, 0, 0], sizes = [1, 2, 1024], strides = [1, 1, 1]} : vector<8x2x1024xf32> to vector<1x2x1024xf32>
    %225 = vector.shape_cast %224 : vector<1x2x1024xf32> to vector<2x1024xf32>
    %226 = vector.shape_cast %28 : vector<1x1024xi1> to vector<1x1024xi1>
    %227 = vector.broadcast %226 : vector<1x1024xi1> to vector<2x1024xi1>
    %228 = arith.select %227, %223, %225 : vector<2x1024xi1>, vector<2x1024xf32>
    %cst_35 = arith.constant dense<0.000000e+00> : vector<2x1024xf32>
    %229 = tpu.matmul %218, %9, %cst_35 {dimension_numbers = #tpu.dot_dimension_numbers<[1], [0], [0], [1], [0, 0, 1, 1], [], []>} : vector<2x256xf32>, vector<256x1024xf32>, vector<2x1024xf32> -> vector<2x1024xf32>
    %230 = arith.addf %228, %229 : vector<2x1024xf32>
    %231 = vector.extract_strided_slice %230 {offsets = [0, 0], sizes = [2, 256], strides = [1, 1]} : vector<2x1024xf32> to vector<2x256xf32>
    %232 = arith.negf %231 : vector<2x256xf32>
    %233 = math.exp %232 : vector<2x256xf32>
    %cst_36 = arith.constant 1.000000e+00 : f32
    %234 = vector.broadcast %cst_36 : f32 to vector<2x256xf32>
    %235 = arith.addf %234, %233 : vector<2x256xf32>
    %236 = arith.divf %234, %235 : vector<2x256xf32>
    %237 = vector.extract_strided_slice %230 {offsets = [0, 256], sizes = [2, 256], strides = [1, 1]} : vector<2x1024xf32> to vector<2x256xf32>
    %238 = arith.negf %237 : vector<2x256xf32>
    %239 = math.exp %238 : vector<2x256xf32>
    %cst_37 = arith.constant 1.000000e+00 : f32
    %240 = vector.broadcast %cst_37 : f32 to vector<2x256xf32>
    %241 = arith.addf %240, %239 : vector<2x256xf32>
    %242 = arith.divf %240, %241 : vector<2x256xf32>
    %243 = vector.extract_strided_slice %230 {offsets = [0, 512], sizes = [2, 256], strides = [1, 1]} : vector<2x1024xf32> to vector<2x256xf32>
    %244 = math.tanh %243 : vector<2x256xf32>
    %245 = vector.extract_strided_slice %230 {offsets = [0, 768], sizes = [2, 256], strides = [1, 1]} : vector<2x1024xf32> to vector<2x256xf32>
    %246 = arith.negf %245 : vector<2x256xf32>
    %247 = math.exp %246 : vector<2x256xf32>
    %cst_38 = arith.constant 1.000000e+00 : f32
    %248 = vector.broadcast %cst_38 : f32 to vector<2x256xf32>
    %249 = arith.addf %248, %247 : vector<2x256xf32>
    %250 = arith.divf %248, %249 : vector<2x256xf32>
    %251 = arith.mulf %242, %221 : vector<2x256xf32>
    %252 = arith.mulf %236, %244 : vector<2x256xf32>
    %253 = arith.addf %251, %252 : vector<2x256xf32>
    %254 = math.tanh %253 : vector<2x256xf32>
    %255 = arith.mulf %250, %254 : vector<2x256xf32>
    %256 = vector.extract_strided_slice %41 {offsets = [4, 0, 0], sizes = [1, 2, 256], strides = [1, 1, 1]} : vector<8x2x256xi1> to vector<1x2x256xi1>
    %257 = vector.shape_cast %256 : vector<1x2x256xi1> to vector<2x256xi1>
    %258 = arith.select %257, %255, %215 : vector<2x256xi1>, vector<2x256xf32>
    %259 = vector.extract_strided_slice %48 {offsets = [4, 0, 0], sizes = [1, 2, 256], strides = [1, 1, 1]} : vector<8x2x256xi1> to vector<1x2x256xi1>
    %260 = vector.shape_cast %259 : vector<1x2x256xi1> to vector<2x256xi1>
    %261 = arith.select %260, %255, %218 : vector<2x256xi1>, vector<2x256xf32>
    %262 = vector.extract_strided_slice %48 {offsets = [4, 0, 0], sizes = [1, 2, 256], strides = [1, 1, 1]} : vector<8x2x256xi1> to vector<1x2x256xi1>
    %263 = vector.shape_cast %262 : vector<1x2x256xi1> to vector<2x256xi1>
    %264 = arith.select %263, %253, %221 : vector<2x256xi1>, vector<2x256xf32>
    %265 = vector.extract_strided_slice %8 {offsets = [5, 0, 0], sizes = [1, 2, 1024], strides = [1, 1, 1]} : vector<8x2x1024xf32> to vector<1x2x1024xf32>
    %266 = vector.shape_cast %265 : vector<1x2x1024xf32> to vector<2x1024xf32>
    %267 = vector.extract_strided_slice %8 {offsets = [2, 0, 0], sizes = [1, 2, 1024], strides = [1, 1, 1]} : vector<8x2x1024xf32> to vector<1x2x1024xf32>
    %268 = vector.shape_cast %267 : vector<1x2x1024xf32> to vector<2x1024xf32>
    %269 = vector.shape_cast %28 : vector<1x1024xi1> to vector<1x1024xi1>
    %270 = vector.broadcast %269 : vector<1x1024xi1> to vector<2x1024xi1>
    %271 = arith.select %270, %266, %268 : vector<2x1024xi1>, vector<2x1024xf32>
    %cst_39 = arith.constant dense<0.000000e+00> : vector<2x1024xf32>
    %272 = tpu.matmul %261, %9, %cst_39 {dimension_numbers = #tpu.dot_dimension_numbers<[1], [0], [0], [1], [0, 0, 1, 1], [], []>} : vector<2x256xf32>, vector<256x1024xf32>, vector<2x1024xf32> -> vector<2x1024xf32>
    %273 = arith.addf %271, %272 : vector<2x1024xf32>
    %274 = vector.extract_strided_slice %273 {offsets = [0, 0], sizes = [2, 256], strides = [1, 1]} : vector<2x1024xf32> to vector<2x256xf32>
    %275 = arith.negf %274 : vector<2x256xf32>
    %276 = math.exp %275 : vector<2x256xf32>
    %cst_40 = arith.constant 1.000000e+00 : f32
    %277 = vector.broadcast %cst_40 : f32 to vector<2x256xf32>
    %278 = arith.addf %277, %276 : vector<2x256xf32>
    %279 = arith.divf %277, %278 : vector<2x256xf32>
    %280 = vector.extract_strided_slice %273 {offsets = [0, 256], sizes = [2, 256], strides = [1, 1]} : vector<2x1024xf32> to vector<2x256xf32>
    %281 = arith.negf %280 : vector<2x256xf32>
    %282 = math.exp %281 : vector<2x256xf32>
    %cst_41 = arith.constant 1.000000e+00 : f32
    %283 = vector.broadcast %cst_41 : f32 to vector<2x256xf32>
    %284 = arith.addf %283, %282 : vector<2x256xf32>
    %285 = arith.divf %283, %284 : vector<2x256xf32>
    %286 = vector.extract_strided_slice %273 {offsets = [0, 512], sizes = [2, 256], strides = [1, 1]} : vector<2x1024xf32> to vector<2x256xf32>
    %287 = math.tanh %286 : vector<2x256xf32>
    %288 = vector.extract_strided_slice %273 {offsets = [0, 768], sizes = [2, 256], strides = [1, 1]} : vector<2x1024xf32> to vector<2x256xf32>
    %289 = arith.negf %288 : vector<2x256xf32>
    %290 = math.exp %289 : vector<2x256xf32>
    %cst_42 = arith.constant 1.000000e+00 : f32
    %291 = vector.broadcast %cst_42 : f32 to vector<2x256xf32>
    %292 = arith.addf %291, %290 : vector<2x256xf32>
    %293 = arith.divf %291, %292 : vector<2x256xf32>
    %294 = arith.mulf %285, %264 : vector<2x256xf32>
    %295 = arith.mulf %279, %287 : vector<2x256xf32>
    %296 = arith.addf %294, %295 : vector<2x256xf32>
    %297 = math.tanh %296 : vector<2x256xf32>
    %298 = arith.mulf %293, %297 : vector<2x256xf32>
    %299 = vector.extract_strided_slice %41 {offsets = [5, 0, 0], sizes = [1, 2, 256], strides = [1, 1, 1]} : vector<8x2x256xi1> to vector<1x2x256xi1>
    %300 = vector.shape_cast %299 : vector<1x2x256xi1> to vector<2x256xi1>
    %301 = arith.select %300, %298, %258 : vector<2x256xi1>, vector<2x256xf32>
    %302 = vector.extract_strided_slice %48 {offsets = [5, 0, 0], sizes = [1, 2, 256], strides = [1, 1, 1]} : vector<8x2x256xi1> to vector<1x2x256xi1>
    %303 = vector.shape_cast %302 : vector<1x2x256xi1> to vector<2x256xi1>
    %304 = arith.select %303, %298, %261 : vector<2x256xi1>, vector<2x256xf32>
    %305 = vector.extract_strided_slice %48 {offsets = [5, 0, 0], sizes = [1, 2, 256], strides = [1, 1, 1]} : vector<8x2x256xi1> to vector<1x2x256xi1>
    %306 = vector.shape_cast %305 : vector<1x2x256xi1> to vector<2x256xi1>
    %307 = arith.select %306, %296, %264 : vector<2x256xi1>, vector<2x256xf32>
    %308 = vector.extract_strided_slice %8 {offsets = [6, 0, 0], sizes = [1, 2, 1024], strides = [1, 1, 1]} : vector<8x2x1024xf32> to vector<1x2x1024xf32>
    %309 = vector.shape_cast %308 : vector<1x2x1024xf32> to vector<2x1024xf32>
    %310 = vector.extract_strided_slice %8 {offsets = [1, 0, 0], sizes = [1, 2, 1024], strides = [1, 1, 1]} : vector<8x2x1024xf32> to vector<1x2x1024xf32>
    %311 = vector.shape_cast %310 : vector<1x2x1024xf32> to vector<2x1024xf32>
    %312 = vector.shape_cast %28 : vector<1x1024xi1> to vector<1x1024xi1>
    %313 = vector.broadcast %312 : vector<1x1024xi1> to vector<2x1024xi1>
    %314 = arith.select %313, %309, %311 : vector<2x1024xi1>, vector<2x1024xf32>
    %cst_43 = arith.constant dense<0.000000e+00> : vector<2x1024xf32>
    %315 = tpu.matmul %304, %9, %cst_43 {dimension_numbers = #tpu.dot_dimension_numbers<[1], [0], [0], [1], [0, 0, 1, 1], [], []>} : vector<2x256xf32>, vector<256x1024xf32>, vector<2x1024xf32> -> vector<2x1024xf32>
    %316 = arith.addf %314, %315 : vector<2x1024xf32>
    %317 = vector.extract_strided_slice %316 {offsets = [0, 0], sizes = [2, 256], strides = [1, 1]} : vector<2x1024xf32> to vector<2x256xf32>
    %318 = arith.negf %317 : vector<2x256xf32>
    %319 = math.exp %318 : vector<2x256xf32>
    %cst_44 = arith.constant 1.000000e+00 : f32
    %320 = vector.broadcast %cst_44 : f32 to vector<2x256xf32>
    %321 = arith.addf %320, %319 : vector<2x256xf32>
    %322 = arith.divf %320, %321 : vector<2x256xf32>
    %323 = vector.extract_strided_slice %316 {offsets = [0, 256], sizes = [2, 256], strides = [1, 1]} : vector<2x1024xf32> to vector<2x256xf32>
    %324 = arith.negf %323 : vector<2x256xf32>
    %325 = math.exp %324 : vector<2x256xf32>
    %cst_45 = arith.constant 1.000000e+00 : f32
    %326 = vector.broadcast %cst_45 : f32 to vector<2x256xf32>
    %327 = arith.addf %326, %325 : vector<2x256xf32>
    %328 = arith.divf %326, %327 : vector<2x256xf32>
    %329 = vector.extract_strided_slice %316 {offsets = [0, 512], sizes = [2, 256], strides = [1, 1]} : vector<2x1024xf32> to vector<2x256xf32>
    %330 = math.tanh %329 : vector<2x256xf32>
    %331 = vector.extract_strided_slice %316 {offsets = [0, 768], sizes = [2, 256], strides = [1, 1]} : vector<2x1024xf32> to vector<2x256xf32>
    %332 = arith.negf %331 : vector<2x256xf32>
    %333 = math.exp %332 : vector<2x256xf32>
    %cst_46 = arith.constant 1.000000e+00 : f32
    %334 = vector.broadcast %cst_46 : f32 to vector<2x256xf32>
    %335 = arith.addf %334, %333 : vector<2x256xf32>
    %336 = arith.divf %334, %335 : vector<2x256xf32>
    %337 = arith.mulf %328, %307 : vector<2x256xf32>
    %338 = arith.mulf %322, %330 : vector<2x256xf32>
    %339 = arith.addf %337, %338 : vector<2x256xf32>
    %340 = math.tanh %339 : vector<2x256xf32>
    %341 = arith.mulf %336, %340 : vector<2x256xf32>
    %342 = vector.extract_strided_slice %41 {offsets = [6, 0, 0], sizes = [1, 2, 256], strides = [1, 1, 1]} : vector<8x2x256xi1> to vector<1x2x256xi1>
    %343 = vector.shape_cast %342 : vector<1x2x256xi1> to vector<2x256xi1>
    %344 = arith.select %343, %341, %301 : vector<2x256xi1>, vector<2x256xf32>
    %345 = vector.extract_strided_slice %48 {offsets = [6, 0, 0], sizes = [1, 2, 256], strides = [1, 1, 1]} : vector<8x2x256xi1> to vector<1x2x256xi1>
    %346 = vector.shape_cast %345 : vector<1x2x256xi1> to vector<2x256xi1>
    %347 = arith.select %346, %341, %304 : vector<2x256xi1>, vector<2x256xf32>
    %348 = vector.extract_strided_slice %48 {offsets = [6, 0, 0], sizes = [1, 2, 256], strides = [1, 1, 1]} : vector<8x2x256xi1> to vector<1x2x256xi1>
    %349 = vector.shape_cast %348 : vector<1x2x256xi1> to vector<2x256xi1>
    %350 = arith.select %349, %339, %307 : vector<2x256xi1>, vector<2x256xf32>
    %351 = vector.extract_strided_slice %8 {offsets = [7, 0, 0], sizes = [1, 2, 1024], strides = [1, 1, 1]} : vector<8x2x1024xf32> to vector<1x2x1024xf32>
    %352 = vector.shape_cast %351 : vector<1x2x1024xf32> to vector<2x1024xf32>
    %353 = vector.extract_strided_slice %8 {offsets = [0, 0, 0], sizes = [1, 2, 1024], strides = [1, 1, 1]} : vector<8x2x1024xf32> to vector<1x2x1024xf32>
    %354 = vector.shape_cast %353 : vector<1x2x1024xf32> to vector<2x1024xf32>
    %355 = vector.shape_cast %28 : vector<1x1024xi1> to vector<1x1024xi1>
    %356 = vector.broadcast %355 : vector<1x1024xi1> to vector<2x1024xi1>
    %357 = arith.select %356, %352, %354 : vector<2x1024xi1>, vector<2x1024xf32>
    %cst_47 = arith.constant dense<0.000000e+00> : vector<2x1024xf32>
    %358 = tpu.matmul %347, %9, %cst_47 {dimension_numbers = #tpu.dot_dimension_numbers<[1], [0], [0], [1], [0, 0, 1, 1], [], []>} : vector<2x256xf32>, vector<256x1024xf32>, vector<2x1024xf32> -> vector<2x1024xf32>
    %359 = arith.addf %357, %358 : vector<2x1024xf32>
    %360 = vector.extract_strided_slice %359 {offsets = [0, 0], sizes = [2, 256], strides = [1, 1]} : vector<2x1024xf32> to vector<2x256xf32>
    %361 = arith.negf %360 : vector<2x256xf32>
    %362 = math.exp %361 : vector<2x256xf32>
    %cst_48 = arith.constant 1.000000e+00 : f32
    %363 = vector.broadcast %cst_48 : f32 to vector<2x256xf32>
    %364 = arith.addf %363, %362 : vector<2x256xf32>
    %365 = arith.divf %363, %364 : vector<2x256xf32>
    %366 = vector.extract_strided_slice %359 {offsets = [0, 256], sizes = [2, 256], strides = [1, 1]} : vector<2x1024xf32> to vector<2x256xf32>
    %367 = arith.negf %366 : vector<2x256xf32>
    %368 = math.exp %367 : vector<2x256xf32>
    %cst_49 = arith.constant 1.000000e+00 : f32
    %369 = vector.broadcast %cst_49 : f32 to vector<2x256xf32>
    %370 = arith.addf %369, %368 : vector<2x256xf32>
    %371 = arith.divf %369, %370 : vector<2x256xf32>
    %372 = vector.extract_strided_slice %359 {offsets = [0, 512], sizes = [2, 256], strides = [1, 1]} : vector<2x1024xf32> to vector<2x256xf32>
    %373 = math.tanh %372 : vector<2x256xf32>
    %374 = vector.extract_strided_slice %359 {offsets = [0, 768], sizes = [2, 256], strides = [1, 1]} : vector<2x1024xf32> to vector<2x256xf32>
    %375 = arith.negf %374 : vector<2x256xf32>
    %376 = math.exp %375 : vector<2x256xf32>
    %cst_50 = arith.constant 1.000000e+00 : f32
    %377 = vector.broadcast %cst_50 : f32 to vector<2x256xf32>
    %378 = arith.addf %377, %376 : vector<2x256xf32>
    %379 = arith.divf %377, %378 : vector<2x256xf32>
    %380 = arith.mulf %371, %350 : vector<2x256xf32>
    %381 = arith.mulf %365, %373 : vector<2x256xf32>
    %382 = arith.addf %380, %381 : vector<2x256xf32>
    %383 = math.tanh %382 : vector<2x256xf32>
    %384 = arith.mulf %379, %383 : vector<2x256xf32>
    %385 = vector.extract_strided_slice %41 {offsets = [7, 0, 0], sizes = [1, 2, 256], strides = [1, 1, 1]} : vector<8x2x256xi1> to vector<1x2x256xi1>
    %386 = vector.shape_cast %385 : vector<1x2x256xi1> to vector<2x256xi1>
    %387 = arith.select %386, %384, %344 : vector<2x256xi1>, vector<2x256xf32>
    %388 = vector.extract_strided_slice %48 {offsets = [7, 0, 0], sizes = [1, 2, 256], strides = [1, 1, 1]} : vector<8x2x256xi1> to vector<1x2x256xi1>
    %389 = vector.shape_cast %388 : vector<1x2x256xi1> to vector<2x256xi1>
    %390 = arith.select %389, %384, %347 : vector<2x256xi1>, vector<2x256xf32>
    %391 = vector.shape_cast %31 : vector<1x256xi1> to vector<1x256xi1>
    %392 = vector.broadcast %391 : vector<1x256xi1> to vector<2x256xi1>
    %393 = arith.select %392, %387, %390 : vector<2x256xi1>, vector<2x256xf32>
    %c0_51 = arith.constant 0 : index
    %c0_52 = arith.constant 0 : index
    %394 = vector.load %arg6[%c0_51, %c0_52] : memref<256x128xf32, #tpu.memory_space<vmem>>, vector<256x128xf32>
    %cst_53 = arith.constant dense<0.000000e+00> : vector<2x128xf32>
    %395 = tpu.matmul %393, %394, %cst_53 {dimension_numbers = #tpu.dot_dimension_numbers<[1], [0], [0], [1], [0, 0, 1, 1], [], []>} : vector<2x256xf32>, vector<256x128xf32>, vector<2x128xf32> -> vector<2x128xf32>
    %c0_54 = arith.constant 0 : index
    %c0_55 = arith.constant 0 : index
    %396 = vector.load %arg7[%c0_54, %c0_55] : memref<1x128xf32, #tpu.memory_space<vmem>>, vector<1x128xf32>
    %397 = vector.broadcast %396 : vector<1x128xf32> to vector<2x128xf32>
    %398 = arith.addf %395, %397 : vector<2x128xf32>
    %cst_56 = arith.constant dense<0xFF800000> : vector<2xf32>
    %399 = vector.multi_reduction <maximumf>, %398, %cst_56 [1] : vector<2x128xf32> to vector<2xf32>
    %400 = vector.shape_cast %399 : vector<2xf32> to vector<2x1xf32>
    %401 = vector.broadcast %400 : vector<2x1xf32> to vector<2x128xf32>
    %402 = arith.subf %398, %401 : vector<2x128xf32>
    %403 = math.exp %402 : vector<2x128xf32>
    %cst_57 = arith.constant dense<0.000000e+00> : vector<2xf32>
    %404 = vector.multi_reduction <add>, %403, %cst_57 [1] : vector<2x128xf32> to vector<2xf32>
    %405 = vector.shape_cast %404 : vector<2xf32> to vector<2x1xf32>
    %406 = tpu.reciprocal %405 {approx = true} : vector<2x1xf32> -> vector<2x1xf32>
    %407 = vector.broadcast %406 : vector<2x1xf32> to vector<2x128xf32>
    %408 = arith.mulf %403, %407 : vector<2x128xf32>
    %c0_58 = arith.constant 0 : index
    %c0_59 = arith.constant 0 : index
    %409 = vector.load %arg8[%c0_58, %c0_59] : memref<2x128xf32, #tpu.memory_space<vmem>>, vector<2x128xf32>
    tpu.vector_store %arg8[%c0_58, %c0_59], %408 {strides = array<i32>} : memref<2x128xf32, #tpu.memory_space<vmem>>, vector<2x128xf32>,
    return
  }
  func.func @transform_0(%arg0: i32) -> (i32, i32, i32) {
    %c0_i32 = arith.constant 0 : i32
    %c0_i32_0 = arith.constant 0 : i32
    %c0_i32_1 = arith.constant 0 : i32
    return %c0_i32, %arg0, %c0_i32_0 : i32, i32, i32
  }
  func.func @transform_1(%arg0: i32) -> (i32, i32) {
    %c0_i32 = arith.constant 0 : i32
    %c0_i32_0 = arith.constant 0 : i32
    return %arg0, %c0_i32 : i32, i32
  }
  func.func @transform_2(%arg0: i32) -> (i32, i32) {
    %c0_i32 = arith.constant 0 : i32
    %c0_i32_0 = arith.constant 0 : i32
    %c0_i32_1 = arith.constant 0 : i32
    return %c0_i32, %c0_i32_0 : i32, i32
  }
  func.func @transform_3(%arg0: i32) -> (i32, i32) {
    %c0_i32 = arith.constant 0 : i32
    %c0_i32_0 = arith.constant 0 : i32
    %c0_i32_1 = arith.constant 0 : i32
    return %c0_i32, %c0_i32_0 : i32, i32
  }
  func.func @transform_4(%arg0: i32) -> (i32, i32) {
    %c0_i32 = arith.constant 0 : i32
    %c0_i32_0 = arith.constant 0 : i32
    %c0_i32_1 = arith.constant 0 : i32
    return %c0_i32, %c0_i32_0 : i32, i32
  }
  func.func @transform_5(%arg0: i32) -> (i32, i32) {
    %c0_i32 = arith.constant 0 : i32
    %c0_i32_0 = arith.constant 0 : i32
    %c0_i32_1 = arith.constant 0 : i32
    return %c0_i32, %c0_i32_0 : i32, i32
  }
  func.func @transform_6(%arg0: i32) -> (i32, i32) {
    %c0_i32 = arith.constant 0 : i32
    %c0_i32_0 = arith.constant 0 : i32
    %c0_i32_1 = arith.constant 0 : i32
    return %c0_i32, %c0_i32_0 : i32, i32
  }
  func.func @transform_7(%arg0: i32) -> (i32, i32) {
    %c0_i32 = arith.constant 0 : i32
    %c0_i32_0 = arith.constant 0 : i32
    return %arg0, %c0_i32 : i32, i32
  }
}

</mosaic_0001>

<llo_original>
// kernel: tpu_custom_call.1
$region0: #{tpu_custom_call.1}
  #allocation0 [shape = 'u32[]', space=smem, size = 0x4, offset = 0x4, fixed_abs, tag = 'smem constant byte address 0x4 - core index']
  #allocation1 [shape = 'u32[144,128]{1,0:T(1,128)}', space=vmem, size = 0x12000, scoped, tag = 'internal scratch']
  %s0 = inlined_call_operand.hbm [shape: bf16[8,2,300], index: 0, kind: input, shape index: {}]
  %s1 = inlined_call_operand.vmem [shape: s32[2,1], index: 1, kind: input, shape index: {}]
  %s2 = inlined_call_operand.hbm [shape: bf16[300,1024], index: 2, kind: input, shape index: {}]
  %s3 = inlined_call_operand.hbm [shape: f32[256,1024], index: 3, kind: input, shape index: {}]
  %s4 = inlined_call_operand.vmem [shape: f32[1,1024], index: 4, kind: input, shape index: {}]
  %s5 = inlined_call_operand.hbm [shape: f32[256,128], index: 5, kind: input, shape index: {}]
  %s6 = inlined_call_operand.vmem [shape: f32[1,128], index: 6, kind: input, shape index: {}]
  %s7 = inlined_call_operand.hbm [shape: f32[2,128], index: 7, kind: output, shape index: {}]
  %s8 = sld [smem:[#allocation0]]
  $region54: #{tpu_custom_call.1} parent=0
    _
  %s10 = ssub.s32 1, %s8
  %s11 = scalar_select 0, %s10, %s8
  $region1: #{tpu_custom_call.1} parent=0
    #allocation2 [shape = 'u8[12288]{0}', space=vmem, size = 0x3000, scoped, tag = 'input window, operand 0, single buffered']
    #allocation3 [shape = 's32[1]{0}', space=sflag, size = 0x4, scoped, tag = 'scoped memory for tpu_custom_call.1']
    #allocation4 [shape = 's32[1]{0}', space=sflag, size = 0x4, scoped, tag = 'scoped memory for tpu_custom_call.1']
    #allocation5 [shape = 'u8[622592]{0}', space=vmem, size = 0x98000, scoped, tag = 'input window, operand 2, single buffered']
    #allocation6 [shape = 's32[1]{0}', space=sflag, size = 0x4, scoped, tag = 'scoped memory for tpu_custom_call.1']
    #allocation7 [shape = 'u8[1048576]{0}', space=vmem, size = 0x100000, scoped, tag = 'input window, operand 3, single buffered']
    #allocation8 [shape = 'u8[131072]{0}', space=vmem, size = 0x20000, scoped, tag = 'input window, operand 5, single buffered']
    #allocation9 [shape = 's32[1]{0}', space=sflag, size = 0x4, scoped, tag = 'scoped memory for tpu_custom_call.1']
    #allocation10 [shape = 'u8[1024]{0}', space=vmem, size = 0x400, scoped, tag = 'output window, operand 0, single buffered']
    %12 = vsyncpa [#allocation3], 0
    %13 = vsyncpa [#allocation6], 0
    %14 = vsyncpa [#allocation9], 0
    %15 = vsyncpa [#allocation4], 0
    // Predicated region
    $region2: #{tpu_custom_call.1} parent=1 // pred_check
      _
    $region3: #{tpu_custom_call.1} parent=1 // pred_check_branch
      %17 = sbr.rel (0) target = $region5
    $region4: #{tpu_custom_call.1} parent=1 // pred_region
      %s19 = ssub.s32 384, 384
      %20 = vsyncadd [#allocation3], %s19
      %s21 = sshll.u32 [#allocation2], 4
      %s22 = int_to_ptr.vmem [resolvable:$true] %s21
      %27 = dma.hbm_to_vmem [thread:$0]  %s0, 384, %s22, [#allocation3], 48, 48, 3
    $region5: #{tpu_custom_call.1} parent=1 // pred_fallthru
      _
    // Predicated region
    $region6: #{tpu_custom_call.1} parent=1 // pred_check
      _
    $region7: #{tpu_custom_call.1} parent=1 // pred_check_branch
      %29 = sbr.rel (0) target = $region9
    $region8: #{tpu_custom_call.1} parent=1 // pred_region
      _
    $region9: #{tpu_custom_call.1} parent=1 // pred_fallthru
      _
    // Predicated region
    $region10: #{tpu_custom_call.1} parent=1 // pred_check
      _
    $region11: #{tpu_custom_call.1} parent=1 // pred_check_branch
      %31 = sbr.rel (0) target = $region13
    $region12: #{tpu_custom_call.1} parent=1 // pred_region
      %s33 = ssub.s32 19456, 19456
      %34 = vsyncadd [#allocation6], %s33
      %s35 = sshll.u32 [#allocation5], 4
      %s36 = int_to_ptr.vmem [resolvable:$true] %s35
      %41 = dma.hbm_to_vmem [thread:$0]  %s2, 19456, %s36, [#allocation6], 512, 512, 32
    $region13: #{tpu_custom_call.1} parent=1 // pred_fallthru
      _
    // Predicated region
    $region14: #{tpu_custom_call.1} parent=1 // pred_check
      _
    $region15: #{tpu_custom_call.1} parent=1 // pred_check_branch
      %43 = sbr.rel (0) target = $region17
    $region16: #{tpu_custom_call.1} parent=1 // pred_region
      %s45 = ssub.s32 32768, 32768
      %46 = vsyncadd [#allocation6], %s45
      %s47 = sshll.u32 [#allocation7], 4
      %s48 = int_to_ptr.vmem [resolvable:$true] %s47
      %53 = dma.hbm_to_vmem [thread:$0]  %s3, 32768, %s48, [#allocation6], 1024, 1024, 64
    $region17: #{tpu_custom_call.1} parent=1 // pred_fallthru
      _
    // Predicated region
    $region18: #{tpu_custom_call.1} parent=1 // pred_check
      _
    $region19: #{tpu_custom_call.1} parent=1 // pred_check_branch
      %55 = sbr.rel (0) target = $region21
    $region20: #{tpu_custom_call.1} parent=1 // pred_region
      _
    $region21: #{tpu_custom_call.1} parent=1 // pred_fallthru
      _
    // Predicated region
    $region22: #{tpu_custom_call.1} parent=1 // pred_check
      _
    $region23: #{tpu_custom_call.1} parent=1 // pred_check_branch
      %57 = sbr.rel (0) target = $region25
    $region24: #{tpu_custom_call.1} parent=1 // pred_region
      %s59 = ssub.s32 4096, 4096
      %60 = vsyncadd [#allocation9], %s59
      %s61 = sshll.u32 [#allocation8], 4
      %s62 = int_to_ptr.vmem [resolvable:$true] %s61
      %67 = dma.hbm_to_vmem [thread:$0]  %s5, 4096, %s62, [#allocation9], 128, 128, 8
    $region25: #{tpu_custom_call.1} parent=1 // pred_fallthru
      _
    // Predicated region
    $region26: #{tpu_custom_call.1} parent=1 // pred_check
      _
    $region27: #{tpu_custom_call.1} parent=1 // pred_check_branch
      %69 = sbr.rel (0) target = $region29
    $region28: #{tpu_custom_call.1} parent=1 // pred_region
      _
    $region29: #{tpu_custom_call.1} parent=1 // pred_fallthru
      _
    // Predicated region
    $region30: #{tpu_custom_call.1} parent=1 // pred_check
      _
    $region31: #{tpu_custom_call.1} parent=1 // pred_check_branch
      %71 = sbr.rel (0) target = $region33
    $region32: #{tpu_custom_call.1} parent=1 // pred_region
      %72 = dma.done [#allocation3], 384
    $region33: #{tpu_custom_call.1} parent=1 // pred_fallthru
      _
    // Predicated region
    $region34: #{tpu_custom_call.1} parent=1 // pred_check
      _
    $region35: #{tpu_custom_call.1} parent=1 // pred_check_branch
      %74 = sbr.rel (0) target = $region37
    $region36: #{tpu_custom_call.1} parent=1 // pred_region
      %75 = dma.done [#allocation6], 19456
    $region37: #{tpu_custom_call.1} parent=1 // pred_fallthru
      _
    // Predicated region
    $region38: #{tpu_custom_call.1} parent=1 // pred_check
      _
    $region39: #{tpu_custom_call.1} parent=1 // pred_check_branch
      %77 = sbr.rel (0) target = $region41
    $region40: #{tpu_custom_call.1} parent=1 // pred_region
      %78 = dma.done [#allocation6], 32768
    $region41: #{tpu_custom_call.1} parent=1 // pred_fallthru
      _
    // Predicated region
    $region42: #{tpu_custom_call.1} parent=1 // pred_check
      _
    $region43: #{tpu_custom_call.1} parent=1 // pred_check_branch
      %80 = sbr.rel (0) target = $region45
    $region44: #{tpu_custom_call.1} parent=1 // pred_region
      %81 = dma.done [#allocation9], 4096
    $region45: #{tpu_custom_call.1} parent=1 // pred_fallthru
      _
    %v83 = vld [vmem:[%s1] sm:$0x3]
    %v84 = vld [vmem:[#allocation2] sm:$0x7]
    %v85 = vld [vmem:[#allocation2 + $0x3] sm:$0x7]
    %v86 = vld [vmem:[#allocation2 + $0x6] sm:$0x7]
    %v87 = vld [vmem:[#allocation2 + $0x9] sm:$0x7]
    %v88 = vld [vmem:[#allocation2 + $0xc] sm:$0x7]
    %v89 = vld [vmem:[#allocation2 + $0xf] sm:$0x7]
    %v90 = vld [vmem:[#allocation2 + $0x12] sm:$0x7]
    %v91 = vld [vmem:[#allocation2 + $0x15] sm:$0x7]
    %v92 = vld [vmem:[#allocation5] sm:$0xff]
    %v93 = vld [vmem:[#allocation5 + $0x8] sm:$0xff]
    %v94 = vld [vmem:[#allocation5 + $0x10] sm:$0xff]
    %v95 = vld [vmem:[#allocation5 + $0x18] sm:$0xff]
    %v96 = vld [vmem:[#allocation5 + $0x20] sm:$0xff]
    %v97 = vld [vmem:[#allocation5 + $0x28] sm:$0xff]
    %v98 = vld [vmem:[#allocation5 + $0x30] sm:$0xff]
    %v99 = vld [vmem:[#allocation5 + $0x38] sm:$0xff]
    %v100 = vld [vmem:[#allocation5 + $0x40] sm:$0xff]
    %v101 = vld [vmem:[#allocation5 + $0x48] sm:$0xff]
    %v102 = vld [vmem:[#allocation5 + $0x50] sm:$0xff]
    %v103 = vld [vmem:[#allocation5 + $0x58] sm:$0xff]
    %v104 = vld [vmem:[#allocation5 + $0x60] sm:$0xff]
    %v105 = vld [vmem:[#allocation5 + $0x68] sm:$0xff]
    %v106 = vld [vmem:[#allocation5 + $0x70] sm:$0xff]
    %v107 = vld [vmem:[#allocation5 + $0x78] sm:$0xff]
    %v108 = vld [vmem:[#allocation5 + $0x80] sm:$0xff]
    %v109 = vld [vmem:[#allocation5 + $0x88] sm:$0xff]
    %v110 = vld [vmem:[#allocation5 + $0x90] sm:$0xff]
    %v111 = vld [vmem:[#allocation5 + $0x98] sm:$0xff]
    %v112 = vld [vmem:[#allocation5 + $0xa0] sm:$0xff]
    %v113 = vld [vmem:[#allocation5 + $0xa8] sm:$0xff]
    %v114 = vld [vmem:[#allocation5 + $0xb0] sm:$0xff]
    %v115 = vld [vmem:[#allocation5 + $0xb8] sm:$0xff]
    %v116 = vld [vmem:[#allocation5 + $0xc0] sm:$0xff]
    %v117 = vld [vmem:[#allocation5 + $0xc8] sm:$0xff]
    %v118 = vld [vmem:[#allocation5 + $0xd0] sm:$0xff]
    %v119 = vld [vmem:[#allocation5 + $0xd8] sm:$0xff]
    %v120 = vld [vmem:[#allocation5 + $0xe0] sm:$0xff]
    %v121 = vld [vmem:[#allocation5 + $0xe8] sm:$0xff]
    %v122 = vld [vmem:[#allocation5 + $0xf0] sm:$0xff]
    %v123 = vld [vmem:[#allocation5 + $0xf8] sm:$0xff]
    %v124 = vld [vmem:[#allocation5 + $0x100] sm:$0xff]
    %v125 = vld [vmem:[#allocation5 + $0x108] sm:$0xff]
    %v126 = vld [vmem:[#allocation5 + $0x110] sm:$0xff]
    %v127 = vld [vmem:[#allocation5 + $0x118] sm:$0xff]
    %v128 = vld [vmem:[#allocation5 + $0x120] sm:$0xff]
    %v129 = vld [vmem:[#allocation5 + $0x128] sm:$0xff]
    %v130 = vld [vmem:[#allocation5 + $0x130] sm:$0xff]
    %v131 = vld [vmem:[#allocation5 + $0x138] sm:$0xff]
    %v132 = vld [vmem:[#allocation5 + $0x140] sm:$0xff]
    %v133 = vld [vmem:[#allocation5 + $0x148] sm:$0xff]
    %v134 = vld [vmem:[#allocation5 + $0x150] sm:$0xff]
    %v135 = vld [vmem:[#allocation5 + $0x158] sm:$0xff]
    %v136 = vld [vmem:[#allocation5 + $0x160] sm:$0xff]
    %v137 = vld [vmem:[#allocation5 + $0x168] sm:$0xff]
    %v138 = vld [vmem:[#allocation5 + $0x170] sm:$0xff]
    %v139 = vld [vmem:[#allocation5 + $0x178] sm:$0xff]
    %v140 = vld [vmem:[#allocation5 + $0x180] sm:$0xff]
    %v141 = vld [vmem:[#allocation5 + $0x188] sm:$0xff]
    %v142 = vld [vmem:[#allocation5 + $0x190] sm:$0xff]
    %v143 = vld [vmem:[#allocation5 + $0x198] sm:$0xff]
    %v144 = vld [vmem:[#allocation5 + $0x1a0] sm:$0xff]
    %v145 = vld [vmem:[#allocation5 + $0x1a8] sm:$0xff]
    %v146 = vld [vmem:[#allocation5 + $0x1b0] sm:$0xff]
    %v147 = vld [vmem:[#allocation5 + $0x1b8] sm:$0xff]
    %v148 = vld [vmem:[#allocation5 + $0x1c0] sm:$0xff]
    %v149 = vld [vmem:[#allocation5 + $0x1c8] sm:$0xff]
    %v150 = vld [vmem:[#allocation5 + $0x1d0] sm:$0xff]
    %v151 = vld [vmem:[#allocation5 + $0x1d8] sm:$0xff]
    %v152 = vld [vmem:[#allocation5 + $0x1e0] sm:$0xff]
    %v153 = vld [vmem:[#allocation5 + $0x1e8] sm:$0xff]
    %v154 = vld [vmem:[#allocation5 + $0x1f0] sm:$0xff]
    %v155 = vld [vmem:[#allocation5 + $0x1f8] sm:$0xff]
    %v156 = vld [vmem:[#allocation5 + $0x200] sm:$0xff]
    %v157 = vld [vmem:[#allocation5 + $0x208] sm:$0xff]
    %v158 = vld [vmem:[#allocation5 + $0x210] sm:$0xff]
    %v159 = vld [vmem:[#allocation5 + $0x218] sm:$0xff]
    %v160 = vld [vmem:[#allocation5 + $0x220] sm:$0xff]
    %v161 = vld [vmem:[#allocation5 + $0x228] sm:$0xff]
    %v162 = vld [vmem:[#allocation5 + $0x230] sm:$0xff]
    %v163 = vld [vmem:[#allocation5 + $0x238] sm:$0xff]
    %v164 = vld [vmem:[#allocation5 + $0x240] sm:$0xff]
    %v165 = vld [vmem:[#allocation5 + $0x248] sm:$0xff]
    %v166 = vld [vmem:[#allocation5 + $0x250] sm:$0xff]
    %v167 = vld [vmem:[#allocation5 + $0x258] sm:$0xff]
    %v168 = vld [vmem:[#allocation5 + $0x260] sm:$0xff]
    %v169 = vld [vmem:[#allocation5 + $0x268] sm:$0xff]
    %v170 = vld [vmem:[#allocation5 + $0x270] sm:$0xff]
    %v171 = vld [vmem:[#allocation5 + $0x278] sm:$0xff]
    %v172 = vld [vmem:[#allocation5 + $0x280] sm:$0xff]
    %v173 = vld [vmem:[#allocation5 + $0x288] sm:$0xff]
    %v174 = vld [vmem:[#allocation5 + $0x290] sm:$0xff]
    %v175 = vld [vmem:[#allocation5 + $0x298] sm:$0xff]
    %v176 = vld [vmem:[#allocation5 + $0x2a0] sm:$0xff]
    %v177 = vld [vmem:[#allocation5 + $0x2a8] sm:$0xff]
    %v178 = vld [vmem:[#allocation5 + $0x2b0] sm:$0xff]
    %v179 = vld [vmem:[#allocation5 + $0x2b8] sm:$0xff]
    %v180 = vld [vmem:[#allocation5 + $0x2c0] sm:$0xff]
    %v181 = vld [vmem:[#allocation5 + $0x2c8] sm:$0xff]
    %v182 = vld [vmem:[#allocation5 + $0x2d0] sm:$0xff]
    %v183 = vld [vmem:[#allocation5 + $0x2d8] sm:$0xff]
    %v184 = vld [vmem:[#allocation5 + $0x2e0] sm:$0xff]
    %v185 = vld [vmem:[#allocation5 + $0x2e8] sm:$0xff]
    %v186 = vld [vmem:[#allocation5 + $0x2f0] sm:$0xff]
    %v187 = vld [vmem:[#allocation5 + $0x2f8] sm:$0xff]
    %v188 = vld [vmem:[#allocation5 + $0x300] sm:$0xff]
    %v189 = vld [vmem:[#allocation5 + $0x308] sm:$0xff]
    %v190 = vld [vmem:[#allocation5 + $0x310] sm:$0xff]
    %v191 = vld [vmem:[#allocation5 + $0x318] sm:$0xff]
    %v192 = vld [vmem:[#allocation5 + $0x320] sm:$0xff]
    %v193 = vld [vmem:[#allocation5 + $0x328] sm:$0xff]
    %v194 = vld [vmem:[#allocation5 + $0x330] sm:$0xff]
    %v195 = vld [vmem:[#allocation5 + $0x338] sm:$0xff]
    %v196 = vld [vmem:[#allocation5 + $0x340] sm:$0xff]
    %v197 = vld [vmem:[#allocation5 + $0x348] sm:$0xff]
    %v198 = vld [vmem:[#allocation5 + $0x350] sm:$0xff]
    %v199 = vld [vmem:[#allocation5 + $0x358] sm:$0xff]
    %v200 = vld [vmem:[#allocation5 + $0x360] sm:$0xff]
    %v201 = vld [vmem:[#allocation5 + $0x368] sm:$0xff]
    %v202 = vld [vmem:[#allocation5 + $0x370] sm:$0xff]
    %v203 = vld [vmem:[#allocation5 + $0x378] sm:$0xff]
    %v204 = vld [vmem:[#allocation5 + $0x380] sm:$0xff]
    %v205 = vld [vmem:[#allocation5 + $0x388] sm:$0xff]
    %v206 = vld [vmem:[#allocation5 + $0x390] sm:$0xff]
    %v207 = vld [vmem:[#allocation5 + $0x398] sm:$0xff]
    %v208 = vld [vmem:[#allocation5 + $0x3a0] sm:$0xff]
    %v209 = vld [vmem:[#allocation5 + $0x3a8] sm:$0xff]
    %v210 = vld [vmem:[#allocation5 + $0x3b0] sm:$0xff]
    %v211 = vld [vmem:[#allocation5 + $0x3b8] sm:$0xff]
    %v212 = vld [vmem:[#allocation5 + $0x3c0] sm:$0xff]
    %v213 = vld [vmem:[#allocation5 + $0x3c8] sm:$0xff]
    %v214 = vld [vmem:[#allocation5 + $0x3d0] sm:$0xff]
    %v215 = vld [vmem:[#allocation5 + $0x3d8] sm:$0xff]
    %v216 = vld [vmem:[#allocation5 + $0x3e0] sm:$0xff]
    %v217 = vld [vmem:[#allocation5 + $0x3e8] sm:$0xff]
    %v218 = vld [vmem:[#allocation5 + $0x3f0] sm:$0xff]
    %v219 = vld [vmem:[#allocation5 + $0x3f8] sm:$0xff]
    %v220 = vld [vmem:[#allocation5 + $0x400] sm:$0xff]
    %v221 = vld [vmem:[#allocation5 + $0x408] sm:$0xff]
    %v222 = vld [vmem:[#allocation5 + $0x410] sm:$0xff]
    %v223 = vld [vmem:[#allocation5 + $0x418] sm:$0xff]
    %v224 = vld [vmem:[#allocation5 + $0x420] sm:$0xff]
    %v225 = vld [vmem:[#allocation5 + $0x428] sm:$0xff]
    %v226 = vld [vmem:[#allocation5 + $0x430] sm:$0xff]
    %v227 = vld [vmem:[#allocation5 + $0x438] sm:$0xff]
    %v228 = vld [vmem:[#allocation5 + $0x440] sm:$0xff]
    %v229 = vld [vmem:[#allocation5 + $0x448] sm:$0xff]
    %v230 = vld [vmem:[#allocation5 + $0x450] sm:$0xff]
    %v231 = vld [vmem:[#allocation5 + $0x458] sm:$0xff]
    %v232 = vld [vmem:[#allocation5 + $0x460] sm:$0xff]
    %v233 = vld [vmem:[#allocation5 + $0x468] sm:$0xff]
    %v234 = vld [vmem:[#allocation5 + $0x470] sm:$0xff]
    %v235 = vld [vmem:[#allocation5 + $0x478] sm:$0xff]
    %v236 = vld [vmem:[#allocation5 + $0x480] sm:$0xff]
    %v237 = vld [vmem:[#allocation5 + $0x488] sm:$0xff]
    %v238 = vld [vmem:[#allocation5 + $0x490] sm:$0xff]
    %v239 = vld [vmem:[#allocation5 + $0x498] sm:$0xff]
    %v240 = vld [vmem:[#allocation5 + $0x4a0] sm:$0x33]
    %v241 = vld [vmem:[#allocation5 + $0x4a8] sm:$0x33]
    %v242 = vld [vmem:[#allocation5 + $0x4b0] sm:$0x33]
    %v243 = vld [vmem:[#allocation5 + $0x4b8] sm:$0x33]
    %v244 = vld [vmem:[%s4] sm:$0xff]
    %v246 = vlaneseq
    %v247 = vshrl.u32 %v246, 7
    %v248 = vsub.s32 0, %v247
    %v249 = vrot.slane %v244, %v248
    %v250 = vlaneseq
    %v251 = vshrl.u32 %v250, 7
    %v252 = vsub.s32 1, %v251
    %v253 = vrot.slane %v244, %v252
    %v254 = vlaneseq
    %v255 = vshrl.u32 %v254, 7
    %v256 = vsub.s32 2, %v255
    %v257 = vrot.slane %v244, %v256
    %v258 = vlaneseq
    %v259 = vshrl.u32 %v258, 7
    %v260 = vsub.s32 3, %v259
    %v261 = vrot.slane %v244, %v260
    %v262 = vlaneseq
    %v263 = vshrl.u32 %v262, 7
    %v264 = vsub.s32 4, %v263
    %v265 = vrot.slane %v244, %v264
    %v266 = vlaneseq
    %v267 = vshrl.u32 %v266, 7
    %v268 = vsub.s32 5, %v267
    %v269 = vrot.slane %v244, %v268
    %v270 = vlaneseq
    %v271 = vshrl.u32 %v270, 7
    %v272 = vsub.s32 6, %v271
    %v273 = vrot.slane %v244, %v272
    %v274 = vlaneseq
    %v275 = vshrl.u32 %v274, 7
    %v276 = vsub.s32 7, %v275
    %v277 = vrot.slane %v244, %v276
    %v294 = vcombine.low %v84, %v85
    %v295 = vcombine.low %v86, %v87
    %v296 = vcombine.low %v88, %v89
    %v297 = vcombine.low %v90, %v91
    %v299 = vunpack.c.l.s4 1966171168
    %v300 = vunpack.c.0.s8 %v299
    %v301 = vlaneseq
    %v302 = vshrl.u32 %v301, 7
    %v303 = vsub.s32 %v300, %v302
    %v304 = vrot.slane %v294, %v303
    %v306 = vunpack.c.l.s4 1966171168
    %v307 = vunpack.c.0.s8 %v306
    %v308 = vlaneseq
    %v309 = vshrl.u32 %v308, 7
    %v310 = vsub.s32 %v307, %v309
    %v311 = vrot.slane %v295, %v310
    %v313 = vunpack.c.l.s4 1966171168
    %v314 = vunpack.c.0.s8 %v313
    %v315 = vlaneseq
    %v316 = vshrl.u32 %v315, 7
    %v317 = vsub.s32 %v314, %v316
    %v318 = vrot.slane %v296, %v317
    %v320 = vunpack.c.l.s4 1966171168
    %v321 = vunpack.c.0.s8 %v320
    %v322 = vlaneseq
    %v323 = vshrl.u32 %v322, 7
    %v324 = vsub.s32 %v321, %v323
    %v325 = vrot.slane %v297, %v324
    %v326 = vcombine.low %v304, %v311
    %v327 = vcombine.high %v304, %v311
    %v328 = vcombine.low %v318, %v325
    %v329 = vcombine.high %v318, %v325
    %v331 = vunpack.c.l.s4 1966171168
    %v332 = vunpack.c.0.s8 %v331
    %v333 = vlaneseq
    %v334 = vshrl.u32 %v333, 7
    %v335 = vsub.s32 %v332, %v334
    %v336 = vrot.slane %v326, %v335
    %v338 = vunpack.c.l.s4 1966171168
    %v339 = vunpack.c.0.s8 %v338
    %v340 = vlaneseq
    %v341 = vshrl.u32 %v340, 7
    %v342 = vsub.s32 %v339, %v341
    %v343 = vrot.slane %v327, %v342
    %v345 = vunpack.c.l.s4 1966171168
    %v346 = vunpack.c.0.s8 %v345
    %v347 = vlaneseq
    %v348 = vshrl.u32 %v347, 7
    %v349 = vsub.s32 %v346, %v348
    %v350 = vrot.slane %v328, %v349
    %v352 = vunpack.c.l.s4 1966171168
    %v353 = vunpack.c.0.s8 %v352
    %v354 = vlaneseq
    %v355 = vshrl.u32 %v354, 7
    %v356 = vsub.s32 %v353, %v355
    %v357 = vrot.slane %v329, %v356
    %v358 = vcombine.low %v336, %v350
    %v359 = vcombine.high %v336, %v350
    %v360 = vcombine.low %v343, %v357
    %v515 = vunpack.c.l.b16 %v92
    %v516 = vunpack.c.h.b16 %v92
    %v517 = vunpack.c.l.b16 %v93
    %v518 = vunpack.c.h.b16 %v93
    %v519 = vunpack.c.l.b16 %v94
    %v520 = vunpack.c.h.b16 %v94
    %v521 = vunpack.c.l.b16 %v95
    %v522 = vunpack.c.h.b16 %v95
    %v523 = vunpack.c.l.b16 %v96
    %v524 = vunpack.c.h.b16 %v96
    %v525 = vunpack.c.l.b16 %v97
    %v526 = vunpack.c.h.b16 %v97
    %v527 = vunpack.c.l.b16 %v98
    %v528 = vunpack.c.h.b16 %v98
    %v529 = vunpack.c.l.b16 %v99
    %v530 = vunpack.c.h.b16 %v99
    %v531 = vunpack.c.l.b16 %v100
    %v532 = vunpack.c.h.b16 %v100
    %v533 = vunpack.c.l.b16 %v101
    %v534 = vunpack.c.h.b16 %v101
    %v535 = vunpack.c.l.b16 %v102
    %v536 = vunpack.c.h.b16 %v102
    %v537 = vunpack.c.l.b16 %v103
    %v538 = vunpack.c.h.b16 %v103
    %v539 = vunpack.c.l.b16 %v104
    %v540 = vunpack.c.h.b16 %v104
    %v541 = vunpack.c.l.b16 %v105
    %v542 = vunpack.c.h.b16 %v105
    %v543 = vunpack.c.l.b16 %v106
    %v544 = vunpack.c.h.b16 %v106
    %v545 = vunpack.c.l.b16 %v107
    %v546 = vunpack.c.h.b16 %v107
    %v547 = vunpack.c.l.b16 %v108
    %v548 = vunpack.c.h.b16 %v108
    %v549 = vunpack.c.l.b16 %v109
    %v550 = vunpack.c.h.b16 %v109
    %v551 = vunpack.c.l.b16 %v110
    %v552 = vunpack.c.h.b16 %v110
    %v553 = vunpack.c.l.b16 %v111
    %v554 = vunpack.c.h.b16 %v111
    %v555 = vunpack.c.l.b16 %v112
    %v556 = vunpack.c.h.b16 %v112
    %v557 = vunpack.c.l.b16 %v113
    %v558 = vunpack.c.h.b16 %v113
    %v559 = vunpack.c.l.b16 %v114
    %v560 = vunpack.c.h.b16 %v114
    %v561 = vunpack.c.l.b16 %v115
    %v562 = vunpack.c.h.b16 %v115
    %v563 = vunpack.c.l.b16 %v116
    %v564 = vunpack.c.h.b16 %v116
    %v565 = vunpack.c.l.b16 %v117
    %v566 = vunpack.c.h.b16 %v117
    %v567 = vunpack.c.l.b16 %v118
    %v568 = vunpack.c.h.b16 %v118
    %v569 = vunpack.c.l.b16 %v119
    %v570 = vunpack.c.h.b16 %v119
    %v571 = vunpack.c.l.b16 %v120
    %v572 = vunpack.c.h.b16 %v120
    %v573 = vunpack.c.l.b16 %v121
    %v574 = vunpack.c.h.b16 %v121
    %v575 = vunpack.c.l.b16 %v122
    %v576 = vunpack.c.h.b16 %v122
    %v577 = vunpack.c.l.b16 %v123
    %v578 = vunpack.c.h.b16 %v123
    %v579 = vunpack.c.l.b16 %v124
    %v580 = vunpack.c.h.b16 %v124
    %v581 = vunpack.c.l.b16 %v125
    %v582 = vunpack.c.h.b16 %v125
    %v583 = vunpack.c.l.b16 %v126
    %v584 = vunpack.c.h.b16 %v126
    %v585 = vunpack.c.l.b16 %v127
    %v586 = vunpack.c.h.b16 %v127
    %v587 = vunpack.c.l.b16 %v128
    %v588 = vunpack.c.h.b16 %v128
    %v589 = vunpack.c.l.b16 %v129
    %v590 = vunpack.c.h.b16 %v129
    %v591 = vunpack.c.l.b16 %v130
    %v592 = vunpack.c.h.b16 %v130
    %v593 = vunpack.c.l.b16 %v131
    %v594 = vunpack.c.h.b16 %v131
    %v595 = vunpack.c.l.b16 %v132
    %v596 = vunpack.c.h.b16 %v132
    %v597 = vunpack.c.l.b16 %v133
    %v598 = vunpack.c.h.b16 %v133
    %v599 = vunpack.c.l.b16 %v134
    %v600 = vunpack.c.h.b16 %v134
    %v601 = vunpack.c.l.b16 %v135
    %v602 = vunpack.c.h.b16 %v135
    %v603 = vunpack.c.l.b16 %v136
    %v604 = vunpack.c.h.b16 %v136
    %v605 = vunpack.c.l.b16 %v137
    %v606 = vunpack.c.h.b16 %v137
    %v607 = vunpack.c.l.b16 %v138
    %v608 = vunpack.c.h.b16 %v138
    %v609 = vunpack.c.l.b16 %v139
    %v610 = vunpack.c.h.b16 %v139
    %v611 = vunpack.c.l.b16 %v140
    %v612 = vunpack.c.h.b16 %v140
    %v613 = vunpack.c.l.b16 %v141
    %v614 = vunpack.c.h.b16 %v141
    %v615 = vunpack.c.l.b16 %v142
    %v616 = vunpack.c.h.b16 %v142
    %v617 = vunpack.c.l.b16 %v143
    %v618 = vunpack.c.h.b16 %v143
    %v619 = vunpack.c.l.b16 %v144
    %v620 = vunpack.c.h.b16 %v144
    %v621 = vunpack.c.l.b16 %v145
    %v622 = vunpack.c.h.b16 %v145
    %v623 = vunpack.c.l.b16 %v146
    %v624 = vunpack.c.h.b16 %v146
    %v625 = vunpack.c.l.b16 %v147
    %v626 = vunpack.c.h.b16 %v147
    %v627 = vunpack.c.l.b16 %v148
    %v628 = vunpack.c.h.b16 %v148
    %v629 = vunpack.c.l.b16 %v149
    %v630 = vunpack.c.h.b16 %v149
    %v631 = vunpack.c.l.b16 %v150
    %v632 = vunpack.c.h.b16 %v150
    %v633 = vunpack.c.l.b16 %v151
    %v634 = vunpack.c.h.b16 %v151
    %v635 = vunpack.c.l.b16 %v152
    %v636 = vunpack.c.h.b16 %v152
    %v637 = vunpack.c.l.b16 %v153
    %v638 = vunpack.c.h.b16 %v153
    %v639 = vunpack.c.l.b16 %v154
    %v640 = vunpack.c.h.b16 %v154
    %v641 = vunpack.c.l.b16 %v155
    %v642 = vunpack.c.h.b16 %v155
    %v643 = vunpack.c.l.b16 %v156
    %v644 = vunpack.c.h.b16 %v156
    %v645 = vunpack.c.l.b16 %v157
    %v646 = vunpack.c.h.b16 %v157
    %v647 = vunpack.c.l.b16 %v158
    %v648 = vunpack.c.h.b16 %v158
    %v649 = vunpack.c.l.b16 %v159
    %v650 = vunpack.c.h.b16 %v159
    %v651 = vunpack.c.l.b16 %v160
    %v652 = vunpack.c.h.b16 %v160
    %v653 = vunpack.c.l.b16 %v161
    %v654 = vunpack.c.h.b16 %v161
    %v655 = vunpack.c.l.b16 %v162
    %v656 = vunpack.c.h.b16 %v162
    %v657 = vunpack.c.l.b16 %v163
    %v658 = vunpack.c.h.b16 %v163
    %v659 = vunpack.c.l.b16 %v164
    %v660 = vunpack.c.h.b16 %v164
    %v661 = vunpack.c.l.b16 %v165
    %v662 = vunpack.c.h.b16 %v165
    %v663 = vunpack.c.l.b16 %v166
    %v664 = vunpack.c.h.b16 %v166
    %v665 = vunpack.c.l.b16 %v167
    %v666 = vunpack.c.h.b16 %v167
    %v667 = vunpack.c.l.b16 %v168
    %v668 = vunpack.c.h.b16 %v168
    %v669 = vunpack.c.l.b16 %v169
    %v670 = vunpack.c.h.b16 %v169
    %v671 = vunpack.c.l.b16 %v170
    %v672 = vunpack.c.h.b16 %v170
    %v673 = vunpack.c.l.b16 %v171
    %v674 = vunpack.c.h.b16 %v171
    %v675 = vunpack.c.l.b16 %v172
    %v676 = vunpack.c.h.b16 %v172
    %v677 = vunpack.c.l.b16 %v173
    %v678 = vunpack.c.h.b16 %v173
    %v679 = vunpack.c.l.b16 %v174
    %v680 = vunpack.c.h.b16 %v174
    %v681 = vunpack.c.l.b16 %v175
    %v682 = vunpack.c.h.b16 %v175
    %v683 = vunpack.c.l.b16 %v176
    %v684 = vunpack.c.h.b16 %v176
    %v685 = vunpack.c.l.b16 %v177
    %v686 = vunpack.c.h.b16 %v177
    %v687 = vunpack.c.l.b16 %v178
    %v688 = vunpack.c.h.b16 %v178
    %v689 = vunpack.c.l.b16 %v179
    %v690 = vunpack.c.h.b16 %v179
    %v691 = vunpack.c.l.b16 %v180
    %v692 = vunpack.c.h.b16 %v180
    %v693 = vunpack.c.l.b16 %v181
    %v694 = vunpack.c.h.b16 %v181
    %v695 = vunpack.c.l.b16 %v182
    %v696 = vunpack.c.h.b16 %v182
    %v697 = vunpack.c.l.b16 %v183
    %v698 = vunpack.c.h.b16 %v183
    %v699 = vunpack.c.l.b16 %v184
    %v700 = vunpack.c.h.b16 %v184
    %v701 = vunpack.c.l.b16 %v185
    %v702 = vunpack.c.h.b16 %v185
    %v703 = vunpack.c.l.b16 %v186
    %v704 = vunpack.c.h.b16 %v186
    %v705 = vunpack.c.l.b16 %v187
    %v706 = vunpack.c.h.b16 %v187
    %v707 = vunpack.c.l.b16 %v188
    %v708 = vunpack.c.h.b16 %v188
    %v709 = vunpack.c.l.b16 %v189
    %v710 = vunpack.c.h.b16 %v189
    %v711 = vunpack.c.l.b16 %v190
    %v712 = vunpack.c.h.b16 %v190
    %v713 = vunpack.c.l.b16 %v191
    %v714 = vunpack.c.h.b16 %v191
    %v715 = vunpack.c.l.b16 %v192
    %v716 = vunpack.c.h.b16 %v192
    %v717 = vunpack.c.l.b16 %v193
    %v718 = vunpack.c.h.b16 %v193
    %v719 = vunpack.c.l.b16 %v194
    %v720 = vunpack.c.h.b16 %v194
    %v721 = vunpack.c.l.b16 %v195
    %v722 = vunpack.c.h.b16 %v195
    %v723 = vunpack.c.l.b16 %v196
    %v724 = vunpack.c.h.b16 %v196
    %v725 = vunpack.c.l.b16 %v197
    %v726 = vunpack.c.h.b16 %v197
    %v727 = vunpack.c.l.b16 %v198
    %v728 = vunpack.c.h.b16 %v198
    %v729 = vunpack.c.l.b16 %v199
    %v730 = vunpack.c.h.b16 %v199
    %v731 = vunpack.c.l.b16 %v200
    %v732 = vunpack.c.h.b16 %v200
    %v733 = vunpack.c.l.b16 %v201
    %v734 = vunpack.c.h.b16 %v201
    %v735 = vunpack.c.l.b16 %v202
    %v736 = vunpack.c.h.b16 %v202
    %v737 = vunpack.c.l.b16 %v203
    %v738 = vunpack.c.h.b16 %v203
    %v739 = vunpack.c.l.b16 %v204
    %v740 = vunpack.c.h.b16 %v204
    %v741 = vunpack.c.l.b16 %v205
    %v742 = vunpack.c.h.b16 %v205
    %v743 = vunpack.c.l.b16 %v206
    %v744 = vunpack.c.h.b16 %v206
    %v745 = vunpack.c.l.b16 %v207
    %v746 = vunpack.c.h.b16 %v207
    %v747 = vunpack.c.l.b16 %v208
    %v748 = vunpack.c.h.b16 %v208
    %v749 = vunpack.c.l.b16 %v209
    %v750 = vunpack.c.h.b16 %v209
    %v751 = vunpack.c.l.b16 %v210
    %v752 = vunpack.c.h.b16 %v210
    %v753 = vunpack.c.l.b16 %v211
    %v754 = vunpack.c.h.b16 %v211
    %v755 = vunpack.c.l.b16 %v212
    %v756 = vunpack.c.h.b16 %v212
    %v757 = vunpack.c.l.b16 %v213
    %v758 = vunpack.c.h.b16 %v213
    %v759 = vunpack.c.l.b16 %v214
    %v760 = vunpack.c.h.b16 %v214
    %v761 = vunpack.c.l.b16 %v215
    %v762 = vunpack.c.h.b16 %v215
    %v763 = vunpack.c.l.b16 %v216
    %v764 = vunpack.c.h.b16 %v216
    %v765 = vunpack.c.l.b16 %v217
    %v766 = vunpack.c.h.b16 %v217
    %v767 = vunpack.c.l.b16 %v218
    %v768 = vunpack.c.h.b16 %v218
    %v769 = vunpack.c.l.b16 %v219
    %v770 = vunpack.c.h.b16 %v219
    %v771 = vunpack.c.l.b16 %v220
    %v772 = vunpack.c.h.b16 %v220
    %v773 = vunpack.c.l.b16 %v221
    %v774 = vunpack.c.h.b16 %v221
    %v775 = vunpack.c.l.b16 %v222
    %v776 = vunpack.c.h.b16 %v222
    %v777 = vunpack.c.l.b16 %v223
    %v778 = vunpack.c.h.b16 %v223
    %v779 = vunpack.c.l.b16 %v224
    %v780 = vunpack.c.h.b16 %v224
    %v781 = vunpack.c.l.b16 %v225
    %v782 = vunpack.c.h.b16 %v225
    %v783 = vunpack.c.l.b16 %v226
    %v784 = vunpack.c.h.b16 %v226
    %v785 = vunpack.c.l.b16 %v227
    %v786 = vunpack.c.h.b16 %v227
    %v787 = vunpack.c.l.b16 %v228
    %v788 = vunpack.c.h.b16 %v228
    %v789 = vunpack.c.l.b16 %v229
    %v790 = vunpack.c.h.b16 %v229
    %v791 = vunpack.c.l.b16 %v230
    %v792 = vunpack.c.h.b16 %v230
    %v793 = vunpack.c.l.b16 %v231
    %v794 = vunpack.c.h.b16 %v231
    %v795 = vunpack.c.l.b16 %v232
    %v796 = vunpack.c.h.b16 %v232
    %v797 = vunpack.c.l.b16 %v233
    %v798 = vunpack.c.h.b16 %v233
    %v799 = vunpack.c.l.b16 %v234
    %v800 = vunpack.c.h.b16 %v234
    %v801 = vunpack.c.l.b16 %v235
    %v802 = vunpack.c.h.b16 %v235
    %v803 = vunpack.c.l.b16 %v236
    %v804 = vunpack.c.h.b16 %v236
    %v805 = vunpack.c.l.b16 %v237
    %v806 = vunpack.c.h.b16 %v237
    %v807 = vunpack.c.l.b16 %v238
    %v808 = vunpack.c.h.b16 %v238
    %v809 = vunpack.c.l.b16 %v239
    %v810 = vunpack.c.h.b16 %v239
    %v811 = vunpack.c.l.b16 %v240
    %v812 = vunpack.c.h.b16 %v240
    %v813 = vunpack.c.l.b16 %v241
    %v814 = vunpack.c.h.b16 %v241
    %v815 = vunpack.c.l.b16 %v242
    %v816 = vunpack.c.h.b16 %v242
    %v817 = vunpack.c.l.b16 %v243
    %v818 = vunpack.c.h.b16 %v243
    %v819 = vpack.c.b16 %v523, %v515
    %v820 = vpack.c.b16 %v524, %v516
    %v821 = vpack.c.b16 %v525, %v517
    %v822 = vpack.c.b16 %v526, %v518
    %v823 = vpack.c.b16 %v527, %v519
    %v824 = vpack.c.b16 %v528, %v520
    %v825 = vpack.c.b16 %v529, %v521
    %v826 = vpack.c.b16 %v530, %v522
    %v827 = vpack.c.b16 %v539, %v531
    %v828 = vpack.c.b16 %v540, %v532
    %v829 = vpack.c.b16 %v541, %v533
    %v830 = vpack.c.b16 %v542, %v534
    %v831 = vpack.c.b16 %v543, %v535
    %v832 = vpack.c.b16 %v544, %v536
    %v833 = vpack.c.b16 %v545, %v537
    %v834 = vpack.c.b16 %v546, %v538
    %v835 = vpack.c.b16 %v555, %v547
    %v836 = vpack.c.b16 %v556, %v548
    %v837 = vpack.c.b16 %v557, %v549
    %v838 = vpack.c.b16 %v558, %v550
    %v839 = vpack.c.b16 %v559, %v551
    %v840 = vpack.c.b16 %v560, %v552
    %v841 = vpack.c.b16 %v561, %v553
    %v842 = vpack.c.b16 %v562, %v554
    %v843 = vpack.c.b16 %v571, %v563
    %v844 = vpack.c.b16 %v572, %v564
    %v845 = vpack.c.b16 %v573, %v565
    %v846 = vpack.c.b16 %v574, %v566
    %v847 = vpack.c.b16 %v575, %v567
    %v848 = vpack.c.b16 %v576, %v568
    %v849 = vpack.c.b16 %v577, %v569
    %v850 = vpack.c.b16 %v578, %v570
    %v851 = vpack.c.b16 %v587, %v579
    %v852 = vpack.c.b16 %v588, %v580
    %v853 = vpack.c.b16 %v589, %v581
    %v854 = vpack.c.b16 %v590, %v582
    %v855 = vpack.c.b16 %v591, %v583
    %v856 = vpack.c.b16 %v592, %v584
    %v857 = vpack.c.b16 %v593, %v585
    %v858 = vpack.c.b16 %v594, %v586
    %v859 = vpack.c.b16 %v603, %v595
    %v860 = vpack.c.b16 %v604, %v596
    %v861 = vpack.c.b16 %v605, %v597
    %v862 = vpack.c.b16 %v606, %v598
    %v863 = vpack.c.b16 %v607, %v599
    %v864 = vpack.c.b16 %v608, %v600
    %v865 = vpack.c.b16 %v609, %v601
    %v866 = vpack.c.b16 %v610, %v602
    %v867 = vpack.c.b16 %v619, %v611
    %v868 = vpack.c.b16 %v620, %v612
    %v869 = vpack.c.b16 %v621, %v613
    %v870 = vpack.c.b16 %v622, %v614
    %v871 = vpack.c.b16 %v623, %v615
    %v872 = vpack.c.b16 %v624, %v616
    %v873 = vpack.c.b16 %v625, %v617
    %v874 = vpack.c.b16 %v626, %v618
    %v875 = vpack.c.b16 %v635, %v627
    %v876 = vpack.c.b16 %v636, %v628
    %v877 = vpack.c.b16 %v637, %v629
    %v878 = vpack.c.b16 %v638, %v630
    %v879 = vpack.c.b16 %v639, %v631
    %v880 = vpack.c.b16 %v640, %v632
    %v881 = vpack.c.b16 %v641, %v633
    %v882 = vpack.c.b16 %v642, %v634
    %v883 = vpack.c.b16 %v651, %v643
    %v884 = vpack.c.b16 %v652, %v644
    %v885 = vpack.c.b16 %v653, %v645
    %v886 = vpack.c.b16 %v654, %v646
    %v887 = vpack.c.b16 %v655, %v647
    %v888 = vpack.c.b16 %v656, %v648
    %v889 = vpack.c.b16 %v657, %v649
    %v890 = vpack.c.b16 %v658, %v650
    %v891 = vpack.c.b16 %v667, %v659
    %v892 = vpack.c.b16 %v668, %v660
    %v893 = vpack.c.b16 %v669, %v661
    %v894 = vpack.c.b16 %v670, %v662
    %v895 = vpack.c.b16 %v671, %v663
    %v896 = vpack.c.b16 %v672, %v664
    %v897 = vpack.c.b16 %v673, %v665
    %v898 = vpack.c.b16 %v674, %v666
    %v899 = vpack.c.b16 %v683, %v675
    %v900 = vpack.c.b16 %v684, %v676
    %v901 = vpack.c.b16 %v685, %v677
    %v902 = vpack.c.b16 %v686, %v678
    %v903 = vpack.c.b16 %v687, %v679
    %v904 = vpack.c.b16 %v688, %v680
    %v905 = vpack.c.b16 %v689, %v681
    %v906 = vpack.c.b16 %v690, %v682
    %v907 = vpack.c.b16 %v699, %v691
    %v908 = vpack.c.b16 %v700, %v692
    %v909 = vpack.c.b16 %v701, %v693
    %v910 = vpack.c.b16 %v702, %v694
    %v911 = vpack.c.b16 %v703, %v695
    %v912 = vpack.c.b16 %v704, %v696
    %v913 = vpack.c.b16 %v705, %v697
    %v914 = vpack.c.b16 %v706, %v698
    %v915 = vpack.c.b16 %v715, %v707
    %v916 = vpack.c.b16 %v716, %v708
    %v917 = vpack.c.b16 %v717, %v709
    %v918 = vpack.c.b16 %v718, %v710
    %v919 = vpack.c.b16 %v719, %v711
    %v920 = vpack.c.b16 %v720, %v712
    %v921 = vpack.c.b16 %v721, %v713
    %v922 = vpack.c.b16 %v722, %v714
    %v923 = vpack.c.b16 %v731, %v723
    %v924 = vpack.c.b16 %v732, %v724
    %v925 = vpack.c.b16 %v733, %v725
    %v926 = vpack.c.b16 %v734, %v726
    %v927 = vpack.c.b16 %v735, %v727
    %v928 = vpack.c.b16 %v736, %v728
    %v929 = vpack.c.b16 %v737, %v729
    %v930 = vpack.c.b16 %v738, %v730
    %v931 = vpack.c.b16 %v747, %v739
    %v932 = vpack.c.b16 %v748, %v740
    %v933 = vpack.c.b16 %v749, %v741
    %v934 = vpack.c.b16 %v750, %v742
    %v935 = vpack.c.b16 %v751, %v743
    %v936 = vpack.c.b16 %v752, %v744
    %v937 = vpack.c.b16 %v753, %v745
    %v938 = vpack.c.b16 %v754, %v746
    %v939 = vpack.c.b16 %v763, %v755
    %v940 = vpack.c.b16 %v764, %v756
    %v941 = vpack.c.b16 %v765, %v757
    %v942 = vpack.c.b16 %v766, %v758
    %v943 = vpack.c.b16 %v767, %v759
    %v944 = vpack.c.b16 %v768, %v760
    %v945 = vpack.c.b16 %v769, %v761
    %v946 = vpack.c.b16 %v770, %v762
    %v947 = vpack.c.b16 %v779, %v771
    %v948 = vpack.c.b16 %v780, %v772
    %v949 = vpack.c.b16 %v781, %v773
    %v950 = vpack.c.b16 %v782, %v774
    %v951 = vpack.c.b16 %v783, %v775
    %v952 = vpack.c.b16 %v784, %v776
    %v953 = vpack.c.b16 %v785, %v777
    %v954 = vpack.c.b16 %v786, %v778
    %v955 = vpack.c.b16 %v795, %v787
    %v956 = vpack.c.b16 %v796, %v788
    %v957 = vpack.c.b16 %v797, %v789
    %v958 = vpack.c.b16 %v798, %v790
    %v959 = vpack.c.b16 %v799, %v791
    %v960 = vpack.c.b16 %v800, %v792
    %v961 = vpack.c.b16 %v801, %v793
    %v962 = vpack.c.b16 %v802, %v794
    %v963 = vpack.c.b16 %v811, %v803
    %v964 = vpack.c.b16 %v812, %v804
    %v965 = vpack.c.b16 %v813, %v805
    %v966 = vpack.c.b16 %v814, %v806
    %v967 = vpack.c.b16 %v815, %v807
    %v968 = vpack.c.b16 %v816, %v808
    %v969 = vpack.c.b16 %v817, %v809
    %v970 = vpack.c.b16 %v818, %v810
    %vm1115 = vcmask 359424
    %v1117 = vsel %vm1115, %v359, 0
    %vm1119 = vcmask 1045504
    %v1121 = vsel %vm1119, %v963, 0
    %v1124 = vsel %vm1119, %v964, 0
    %v1127 = vsel %vm1119, %v965, 0
    %v1130 = vsel %vm1119, %v966, 0
    %v1133 = vsel %vm1119, %v967, 0
    %v1136 = vsel %vm1119, %v968, 0
    %v1139 = vsel %vm1119, %v969, 0
    %v1142 = vsel %vm1119, %v970, 0
    %1144 = vmatprep.subr.bf16.mxu0 %v876
    %1145 = vmatpush1.bf16.msra.mxu0 %v875
    %1146 = vmatprep.subr.bf16.mxu0 %v868
    %1147 = vmatpush1.bf16.msra.mxu0 %v867
    %1148 = vmatprep.subr.bf16.mxu0 %v860
    %1149 = vmatpush1.bf16.msra.mxu0 %v859
    %1150 = vmatprep.subr.bf16.mxu0 %v852
    %1151 = vmatpush1.bf16.msra.mxu0 %v851
    %1152 = vmatprep.subr.bf16.mxu0 %v844
    %1153 = vmatpush1.bf16.msra.mxu0 %v843
    %1154 = vmatprep.subr.bf16.mxu0 %v836
    %1155 = vmatpush1.bf16.msra.mxu0 %v835
    %1156 = vmatprep.subr.bf16.mxu0 %v828
    %1157 = vmatpush1.bf16.msra.mxu0 %v827
    %1158 = vmatprep.subr.bf16.mxu0 %v820
    %1159 = vmatpush1.bf16.msra.mxu0 %v819
    %1160 = vmatprep.subr.bf16.mxu0 %v940
    %1161 = vmatpush2.bf16.msra.mxu0 %v939
    %1162 = vmatprep.subr.bf16.mxu0 %v932
    %1163 = vmatpush2.bf16.msra.mxu0 %v931
    %1164 = vmatprep.subr.bf16.mxu0 %v924
    %1165 = vmatpush2.bf16.msra.mxu0 %v923
    %1166 = vmatprep.subr.bf16.mxu0 %v916
    %1167 = vmatpush2.bf16.msra.mxu0 %v915
    %1168 = vmatprep.subr.bf16.mxu0 %v908
    %1169 = vmatpush2.bf16.msra.mxu0 %v907
    %1170 = vmatprep.subr.bf16.mxu0 %v900
    %1171 = vmatpush2.bf16.msra.mxu0 %v899
    %1172 = vmatprep.subr.bf16.mxu0 %v892
    %1173 = vmatpush2.bf16.msra.mxu0 %v891
    %1174 = vmatprep.subr.bf16.mxu0 %v884
    %1175 = vmatpush2.bf16.msra.mxu0 %v883
    %1176 = vmatprep.mubr.bf16.mxu0 %v360
    %1177 = vmatmul.mubr.bf16.gmra.mxu0 %v358
    %v1178 = vpop.f32.mrf.mxu0
    %v1179 = vadd.f32 %v249, %v1178
    %v1180 = vpop.f32.mrf.mxu0
    %v1181 = vadd.f32 %v253, %v1180
    %v1182 = vpop.f32.mrf.mxu0
    %v1183 = vadd.f32 %v249, %v1182
    %v1184 = vpop.f32.mrf.mxu0
    %v1185 = vadd.f32 %v253, %v1184
    %1186 = vdwg.mxu0
    %1187 = vmatprep.subr.bf16.mxu0 0
    %1188 = vmatpush1.bf16.msra.mxu0 0
    %1189 = vmatprep.subr.bf16.mxu0 0
    %1190 = vmatpush1.bf16.msra.mxu0 0
    %1191 = vmatprep.subr.bf16.mxu0 0
    %1192 = vmatpush1.bf16.msra.mxu0 0
    %1193 = vmatprep.subr.bf16.mxu0 0
    %1194 = vmatpush1.bf16.msra.mxu0 0
    %1195 = vmatprep.subr.bf16.mxu0 0
    %1196 = vmatpush1.bf16.msra.mxu0 0
    %1197 = vmatprep.subr.bf16.mxu0 %v1124
    %1198 = vmatpush1.bf16.msra.mxu0 %v1121
    %1199 = vmatprep.subr.bf16.mxu0 %v956
    %1200 = vmatpush1.bf16.msra.mxu0 %v955
    %1201 = vmatprep.subr.bf16.mxu0 %v948
    %1202 = vmatpush1.bf16.msra.mxu0 %v947
    %1203 = vmatprep.subr.bf16.mxu0 0
    %1204 = vmatpush2.bf16.msra.mxu0 0
    %1205 = vmatprep.subr.bf16.mxu0 0
    %1206 = vmatpush2.bf16.msra.mxu0 0
    %1207 = vmatprep.subr.bf16.mxu0 0
    %1208 = vmatpush2.bf16.msra.mxu0 0
    %1209 = vmatprep.subr.bf16.mxu0 0
    %1210 = vmatpush2.bf16.msra.mxu0 0
    %1211 = vmatprep.subr.bf16.mxu0 0
    %1212 = vmatpush2.bf16.msra.mxu0 0
    %1213 = vmatprep.subr.bf16.mxu0 0
    %1214 = vmatpush2.bf16.msra.mxu0 0
    %1215 = vmatprep.subr.bf16.mxu0 0
    %1216 = vmatpush2.bf16.msra.mxu0 0
    %1217 = vmatprep.subr.bf16.mxu0 0
    %1218 = vmatpush2.bf16.msra.mxu0 0
    %1219 = vmatprep.mubr.bf16.mxu0 0
    %1220 = vmatmul.mubr.bf16.gmra.mxu0 %v1117
    %v1221 = vpop.f32.mrf.mxu0
    %v1222 = vadd.f32 %v1179, %v1221
    %v1223 = vpop.f32.mrf.mxu0
    %v1224 = vadd.f32 %v1181, %v1223
    %v1225 = vpop.f32.mrf.mxu0
    %v1226 = vadd.f32 %v1183, %v1225
    %v1227 = vpop.f32.mrf.mxu0
    %v1228 = vadd.f32 %v1185, %v1227
    %1229 = vdwg.mxu0
    %1230 = vmatprep.subr.bf16.mxu0 %v878
    %1231 = vmatpush1.bf16.msra.mxu0 %v877
    %1232 = vmatprep.subr.bf16.mxu0 %v870
    %1233 = vmatpush1.bf16.msra.mxu0 %v869
    %1234 = vmatprep.subr.bf16.mxu0 %v862
    %1235 = vmatpush1.bf16.msra.mxu0 %v861
    %1236 = vmatprep.subr.bf16.mxu0 %v854
    %1237 = vmatpush1.bf16.msra.mxu0 %v853
    %1238 = vmatprep.subr.bf16.mxu0 %v846
    %1239 = vmatpush1.bf16.msra.mxu0 %v845
    %1240 = vmatprep.subr.bf16.mxu0 %v838
    %1241 = vmatpush1.bf16.msra.mxu0 %v837
    %1242 = vmatprep.subr.bf16.mxu0 %v830
    %1243 = vmatpush1.bf16.msra.mxu0 %v829
    %1244 = vmatprep.subr.bf16.mxu0 %v822
    %1245 = vmatpush1.bf16.msra.mxu0 %v821
    %1246 = vmatprep.subr.bf16.mxu0 %v942
    %1247 = vmatpush2.bf16.msra.mxu0 %v941
    %1248 = vmatprep.subr.bf16.mxu0 %v934
    %1249 = vmatpush2.bf16.msra.mxu0 %v933
    %1250 = vmatprep.subr.bf16.mxu0 %v926
    %1251 = vmatpush2.bf16.msra.mxu0 %v925
    %1252 = vmatprep.subr.bf16.mxu0 %v918
    %1253 = vmatpush2.bf16.msra.mxu0 %v917
    %1254 = vmatprep.subr.bf16.mxu0 %v910
    %1255 = vmatpush2.bf16.msra.mxu0 %v909
    %1256 = vmatprep.subr.bf16.mxu0 %v902
    %1257 = vmatpush2.bf16.msra.mxu0 %v901
    %1258 = vmatprep.subr.bf16.mxu0 %v894
    %1259 = vmatpush2.bf16.msra.mxu0 %v893
    %1260 = vmatprep.subr.bf16.mxu0 %v886
    %1261 = vmatpush2.bf16.msra.mxu0 %v885
    %1262 = vmatprep.mubr.bf16.mxu0 %v360
    %1263 = vmatmul.mubr.bf16.gmra.mxu0 %v358
    %v1264 = vpop.f32.mrf.mxu0
    %v1265 = vadd.f32 %v257, %v1264
    %v1266 = vpop.f32.mrf.mxu0
    %v1267 = vadd.f32 %v261, %v1266
    %v1268 = vpop.f32.mrf.mxu0
    %v1269 = vadd.f32 %v257, %v1268
    %v1270 = vpop.f32.mrf.mxu0
    %v1271 = vadd.f32 %v261, %v1270
    %1272 = vdwg.mxu0
    %1273 = vmatprep.subr.bf16.mxu0 0
    %1274 = vmatpush1.bf16.msra.mxu0 0
    %1275 = vmatprep.subr.bf16.mxu0 0
    %1276 = vmatpush1.bf16.msra.mxu0 0
    %1277 = vmatprep.subr.bf16.mxu0 0
    %1278 = vmatpush1.bf16.msra.mxu0 0
    %1279 = vmatprep.subr.bf16.mxu0 0
    %1280 = vmatpush1.bf16.msra.mxu0 0
    %1281 = vmatprep.subr.bf16.mxu0 0
    %1282 = vmatpush1.bf16.msra.mxu0 0
    %1283 = vmatprep.subr.bf16.mxu0 %v1130
    %1284 = vmatpush1.bf16.msra.mxu0 %v1127
    %1285 = vmatprep.subr.bf16.mxu0 %v958
    %1286 = vmatpush1.bf16.msra.mxu0 %v957
    %1287 = vmatprep.subr.bf16.mxu0 %v950
    %1288 = vmatpush1.bf16.msra.mxu0 %v949
    %1289 = vmatprep.subr.bf16.mxu0 0
    %1290 = vmatpush2.bf16.msra.mxu0 0
    %1291 = vmatprep.subr.bf16.mxu0 0
    %1292 = vmatpush2.bf16.msra.mxu0 0
    %1293 = vmatprep.subr.bf16.mxu0 0
    %1294 = vmatpush2.bf16.msra.mxu0 0
    %1295 = vmatprep.subr.bf16.mxu0 0
    %1296 = vmatpush2.bf16.msra.mxu0 0
    %1297 = vmatprep.subr.bf16.mxu0 0
    %1298 = vmatpush2.bf16.msra.mxu0 0
    %1299 = vmatprep.subr.bf16.mxu0 0
    %1300 = vmatpush2.bf16.msra.mxu0 0
    %1301 = vmatprep.subr.bf16.mxu0 0
    %1302 = vmatpush2.bf16.msra.mxu0 0
    %1303 = vmatprep.subr.bf16.mxu0 0
    %1304 = vmatpush2.bf16.msra.mxu0 0
    %1305 = vmatprep.mubr.bf16.mxu0 0
    %1306 = vmatmul.mubr.bf16.gmra.mxu0 %v1117
    %v1307 = vpop.f32.mrf.mxu0
    %v1308 = vadd.f32 %v1265, %v1307
    %v1309 = vpop.f32.mrf.mxu0
    %v1310 = vadd.f32 %v1267, %v1309
    %v1311 = vpop.f32.mrf.mxu0
    %v1312 = vadd.f32 %v1269, %v1311
    %v1313 = vpop.f32.mrf.mxu0
    %v1314 = vadd.f32 %v1271, %v1313
    %1315 = vdwg.mxu0
    %1316 = vmatprep.subr.bf16.mxu0 %v880
    %1317 = vmatpush1.bf16.msra.mxu0 %v879
    %1318 = vmatprep.subr.bf16.mxu0 %v872
    %1319 = vmatpush1.bf16.msra.mxu0 %v871
    %1320 = vmatprep.subr.bf16.mxu0 %v864
    %1321 = vmatpush1.bf16.msra.mxu0 %v863
    %1322 = vmatprep.subr.bf16.mxu0 %v856
    %1323 = vmatpush1.bf16.msra.mxu0 %v855
    %1324 = vmatprep.subr.bf16.mxu0 %v848
    %1325 = vmatpush1.bf16.msra.mxu0 %v847
    %1326 = vmatprep.subr.bf16.mxu0 %v840
    %1327 = vmatpush1.bf16.msra.mxu0 %v839
    %1328 = vmatprep.subr.bf16.mxu0 %v832
    %1329 = vmatpush1.bf16.msra.mxu0 %v831
    %1330 = vmatprep.subr.bf16.mxu0 %v824
    %1331 = vmatpush1.bf16.msra.mxu0 %v823
    %1332 = vmatprep.subr.bf16.mxu0 %v944
    %1333 = vmatpush2.bf16.msra.mxu0 %v943
    %1334 = vmatprep.subr.bf16.mxu0 %v936
    %1335 = vmatpush2.bf16.msra.mxu0 %v935
    %1336 = vmatprep.subr.bf16.mxu0 %v928
    %1337 = vmatpush2.bf16.msra.mxu0 %v927
    %1338 = vmatprep.subr.bf16.mxu0 %v920
    %1339 = vmatpush2.bf16.msra.mxu0 %v919
    %1340 = vmatprep.subr.bf16.mxu0 %v912
    %1341 = vmatpush2.bf16.msra.mxu0 %v911
    %1342 = vmatprep.subr.bf16.mxu0 %v904
    %1343 = vmatpush2.bf16.msra.mxu0 %v903
    %1344 = vmatprep.subr.bf16.mxu0 %v896
    %1345 = vmatpush2.bf16.msra.mxu0 %v895
    %1346 = vmatprep.subr.bf16.mxu0 %v888
    %1347 = vmatpush2.bf16.msra.mxu0 %v887
    %1348 = vmatprep.mubr.bf16.mxu0 %v360
    %1349 = vmatmul.mubr.bf16.gmra.mxu0 %v358
    %v1350 = vpop.f32.mrf.mxu0
    %v1351 = vadd.f32 %v265, %v1350
    %v1352 = vpop.f32.mrf.mxu0
    %v1353 = vadd.f32 %v269, %v1352
    %v1354 = vpop.f32.mrf.mxu0
    %v1355 = vadd.f32 %v265, %v1354
    %v1356 = vpop.f32.mrf.mxu0
    %v1357 = vadd.f32 %v269, %v1356
    %1358 = vdwg.mxu0
    %1359 = vmatprep.subr.bf16.mxu0 0
    %1360 = vmatpush1.bf16.msra.mxu0 0
    %1361 = vmatprep.subr.bf16.mxu0 0
    %1362 = vmatpush1.bf16.msra.mxu0 0
    %1363 = vmatprep.subr.bf16.mxu0 0
    %1364 = vmatpush1.bf16.msra.mxu0 0
    %1365 = vmatprep.subr.bf16.mxu0 0
    %1366 = vmatpush1.bf16.msra.mxu0 0
    %1367 = vmatprep.subr.bf16.mxu0 0
    %1368 = vmatpush1.bf16.msra.mxu0 0
    %1369 = vmatprep.subr.bf16.mxu0 %v1136
    %1370 = vmatpush1.bf16.msra.mxu0 %v1133
    %1371 = vmatprep.subr.bf16.mxu0 %v960
    %1372 = vmatpush1.bf16.msra.mxu0 %v959
    %1373 = vmatprep.subr.bf16.mxu0 %v952
    %1374 = vmatpush1.bf16.msra.mxu0 %v951
    %1375 = vmatprep.subr.bf16.mxu0 0
    %1376 = vmatpush2.bf16.msra.mxu0 0
    %1377 = vmatprep.subr.bf16.mxu0 0
    %1378 = vmatpush2.bf16.msra.mxu0 0
    %1379 = vmatprep.subr.bf16.mxu0 0
    %1380 = vmatpush2.bf16.msra.mxu0 0
    %1381 = vmatprep.subr.bf16.mxu0 0
    %1382 = vmatpush2.bf16.msra.mxu0 0
    %1383 = vmatprep.subr.bf16.mxu0 0
    %1384 = vmatpush2.bf16.msra.mxu0 0
    %1385 = vmatprep.subr.bf16.mxu0 0
    %1386 = vmatpush2.bf16.msra.mxu0 0
    %1387 = vmatprep.subr.bf16.mxu0 0
    %1388 = vmatpush2.bf16.msra.mxu0 0
    %1389 = vmatprep.subr.bf16.mxu0 0
    %1390 = vmatpush2.bf16.msra.mxu0 0
    %1391 = vmatprep.mubr.bf16.mxu0 0
    %1392 = vmatmul.mubr.bf16.gmra.mxu0 %v1117
    %v1393 = vpop.f32.mrf.mxu0
    %v1394 = vadd.f32 %v1351, %v1393
    %v1395 = vpop.f32.mrf.mxu0
    %v1396 = vadd.f32 %v1353, %v1395
    %v1397 = vpop.f32.mrf.mxu0
    %v1398 = vadd.f32 %v1355, %v1397
    %v1399 = vpop.f32.mrf.mxu0
    %v1400 = vadd.f32 %v1357, %v1399
    %1401 = vdwg.mxu0
    %1402 = vmatprep.subr.bf16.mxu0 %v882
    %1403 = vmatpush1.bf16.msra.mxu0 %v881
    %1404 = vmatprep.subr.bf16.mxu0 %v874
    %1405 = vmatpush1.bf16.msra.mxu0 %v873
    %1406 = vmatprep.subr.bf16.mxu0 %v866
    %1407 = vmatpush1.bf16.msra.mxu0 %v865
    %1408 = vmatprep.subr.bf16.mxu0 %v858
    %1409 = vmatpush1.bf16.msra.mxu0 %v857
    %1410 = vmatprep.subr.bf16.mxu0 %v850
    %1411 = vmatpush1.bf16.msra.mxu0 %v849
    %1412 = vmatprep.subr.bf16.mxu0 %v842
    %1413 = vmatpush1.bf16.msra.mxu0 %v841
    %1414 = vmatprep.subr.bf16.mxu0 %v834
    %1415 = vmatpush1.bf16.msra.mxu0 %v833
    %1416 = vmatprep.subr.bf16.mxu0 %v826
    %1417 = vmatpush1.bf16.msra.mxu0 %v825
    %1418 = vmatprep.subr.bf16.mxu0 %v946
    %1419 = vmatpush2.bf16.msra.mxu0 %v945
    %1420 = vmatprep.subr.bf16.mxu0 %v938
    %1421 = vmatpush2.bf16.msra.mxu0 %v937
    %1422 = vmatprep.subr.bf16.mxu0 %v930
    %1423 = vmatpush2.bf16.msra.mxu0 %v929
    %1424 = vmatprep.subr.bf16.mxu0 %v922
    %1425 = vmatpush2.bf16.msra.mxu0 %v921
    %1426 = vmatprep.subr.bf16.mxu0 %v914
    %1427 = vmatpush2.bf16.msra.mxu0 %v913
    %1428 = vmatprep.subr.bf16.mxu0 %v906
    %1429 = vmatpush2.bf16.msra.mxu0 %v905
    %1430 = vmatprep.subr.bf16.mxu0 %v898
    %1431 = vmatpush2.bf16.msra.mxu0 %v897
    %1432 = vmatprep.subr.bf16.mxu0 %v890
    %1433 = vmatpush2.bf16.msra.mxu0 %v889
    %1434 = vmatprep.mubr.bf16.mxu0 %v360
    %1435 = vmatmul.mubr.bf16.gmra.mxu0 %v358
    %v1436 = vpop.f32.mrf.mxu0
    %v1437 = vadd.f32 %v273, %v1436
    %v1438 = vpop.f32.mrf.mxu0
    %v1439 = vadd.f32 %v277, %v1438
    %v1440 = vpop.f32.mrf.mxu0
    %v1441 = vadd.f32 %v273, %v1440
    %v1442 = vpop.f32.mrf.mxu0
    %v1443 = vadd.f32 %v277, %v1442
    %1444 = vdwg.mxu0
    %1445 = vmatprep.subr.bf16.mxu0 0
    %1446 = vmatpush1.bf16.msra.mxu0 0
    %1447 = vmatprep.subr.bf16.mxu0 0
    %1448 = vmatpush1.bf16.msra.mxu0 0
    %1449 = vmatprep.subr.bf16.mxu0 0
    %1450 = vmatpush1.bf16.msra.mxu0 0
    %1451 = vmatprep.subr.bf16.mxu0 0
    %1452 = vmatpush1.bf16.msra.mxu0 0
    %1453 = vmatprep.subr.bf16.mxu0 0
    %1454 = vmatpush1.bf16.msra.mxu0 0
    %1455 = vmatprep.subr.bf16.mxu0 %v1142
    %1456 = vmatpush1.bf16.msra.mxu0 %v1139
    %1457 = vmatprep.subr.bf16.mxu0 %v962
    %1458 = vmatpush1.bf16.msra.mxu0 %v961
    %1459 = vmatprep.subr.bf16.mxu0 %v954
    %1460 = vmatpush1.bf16.msra.mxu0 %v953
    %1461 = vmatprep.subr.bf16.mxu0 0
    %1462 = vmatpush2.bf16.msra.mxu0 0
    %1463 = vmatprep.subr.bf16.mxu0 0
    %1464 = vmatpush2.bf16.msra.mxu0 0
    %1465 = vmatprep.subr.bf16.mxu0 0
    %1466 = vmatpush2.bf16.msra.mxu0 0
    %1467 = vmatprep.subr.bf16.mxu0 0
    %1468 = vmatpush2.bf16.msra.mxu0 0
    %1469 = vmatprep.subr.bf16.mxu0 0
    %1470 = vmatpush2.bf16.msra.mxu0 0
    %1471 = vmatprep.subr.bf16.mxu0 0
    %1472 = vmatpush2.bf16.msra.mxu0 0
    %1473 = vmatprep.subr.bf16.mxu0 0
    %1474 = vmatpush2.bf16.msra.mxu0 0
    %1475 = vmatprep.subr.bf16.mxu0 0
    %1476 = vmatpush2.bf16.msra.mxu0 0
    %1477 = vmatprep.mubr.bf16.mxu0 0
    %1478 = vmatmul.mubr.bf16.gmra.mxu0 %v1117
    %v1479 = vpop.f32.mrf.mxu0
    %v1480 = vadd.f32 %v1437, %v1479
    %v1481 = vpop.f32.mrf.mxu0
    %v1482 = vadd.f32 %v1439, %v1481
    %v1483 = vpop.f32.mrf.mxu0
    %v1484 = vadd.f32 %v1441, %v1483
    %v1485 = vpop.f32.mrf.mxu0
    %v1486 = vadd.f32 %v1443, %v1485
    %1487 = vdwg.mxu0
    %v1504 = vcombine.low %v1222, %v1224
    %v1505 = vcombine.high %v1222, %v1224
    %v1506 = vcombine.low %v1308, %v1310
    %v1507 = vcombine.high %v1308, %v1310
    %v1509 = vunpack.c.l.s4 1983009808
    %v1510 = vunpack.c.0.s8 %v1509
    %v1511 = vlaneseq
    %v1512 = vshrl.u32 %v1511, 7
    %v1513 = vsub.s32 %v1510, %v1512
    %v1514 = vrot.slane %v1504, %v1513
    %v1516 = vunpack.c.l.s4 1983009808
    %v1517 = vunpack.c.0.s8 %v1516
    %v1518 = vlaneseq
    %v1519 = vshrl.u32 %v1518, 7
    %v1520 = vsub.s32 %v1517, %v1519
    %v1521 = vrot.slane %v1505, %v1520
    %v1523 = vunpack.c.l.s4 1983009808
    %v1524 = vunpack.c.0.s8 %v1523
    %v1525 = vlaneseq
    %v1526 = vshrl.u32 %v1525, 7
    %v1527 = vsub.s32 %v1524, %v1526
    %v1528 = vrot.slane %v1506, %v1527
    %v1530 = vunpack.c.l.s4 1983009808
    %v1531 = vunpack.c.0.s8 %v1530
    %v1532 = vlaneseq
    %v1533 = vshrl.u32 %v1532, 7
    %v1534 = vsub.s32 %v1531, %v1533
    %v1535 = vrot.slane %v1507, %v1534
    %v1536 = vcombine.low %v1514, %v1528
    %v1537 = vcombine.high %v1514, %v1528
    %v1538 = vcombine.low %v1521, %v1535
    %v1539 = vcombine.high %v1521, %v1535
    %v1540 = vcombine.low %v1394, %v1396
    %v1541 = vcombine.high %v1394, %v1396
    %v1542 = vcombine.low %v1480, %v1482
    %v1543 = vcombine.high %v1480, %v1482
    %v1545 = vunpack.c.l.s4 1983009808
    %v1546 = vunpack.c.0.s8 %v1545
    %v1547 = vlaneseq
    %v1548 = vshrl.u32 %v1547, 7
    %v1549 = vsub.s32 %v1546, %v1548
    %v1550 = vrot.slane %v1540, %v1549
    %v1552 = vunpack.c.l.s4 1983009808
    %v1553 = vunpack.c.0.s8 %v1552
    %v1554 = vlaneseq
    %v1555 = vshrl.u32 %v1554, 7
    %v1556 = vsub.s32 %v1553, %v1555
    %v1557 = vrot.slane %v1541, %v1556
    %v1559 = vunpack.c.l.s4 1983009808
    %v1560 = vunpack.c.0.s8 %v1559
    %v1561 = vlaneseq
    %v1562 = vshrl.u32 %v1561, 7
    %v1563 = vsub.s32 %v1560, %v1562
    %v1564 = vrot.slane %v1542, %v1563
    %v1566 = vunpack.c.l.s4 1983009808
    %v1567 = vunpack.c.0.s8 %v1566
    %v1568 = vlaneseq
    %v1569 = vshrl.u32 %v1568, 7
    %v1570 = vsub.s32 %v1567, %v1569
    %v1571 = vrot.slane %v1543, %v1570
    %v1572 = vcombine.low %v1550, %v1564
    %v1573 = vcombine.high %v1550, %v1564
    %v1574 = vcombine.low %v1557, %v1571
    %v1575 = vcombine.high %v1557, %v1571
    %v1576 = vcombine.low %v1226, %v1228
    %v1577 = vcombine.high %v1226, %v1228
    %v1578 = vcombine.low %v1312, %v1314
    %v1579 = vcombine.high %v1312, %v1314
    %v1581 = vunpack.c.l.s4 1983009808
    %v1582 = vunpack.c.0.s8 %v1581
    %v1583 = vlaneseq
    %v1584 = vshrl.u32 %v1583, 7
    %v1585 = vsub.s32 %v1582, %v1584
    %v1586 = vrot.slane %v1576, %v1585
    %v1588 = vunpack.c.l.s4 1983009808
    %v1589 = vunpack.c.0.s8 %v1588
    %v1590 = vlaneseq
    %v1591 = vshrl.u32 %v1590, 7
    %v1592 = vsub.s32 %v1589, %v1591
    %v1593 = vrot.slane %v1577, %v1592
    %v1595 = vunpack.c.l.s4 1983009808
    %v1596 = vunpack.c.0.s8 %v1595
    %v1597 = vlaneseq
    %v1598 = vshrl.u32 %v1597, 7
    %v1599 = vsub.s32 %v1596, %v1598
    %v1600 = vrot.slane %v1578, %v1599
    %v1602 = vunpack.c.l.s4 1983009808
    %v1603 = vunpack.c.0.s8 %v1602
    %v1604 = vlaneseq
    %v1605 = vshrl.u32 %v1604, 7
    %v1606 = vsub.s32 %v1603, %v1605
    %v1607 = vrot.slane %v1579, %v1606
    %v1608 = vcombine.low %v1586, %v1600
    %v1609 = vcombine.high %v1586, %v1600
    %v1610 = vcombine.low %v1593, %v1607
    %v1611 = vcombine.high %v1593, %v1607
    %v1612 = vcombine.low %v1398, %v1400
    %v1613 = vcombine.high %v1398, %v1400
    %v1614 = vcombine.low %v1484, %v1486
    %v1615 = vcombine.high %v1484, %v1486
    %v1617 = vunpack.c.l.s4 1983009808
    %v1618 = vunpack.c.0.s8 %v1617
    %v1619 = vlaneseq
    %v1620 = vshrl.u32 %v1619, 7
    %v1621 = vsub.s32 %v1618, %v1620
    %v1622 = vrot.slane %v1612, %v1621
    %v1624 = vunpack.c.l.s4 1983009808
    %v1625 = vunpack.c.0.s8 %v1624
    %v1626 = vlaneseq
    %v1627 = vshrl.u32 %v1626, 7
    %v1628 = vsub.s32 %v1625, %v1627
    %v1629 = vrot.slane %v1613, %v1628
    %v1631 = vunpack.c.l.s4 1983009808
    %v1632 = vunpack.c.0.s8 %v1631
    %v1633 = vlaneseq
    %v1634 = vshrl.u32 %v1633, 7
    %v1635 = vsub.s32 %v1632, %v1634
    %v1636 = vrot.slane %v1614, %v1635
    %v1638 = vunpack.c.l.s4 1983009808
    %v1639 = vunpack.c.0.s8 %v1638
    %v1640 = vlaneseq
    %v1641 = vshrl.u32 %v1640, 7
    %v1642 = vsub.s32 %v1639, %v1641
    %v1643 = vrot.slane %v1615, %v1642
    %v1644 = vcombine.low %v1622, %v1636
    %v1645 = vcombine.high %v1622, %v1636
    %v1646 = vcombine.low %v1629, %v1643
    %v1647 = vcombine.high %v1629, %v1643
    %v1648 = vld [vmem:[#allocation7] sm:$0xff]
    %v1649 = vld [vmem:[#allocation7 + $0x8] sm:$0xff]
    %v1650 = vld [vmem:[#allocation7 + $0x10] sm:$0xff]
    %v1651 = vld [vmem:[#allocation7 + $0x18] sm:$0xff]
    %v1652 = vld [vmem:[#allocation7 + $0x20] sm:$0xff]
    %v1653 = vld [vmem:[#allocation7 + $0x28] sm:$0xff]
    %v1654 = vld [vmem:[#allocation7 + $0x30] sm:$0xff]
    %v1655 = vld [vmem:[#allocation7 + $0x38] sm:$0xff]
    %v1656 = vld [vmem:[#allocation7 + $0x40] sm:$0xff]
    %v1657 = vld [vmem:[#allocation7 + $0x48] sm:$0xff]
    %v1658 = vld [vmem:[#allocation7 + $0x50] sm:$0xff]
    %v1659 = vld [vmem:[#allocation7 + $0x58] sm:$0xff]
    %v1660 = vld [vmem:[#allocation7 + $0x60] sm:$0xff]
    %v1661 = vld [vmem:[#allocation7 + $0x68] sm:$0xff]
    %v1662 = vld [vmem:[#allocation7 + $0x70] sm:$0xff]
    %v1663 = vld [vmem:[#allocation7 + $0x78] sm:$0xff]
    %v1664 = vld [vmem:[#allocation7 + $0x80] sm:$0xff]
    %v1665 = vld [vmem:[#allocation7 + $0x88] sm:$0xff]
    %v1666 = vld [vmem:[#allocation7 + $0x90] sm:$0xff]
    %v1667 = vld [vmem:[#allocation7 + $0x98] sm:$0xff]
    %v1668 = vld [vmem:[#allocation7 + $0xa0] sm:$0xff]
    %v1669 = vld [vmem:[#allocation7 + $0xa8] sm:$0xff]
    %v1670 = vld [vmem:[#allocation7 + $0xb0] sm:$0xff]
    %v1671 = vld [vmem:[#allocation7 + $0xb8] sm:$0xff]
    %v1672 = vld [vmem:[#allocation7 + $0xc0] sm:$0xff]
    %v1673 = vld [vmem:[#allocation7 + $0xc8] sm:$0xff]
    %v1674 = vld [vmem:[#allocation7 + $0xd0] sm:$0xff]
    %v1675 = vld [vmem:[#allocation7 + $0xd8] sm:$0xff]
    %v1676 = vld [vmem:[#allocation7 + $0xe0] sm:$0xff]
    %v1677 = vld [vmem:[#allocation7 + $0xe8] sm:$0xff]
    %v1678 = vld [vmem:[#allocation7 + $0xf0] sm:$0xff]
    %v1679 = vld [vmem:[#allocation7 + $0xf8] sm:$0xff]
    %v1680 = vld [vmem:[#allocation7 + $0x100] sm:$0xff]
    %v1681 = vld [vmem:[#allocation7 + $0x108] sm:$0xff]
    %v1682 = vld [vmem:[#allocation7 + $0x110] sm:$0xff]
    %v1683 = vld [vmem:[#allocation7 + $0x118] sm:$0xff]
    %v1684 = vld [vmem:[#allocation7 + $0x120] sm:$0xff]
    %v1685 = vld [vmem:[#allocation7 + $0x128] sm:$0xff]
    %v1686 = vld [vmem:[#allocation7 + $0x130] sm:$0xff]
    %v1687 = vld [vmem:[#allocation7 + $0x138] sm:$0xff]
    %v1688 = vld [vmem:[#allocation7 + $0x140] sm:$0xff]
    %v1689 = vld [vmem:[#allocation7 + $0x148] sm:$0xff]
    %v1690 = vld [vmem:[#allocation7 + $0x150] sm:$0xff]
    %v1691 = vld [vmem:[#allocation7 + $0x158] sm:$0xff]
    %v1692 = vld [vmem:[#allocation7 + $0x160] sm:$0xff]
    %v1693 = vld [vmem:[#allocation7 + $0x168] sm:$0xff]
    %v1694 = vld [vmem:[#allocation7 + $0x170] sm:$0xff]
    %v1695 = vld [vmem:[#allocation7 + $0x178] sm:$0xff]
    %v1696 = vld [vmem:[#allocation7 + $0x180] sm:$0xff]
    %v1697 = vld [vmem:[#allocation7 + $0x188] sm:$0xff]
    %v1698 = vld [vmem:[#allocation7 + $0x190] sm:$0xff]
    %v1699 = vld [vmem:[#allocation7 + $0x198] sm:$0xff]
    %v1700 = vld [vmem:[#allocation7 + $0x1a0] sm:$0xff]
    %v1701 = vld [vmem:[#allocation7 + $0x1a8] sm:$0xff]
    %v1702 = vld [vmem:[#allocation7 + $0x1b0] sm:$0xff]
    %v1703 = vld [vmem:[#allocation7 + $0x1b8] sm:$0xff]
    %v1704 = vld [vmem:[#allocation7 + $0x1c0] sm:$0xff]
    %v1705 = vld [vmem:[#allocation7 + $0x1c8] sm:$0xff]
    %v1706 = vld [vmem:[#allocation7 + $0x1d0] sm:$0xff]
    %v1707 = vld [vmem:[#allocation7 + $0x1d8] sm:$0xff]
    %v1708 = vld [vmem:[#allocation7 + $0x1e0] sm:$0xff]
    %v1709 = vld [vmem:[#allocation7 + $0x1e8] sm:$0xff]
    %v1710 = vld [vmem:[#allocation7 + $0x1f0] sm:$0xff]
    %v1711 = vld [vmem:[#allocation7 + $0x1f8] sm:$0xff]
    %v1712 = vld [vmem:[#allocation7 + $0x200] sm:$0xff]
    %v1713 = vld [vmem:[#allocation7 + $0x208] sm:$0xff]
    %v1714 = vld [vmem:[#allocation7 + $0x210] sm:$0xff]
    %v1715 = vld [vmem:[#allocation7 + $0x218] sm:$0xff]
    %v1716 = vld [vmem:[#allocation7 + $0x220] sm:$0xff]
    %v1717 = vld [vmem:[#allocation7 + $0x228] sm:$0xff]
    %v1718 = vld [vmem:[#allocation7 + $0x230] sm:$0xff]
    %v1719 = vld [vmem:[#allocation7 + $0x238] sm:$0xff]
    %v1720 = vld [vmem:[#allocation7 + $0x240] sm:$0xff]
    %v1721 = vld [vmem:[#allocation7 + $0x248] sm:$0xff]
    %v1722 = vld [vmem:[#allocation7 + $0x250] sm:$0xff]
    %v1723 = vld [vmem:[#allocation7 + $0x258] sm:$0xff]
    %v1724 = vld [vmem:[#allocation7 + $0x260] sm:$0xff]
    %v1725 = vld [vmem:[#allocation7 + $0x268] sm:$0xff]
    %v1726 = vld [vmem:[#allocation7 + $0x270] sm:$0xff]
    %v1727 = vld [vmem:[#allocation7 + $0x278] sm:$0xff]
    %v1728 = vld [vmem:[#allocation7 + $0x280] sm:$0xff]
    %v1729 = vld [vmem:[#allocation7 + $0x288] sm:$0xff]
    %v1730 = vld [vmem:[#allocation7 + $0x290] sm:$0xff]
    %v1731 = vld [vmem:[#allocation7 + $0x298] sm:$0xff]
    %v1732 = vld [vmem:[#allocation7 + $0x2a0] sm:$0xff]
    %v1733 = vld [vmem:[#allocation7 + $0x2a8] sm:$0xff]
    %v1734 = vld [vmem:[#allocation7 + $0x2b0] sm:$0xff]
    %v1735 = vld [vmem:[#allocation7 + $0x2b8] sm:$0xff]
    %v1736 = vld [vmem:[#allocation7 + $0x2c0] sm:$0xff]
    %v1737 = vld [vmem:[#allocation7 + $0x2c8] sm:$0xff]
    %v1738 = vld [vmem:[#allocation7 + $0x2d0] sm:$0xff]
    %v1739 = vld [vmem:[#allocation7 + $0x2d8] sm:$0xff]
    %v1740 = vld [vmem:[#allocation7 + $0x2e0] sm:$0xff]
    %v1741 = vld [vmem:[#allocation7 + $0x2e8] sm:$0xff]
    %v1742 = vld [vmem:[#allocation7 + $0x2f0] sm:$0xff]
    %v1743 = vld [vmem:[#allocation7 + $0x2f8] sm:$0xff]
    %v1744 = vld [vmem:[#allocation7 + $0x300] sm:$0xff]
    %v1745 = vld [vmem:[#allocation7 + $0x308] sm:$0xff]
    %v1746 = vld [vmem:[#allocation7 + $0x310] sm:$0xff]
    %v1747 = vld [vmem:[#allocation7 + $0x318] sm:$0xff]
    %v1748 = vld [vmem:[#allocation7 + $0x320] sm:$0xff]
    %v1749 = vld [vmem:[#allocation7 + $0x328] sm:$0xff]
    %v1750 = vld [vmem:[#allocation7 + $0x330] sm:$0xff]
    %v1751 = vld [vmem:[#allocation7 + $0x338] sm:$0xff]
    %v1752 = vld [vmem:[#allocation7 + $0x340] sm:$0xff]
    %v1753 = vld [vmem:[#allocation7 + $0x348] sm:$0xff]
    %v1754 = vld [vmem:[#allocation7 + $0x350] sm:$0xff]
    %v1755 = vld [vmem:[#allocation7 + $0x358] sm:$0xff]
    %v1756 = vld [vmem:[#allocation7 + $0x360] sm:$0xff]
    %v1757 = vld [vmem:[#allocation7 + $0x368] sm:$0xff]
    %v1758 = vld [vmem:[#allocation7 + $0x370] sm:$0xff]
    %v1759 = vld [vmem:[#allocation7 + $0x378] sm:$0xff]
    %v1760 = vld [vmem:[#allocation7 + $0x380] sm:$0xff]
    %v1761 = vld [vmem:[#allocation7 + $0x388] sm:$0xff]
    %v1762 = vld [vmem:[#allocation7 + $0x390] sm:$0xff]
    %v1763 = vld [vmem:[#allocation7 + $0x398] sm:$0xff]
    %v1764 = vld [vmem:[#allocation7 + $0x3a0] sm:$0xff]
    %v1765 = vld [vmem:[#allocation7 + $0x3a8] sm:$0xff]
    %v1766 = vld [vmem:[#allocation7 + $0x3b0] sm:$0xff]
    %v1767 = vld [vmem:[#allocation7 + $0x3b8] sm:$0xff]
    %v1768 = vld [vmem:[#allocation7 + $0x3c0] sm:$0xff]
    %v1769 = vld [vmem:[#allocation7 + $0x3c8] sm:$0xff]
    %v1770 = vld [vmem:[#allocation7 + $0x3d0] sm:$0xff]
    %v1771 = vld [vmem:[#allocation7 + $0x3d8] sm:$0xff]
    %v1772 = vld [vmem:[#allocation7 + $0x3e0] sm:$0xff]
    %v1773 = vld [vmem:[#allocation7 + $0x3e8] sm:$0xff]
    %v1774 = vld [vmem:[#allocation7 + $0x3f0] sm:$0xff]
    %v1775 = vld [vmem:[#allocation7 + $0x3f8] sm:$0xff]
    %v1776 = vld [vmem:[#allocation7 + $0x400] sm:$0xff]
    %v1777 = vld [vmem:[#allocation7 + $0x408] sm:$0xff]
    %v1778 = vld [vmem:[#allocation7 + $0x410] sm:$0xff]
    %v1779 = vld [vmem:[#allocation7 + $0x418] sm:$0xff]
    %v1780 = vld [vmem:[#allocation7 + $0x420] sm:$0xff]
    %v1781 = vld [vmem:[#allocation7 + $0x428] sm:$0xff]
    %v1782 = vld [vmem:[#allocation7 + $0x430] sm:$0xff]
    %v1783 = vld [vmem:[#allocation7 + $0x438] sm:$0xff]
    %v1784 = vld [vmem:[#allocation7 + $0x440] sm:$0xff]
    %v1785 = vld [vmem:[#allocation7 + $0x448] sm:$0xff]
    %v1786 = vld [vmem:[#allocation7 + $0x450] sm:$0xff]
    %v1787 = vld [vmem:[#allocation7 + $0x458] sm:$0xff]
    %v1788 = vld [vmem:[#allocation7 + $0x460] sm:$0xff]
    %v1789 = vld [vmem:[#allocation7 + $0x468] sm:$0xff]
    %v1790 = vld [vmem:[#allocation7 + $0x470] sm:$0xff]
    %v1791 = vld [vmem:[#allocation7 + $0x478] sm:$0xff]
    %v1792 = vld [vmem:[#allocation7 + $0x480] sm:$0xff]
    %v1793 = vld [vmem:[#allocation7 + $0x488] sm:$0xff]
    %v1794 = vld [vmem:[#allocation7 + $0x490] sm:$0xff]
    %v1795 = vld [vmem:[#allocation7 + $0x498] sm:$0xff]
    %v1796 = vld [vmem:[#allocation7 + $0x4a0] sm:$0xff]
    %v1797 = vld [vmem:[#allocation7 + $0x4a8] sm:$0xff]
    %v1798 = vld [vmem:[#allocation7 + $0x4b0] sm:$0xff]
    %v1799 = vld [vmem:[#allocation7 + $0x4b8] sm:$0xff]
    %v1800 = vld [vmem:[#allocation7 + $0x4c0] sm:$0xff]
    %v1801 = vld [vmem:[#allocation7 + $0x4c8] sm:$0xff]
    %v1802 = vld [vmem:[#allocation7 + $0x4d0] sm:$0xff]
    %v1803 = vld [vmem:[#allocation7 + $0x4d8] sm:$0xff]
    %v1804 = vld [vmem:[#allocation7 + $0x4e0] sm:$0xff]
    %v1805 = vld [vmem:[#allocation7 + $0x4e8] sm:$0xff]
    %v1806 = vld [vmem:[#allocation7 + $0x4f0] sm:$0xff]
    %v1807 = vld [vmem:[#allocation7 + $0x4f8] sm:$0xff]
    %v1808 = vld [vmem:[#allocation7 + $0x500] sm:$0xff]
    %v1809 = vld [vmem:[#allocation7 + $0x508] sm:$0xff]
    %v1810 = vld [vmem:[#allocation7 + $0x510] sm:$0xff]
    %v1811 = vld [vmem:[#allocation7 + $0x518] sm:$0xff]
    %v1812 = vld [vmem:[#allocation7 + $0x520] sm:$0xff]
    %v1813 = vld [vmem:[#allocation7 + $0x528] sm:$0xff]
    %v1814 = vld [vmem:[#allocation7 + $0x530] sm:$0xff]
    %v1815 = vld [vmem:[#allocation7 + $0x538] sm:$0xff]
    %v1816 = vld [vmem:[#allocation7 + $0x540] sm:$0xff]
    %v1817 = vld [vmem:[#allocation7 + $0x548] sm:$0xff]
    %v1818 = vld [vmem:[#allocation7 + $0x550] sm:$0xff]
    %v1819 = vld [vmem:[#allocation7 + $0x558] sm:$0xff]
    %v1820 = vld [vmem:[#allocation7 + $0x560] sm:$0xff]
    %v1821 = vld [vmem:[#allocation7 + $0x568] sm:$0xff]
    %v1822 = vld [vmem:[#allocation7 + $0x570] sm:$0xff]
    %v1823 = vld [vmem:[#allocation7 + $0x578] sm:$0xff]
    %v1824 = vld [vmem:[#allocation7 + $0x580] sm:$0xff]
    %v1825 = vld [vmem:[#allocation7 + $0x588] sm:$0xff]
    %v1826 = vld [vmem:[#allocation7 + $0x590] sm:$0xff]
    %v1827 = vld [vmem:[#allocation7 + $0x598] sm:$0xff]
    %v1828 = vld [vmem:[#allocation7 + $0x5a0] sm:$0xff]
    %v1829 = vld [vmem:[#allocation7 + $0x5a8] sm:$0xff]
    %v1830 = vld [vmem:[#allocation7 + $0x5b0] sm:$0xff]
    %v1831 = vld [vmem:[#allocation7 + $0x5b8] sm:$0xff]
    %v1832 = vld [vmem:[#allocation7 + $0x5c0] sm:$0xff]
    %v1833 = vld [vmem:[#allocation7 + $0x5c8] sm:$0xff]
    %v1834 = vld [vmem:[#allocation7 + $0x5d0] sm:$0xff]
    %v1835 = vld [vmem:[#allocation7 + $0x5d8] sm:$0xff]
    %v1836 = vld [vmem:[#allocation7 + $0x5e0] sm:$0xff]
    %v1837 = vld [vmem:[#allocation7 + $0x5e8] sm:$0xff]
    %v1838 = vld [vmem:[#allocation7 + $0x5f0] sm:$0xff]
    %v1839 = vld [vmem:[#allocation7 + $0x5f8] sm:$0xff]
    %v1840 = vld [vmem:[#allocation7 + $0x600] sm:$0xff]
    %v1841 = vld [vmem:[#allocation7 + $0x608] sm:$0xff]
    %v1842 = vld [vmem:[#allocation7 + $0x610] sm:$0xff]
    %v1843 = vld [vmem:[#allocation7 + $0x618] sm:$0xff]
    %v1844 = vld [vmem:[#allocation7 + $0x620] sm:$0xff]
    %v1845 = vld [vmem:[#allocation7 + $0x628] sm:$0xff]
    %v1846 = vld [vmem:[#allocation7 + $0x630] sm:$0xff]
    %v1847 = vld [vmem:[#allocation7 + $0x638] sm:$0xff]
    %v1848 = vld [vmem:[#allocation7 + $0x640] sm:$0xff]
    %v1849 = vld [vmem:[#allocation7 + $0x648] sm:$0xff]
    %v1850 = vld [vmem:[#allocation7 + $0x650] sm:$0xff]
    %v1851 = vld [vmem:[#allocation7 + $0x658] sm:$0xff]
    %v1852 = vld [vmem:[#allocation7 + $0x660] sm:$0xff]
    %v1853 = vld [vmem:[#allocation7 + $0x668] sm:$0xff]
    %v1854 = vld [vmem:[#allocation7 + $0x670] sm:$0xff]
    %v1855 = vld [vmem:[#allocation7 + $0x678] sm:$0xff]
    %v1856 = vld [vmem:[#allocation7 + $0x680] sm:$0xff]
    %v1857 = vld [vmem:[#allocation7 + $0x688] sm:$0xff]
    %v1858 = vld [vmem:[#allocation7 + $0x690] sm:$0xff]
    %v1859 = vld [vmem:[#allocation7 + $0x698] sm:$0xff]
    %v1860 = vld [vmem:[#allocation7 + $0x6a0] sm:$0xff]
    %v1861 = vld [vmem:[#allocation7 + $0x6a8] sm:$0xff]
    %v1862 = vld [vmem:[#allocation7 + $0x6b0] sm:$0xff]
    %v1863 = vld [vmem:[#allocation7 + $0x6b8] sm:$0xff]
    %v1864 = vld [vmem:[#allocation7 + $0x6c0] sm:$0xff]
    %v1865 = vld [vmem:[#allocation7 + $0x6c8] sm:$0xff]
    %v1866 = vld [vmem:[#allocation7 + $0x6d0] sm:$0xff]
    %v1867 = vld [vmem:[#allocation7 + $0x6d8] sm:$0xff]
    %v1868 = vld [vmem:[#allocation7 + $0x6e0] sm:$0xff]
    %v1869 = vld [vmem:[#allocation7 + $0x6e8] sm:$0xff]
    %v1870 = vld [vmem:[#allocation7 + $0x6f0] sm:$0xff]
    %v1871 = vld [vmem:[#allocation7 + $0x6f8] sm:$0xff]
    %v1872 = vld [vmem:[#allocation7 + $0x700] sm:$0xff]
    %v1873 = vld [vmem:[#allocation7 + $0x708] sm:$0xff]
    %v1874 = vld [vmem:[#allocation7 + $0x710] sm:$0xff]
    %v1875 = vld [vmem:[#allocation7 + $0x718] sm:$0xff]
    %v1876 = vld [vmem:[#allocation7 + $0x720] sm:$0xff]
    %v1877 = vld [vmem:[#allocation7 + $0x728] sm:$0xff]
    %v1878 = vld [vmem:[#allocation7 + $0x730] sm:$0xff]
    %v1879 = vld [vmem:[#allocation7 + $0x738] sm:$0xff]
    %v1880 = vld [vmem:[#allocation7 + $0x740] sm:$0xff]
    %v1881 = vld [vmem:[#allocation7 + $0x748] sm:$0xff]
    %v1882 = vld [vmem:[#allocation7 + $0x750] sm:$0xff]
    %v1883 = vld [vmem:[#allocation7 + $0x758] sm:$0xff]
    %v1884 = vld [vmem:[#allocation7 + $0x760] sm:$0xff]
    %v1885 = vld [vmem:[#allocation7 + $0x768] sm:$0xff]
    %v1886 = vld [vmem:[#allocation7 + $0x770] sm:$0xff]
    %v1887 = vld [vmem:[#allocation7 + $0x778] sm:$0xff]
    %v1888 = vld [vmem:[#allocation7 + $0x780] sm:$0xff]
    %v1889 = vld [vmem:[#allocation7 + $0x788] sm:$0xff]
    %v1890 = vld [vmem:[#allocation7 + $0x790] sm:$0xff]
    %v1891 = vld [vmem:[#allocation7 + $0x798] sm:$0xff]
    %v1892 = vld [vmem:[#allocation7 + $0x7a0] sm:$0xff]
    %v1893 = vld [vmem:[#allocation7 + $0x7a8] sm:$0xff]
    %v1894 = vld [vmem:[#allocation7 + $0x7b0] sm:$0xff]
    %v1895 = vld [vmem:[#allocation7 + $0x7b8] sm:$0xff]
    %v1896 = vld [vmem:[#allocation7 + $0x7c0] sm:$0xff]
    %v1897 = vld [vmem:[#allocation7 + $0x7c8] sm:$0xff]
    %v1898 = vld [vmem:[#allocation7 + $0x7d0] sm:$0xff]
    %v1899 = vld [vmem:[#allocation7 + $0x7d8] sm:$0xff]
    %v1900 = vld [vmem:[#allocation7 + $0x7e0] sm:$0xff]
    %v1901 = vld [vmem:[#allocation7 + $0x7e8] sm:$0xff]
    %v1902 = vld [vmem:[#allocation7 + $0x7f0] sm:$0xff]
    %v1903 = vld [vmem:[#allocation7 + $0x7f8] sm:$0xff]
    %v1904 = vlaneseq
    %v1905 = vand.u32 %v1904, 127
    %v1906 = vadd.s32 %v1905, 128
    %v1907 = vadd.s32 %v1905, 256
    %v1908 = vadd.s32 %v1905, 384
    %v1909 = vadd.s32 %v1905, 512
    %v1910 = vadd.s32 %v1905, 640
    %v1911 = vadd.s32 %v1905, 768
    %v1912 = vadd.s32 %v1905, 896
    %vm1913 = vcmp.lt.s32.totalorder %v1905, 0
    %v1914 = vsub.s32 0, %v1905
    %v1915 = vsel %vm1913, %v1914, %v1905
    %v1916 = vshrl.u32 %v1915, 8
    %v1917 = vand.u32 %v1915, 255
    %v1918 = vsub.s32 0, %v1917
    %v1919 = vsel %vm1913, %v1918, %v1917
    %vm1920 = vcmp.lt.s32.totalorder %v1906, 0
    %v1921 = vsub.s32 0, %v1906
    %v1922 = vsel %vm1920, %v1921, %v1906
    %v1923 = vshrl.u32 %v1922, 8
    %v1924 = vand.u32 %v1922, 255
    %v1925 = vsub.s32 0, %v1924
    %v1926 = vsel %vm1920, %v1925, %v1924
    %vm1927 = vcmp.lt.s32.totalorder %v1907, 0
    %v1928 = vsub.s32 0, %v1907
    %v1929 = vsel %vm1927, %v1928, %v1907
    %v1930 = vshrl.u32 %v1929, 8
    %v1931 = vand.u32 %v1929, 255
    %v1932 = vsub.s32 0, %v1931
    %v1933 = vsel %vm1927, %v1932, %v1931
    %vm1934 = vcmp.lt.s32.totalorder %v1908, 0
    %v1935 = vsub.s32 0, %v1908
    %v1936 = vsel %vm1934, %v1935, %v1908
    %v1937 = vshrl.u32 %v1936, 8
    %v1938 = vand.u32 %v1936, 255
    %v1939 = vsub.s32 0, %v1938
    %v1940 = vsel %vm1934, %v1939, %v1938
    %vm1941 = vcmp.lt.s32.totalorder %v1909, 0
    %v1942 = vsub.s32 0, %v1909
    %v1943 = vsel %vm1941, %v1942, %v1909
    %v1944 = vshrl.u32 %v1943, 8
    %v1945 = vand.u32 %v1943, 255
    %v1946 = vsub.s32 0, %v1945
    %v1947 = vsel %vm1941, %v1946, %v1945
    %vm1948 = vcmp.lt.s32.totalorder %v1910, 0
    %v1949 = vsub.s32 0, %v1910
    %v1950 = vsel %vm1948, %v1949, %v1910
    %v1951 = vshrl.u32 %v1950, 8
    %v1952 = vand.u32 %v1950, 255
    %v1953 = vsub.s32 0, %v1952
    %v1954 = vsel %vm1948, %v1953, %v1952
    %vm1955 = vcmp.lt.s32.totalorder %v1911, 0
    %v1956 = vsub.s32 0, %v1911
    %v1957 = vsel %vm1955, %v1956, %v1911
    %v1958 = vshrl.u32 %v1957, 8
    %v1959 = vand.u32 %v1957, 255
    %v1960 = vsub.s32 0, %v1959
    %v1961 = vsel %vm1955, %v1960, %v1959
    %vm1962 = vcmp.lt.s32.totalorder %v1912, 0
    %v1963 = vsub.s32 0, %v1912
    %v1964 = vsel %vm1962, %v1963, %v1912
    %v1965 = vshrl.u32 %v1964, 8
    %v1966 = vand.u32 %v1964, 255
    %v1967 = vsub.s32 0, %v1966
    %v1968 = vsel %vm1962, %v1967, %v1966
    %vm1969 = vcmp.ne.s32.totalorder %v1919, 0
    %vm1970 = vcmp.ne.s32.totalorder %v1926, 0
    %vm1971 = vcmp.ne.s32.totalorder %v1933, 0
    %vm1972 = vcmp.ne.s32.totalorder %v1940, 0
    %vm1973 = vcmp.ne.s32.totalorder %v1947, 0
    %vm1974 = vcmp.ne.s32.totalorder %v1954, 0
    %vm1975 = vcmp.ne.s32.totalorder %v1961, 0
    %vm1976 = vcmp.ne.s32.totalorder %v1968, 0
    %vm1977 = vcmp.lt.s32.totalorder %v1919, 0
    %vm1978 = vcmp.lt.s32.totalorder %v1926, 0
    %vm1979 = vcmp.lt.s32.totalorder %v1933, 0
    %vm1980 = vcmp.lt.s32.totalorder %v1940, 0
    %vm1981 = vcmp.lt.s32.totalorder %v1947, 0
    %vm1982 = vcmp.lt.s32.totalorder %v1954, 0
    %vm1983 = vcmp.lt.s32.totalorder %v1961, 0
    %vm1984 = vcmp.lt.s32.totalorder %v1968, 0
    %vm1985 = vmand %vm1977, %vm1969
    %vm1986 = vmand %vm1978, %vm1970
    %vm1987 = vmand %vm1979, %vm1971
    %vm1988 = vmand %vm1980, %vm1972
    %vm1989 = vmand %vm1981, %vm1973
    %vm1990 = vmand %vm1982, %vm1974
    %vm1991 = vmand %vm1983, %vm1975
    %vm1992 = vmand %vm1984, %vm1976
    %v1993 = vadd.s32 %v1919, 256
    %v1994 = vadd.s32 %v1926, 256
    %v1995 = vadd.s32 %v1933, 256
    %v1996 = vadd.s32 %v1940, 256
    %v1997 = vadd.s32 %v1947, 256
    %v1998 = vadd.s32 %v1954, 256
    %v1999 = vadd.s32 %v1961, 256
    %v2000 = vadd.s32 %v1968, 256
    %v2001 = vsel %vm1985, %v1993, %v1919
    %v2002 = vsel %vm1986, %v1994, %v1926
    %v2003 = vsel %vm1987, %v1995, %v1933
    %v2004 = vsel %vm1988, %v1996, %v1940
    %v2005 = vsel %vm1989, %v1997, %v1947
    %v2006 = vsel %vm1990, %v1998, %v1954
    %v2007 = vsel %vm1991, %v1999, %v1961
    %v2008 = vsel %vm1992, %v2000, %v1968
    %vm2009 = vcmp.lt.s32.totalorder %v2001, 128
    %vm2010 = vcmp.lt.s32.totalorder %v2002, 128
    %vm2011 = vcmp.lt.s32.totalorder %v2003, 128
    %vm2012 = vcmp.lt.s32.totalorder %v2004, 128
    %vm2013 = vcmp.lt.s32.totalorder %v2005, 128
    %vm2014 = vcmp.lt.s32.totalorder %v2006, 128
    %vm2015 = vcmp.lt.s32.totalorder %v2007, 128
    %vm2016 = vcmp.lt.s32.totalorder %v2008, 128
    %vm2017 = vcmp.lt.s32.totalorder %v1905, 128
    %vm2018 = vcmp.lt.s32.totalorder %v1906, 128
    %v2019 = vsub.s32 %v83, 1
    %2020 = vset.pattern.permute.xlu0 0
    %2021 = vperm.xlu0 %2020, %v2019
    %v2022 = vpop.permute.xlu0 %2021
    %vm2023 = vcmp.eq.s32.totalorder %v2022, 0
    %vm2024 = vcmp.eq.s32.totalorder %v2022, 1
    %vm2025 = vcmp.eq.s32.totalorder %v2022, 2
    %vm2026 = vcmp.eq.s32.totalorder %v2022, 3
    %vm2027 = vcmp.eq.s32.totalorder %v2022, 4
    %vm2028 = vcmp.eq.s32.totalorder %v2022, 5
    %vm2029 = vcmp.eq.s32.totalorder %v2022, 6
    %vm2030 = vcmp.eq.s32.totalorder %v2022, 7
    %vm2031 = vmand %vm2017, %vm2023
    %vm2032 = vmand %vm2018, %vm2023
    %vm2033 = vmand %vm2017, %vm2024
    %vm2034 = vmand %vm2018, %vm2024
    %vm2035 = vmand %vm2017, %vm2025
    %vm2036 = vmand %vm2018, %vm2025
    %vm2037 = vmand %vm2017, %vm2026
    %vm2038 = vmand %vm2018, %vm2026
    %vm2039 = vmand %vm2017, %vm2027
    %vm2040 = vmand %vm2018, %vm2027
    %vm2041 = vmand %vm2017, %vm2028
    %vm2042 = vmand %vm2018, %vm2028
    %vm2043 = vmand %vm2017, %vm2029
    %vm2044 = vmand %vm2018, %vm2029
    %vm2045 = vmand %vm2017, %vm2030
    %vm2046 = vmand %vm2018, %vm2030
    %2047 = vset.pattern.permute.xlu0 0
    %2048 = vperm.xlu0 %2047, %v83
    %v2049 = vpop.permute.xlu0 %2048
    %vm2050 = vcmp.gt.s32.totalorder %v2049, 7
    %vm2051 = vcmp.gt.s32.totalorder %v2049, 6
    %vm2052 = vcmp.gt.s32.totalorder %v2049, 5
    %vm2053 = vcmp.gt.s32.totalorder %v2049, 4
    %vm2054 = vcmp.gt.s32.totalorder %v2049, 3
    %vm2055 = vcmp.gt.s32.totalorder %v2049, 2
    %vm2056 = vcmp.gt.s32.totalorder %v2049, 1
    %vm2057 = vcmp.gt.s32.totalorder %v2049, 0
    %vm2058 = vmor %vm2017, %vm2050
    %vm2059 = vmor %vm2018, %vm2050
    %vm2060 = vmor %vm2017, %vm2051
    %vm2061 = vmor %vm2018, %vm2051
    %vm2062 = vmor %vm2017, %vm2052
    %vm2063 = vmor %vm2018, %vm2052
    %vm2064 = vmor %vm2017, %vm2053
    %vm2065 = vmor %vm2018, %vm2053
    %vm2066 = vmor %vm2017, %vm2054
    %vm2067 = vmor %vm2018, %vm2054
    %vm2068 = vmor %vm2017, %vm2055
    %vm2069 = vmor %vm2018, %vm2055
    %vm2070 = vmor %vm2017, %vm2056
    %vm2071 = vmor %vm2018, %vm2056
    %vm2072 = vmor %vm2017, %vm2057
    %vm2073 = vmor %vm2018, %vm2057
    %v2074 = vsel %vm2009, 1, 0
    %v2075 = vsel %vm2010, 1, 0
    %v2076 = vsel %vm2011, 1, 0
    %v2077 = vsel %vm2012, 1, 0
    %v2078 = vsel %vm2013, 1, 0
    %v2079 = vsel %vm2014, 1, 0
    %v2080 = vsel %vm2015, 1, 0
    %v2081 = vsel %vm2016, 1, 0
    %vm2082 = vcmp.eq.s32.totalorder %v2074, 1
    %vm2083 = vcmp.eq.s32.totalorder %v2075, 1
    %vm2084 = vcmp.eq.s32.totalorder %v2076, 1
    %vm2085 = vcmp.eq.s32.totalorder %v2077, 1
    %vm2086 = vcmp.eq.s32.totalorder %v2078, 1
    %vm2087 = vcmp.eq.s32.totalorder %v2079, 1
    %vm2088 = vcmp.eq.s32.totalorder %v2080, 1
    %vm2089 = vcmp.eq.s32.totalorder %v2081, 1
    %v2090 = vcombine.high %v1536, %v1536
    %v2092 = vunpack.c.l.s4 1983009808
    %v2093 = vunpack.c.0.s8 %v2092
    %v2094 = vlaneseq
    %v2095 = vshrl.u32 %v2094, 7
    %v2096 = vsub.s32 %v2093, %v2095
    %v2097 = vrot.slane %v1536, %v2096
    %v2099 = vunpack.c.l.s4 1983009808
    %v2100 = vunpack.c.0.s8 %v2099
    %v2101 = vlaneseq
    %v2102 = vshrl.u32 %v2101, 7
    %v2103 = vsub.s32 %v2100, %v2102
    %v2104 = vrot.slane %v2090, %v2103
    %v2105 = vcombine.high %v2097, %v2097
    %v2106 = vcombine.high %v2104, %v2104
    %v2107 = vcombine.high %v1572, %v1572
    %v2109 = vunpack.c.l.s4 1983009808
    %v2110 = vunpack.c.0.s8 %v2109
    %v2111 = vlaneseq
    %v2112 = vshrl.u32 %v2111, 7
    %v2113 = vsub.s32 %v2110, %v2112
    %v2114 = vrot.slane %v1572, %v2113
    %v2116 = vunpack.c.l.s4 1983009808
    %v2117 = vunpack.c.0.s8 %v2116
    %v2118 = vlaneseq
    %v2119 = vshrl.u32 %v2118, 7
    %v2120 = vsub.s32 %v2117, %v2119
    %v2121 = vrot.slane %v2107, %v2120
    %v2122 = vcombine.high %v2114, %v2114
    %v2123 = vcombine.high %v2121, %v2121
    %v2132 = vcombine.high %v1611, %v1611
    %v2134 = vunpack.c.l.s4 1983009808
    %v2135 = vunpack.c.0.s8 %v2134
    %v2136 = vlaneseq
    %v2137 = vshrl.u32 %v2136, 7
    %v2138 = vsub.s32 %v2135, %v2137
    %v2139 = vrot.slane %v1611, %v2138
    %v2141 = vunpack.c.l.s4 1983009808
    %v2142 = vunpack.c.0.s8 %v2141
    %v2143 = vlaneseq
    %v2144 = vshrl.u32 %v2143, 7
    %v2145 = vsub.s32 %v2142, %v2144
    %v2146 = vrot.slane %v2132, %v2145
    %v2147 = vcombine.high %v2139, %v2139
    %v2148 = vcombine.high %v2146, %v2146
    %v2149 = vcombine.high %v1647, %v1647
    %v2151 = vunpack.c.l.s4 1983009808
    %v2152 = vunpack.c.0.s8 %v2151
    %v2153 = vlaneseq
    %v2154 = vshrl.u32 %v2153, 7
    %v2155 = vsub.s32 %v2152, %v2154
    %v2156 = vrot.slane %v1647, %v2155
    %v2158 = vunpack.c.l.s4 1983009808
    %v2159 = vunpack.c.0.s8 %v2158
    %v2160 = vlaneseq
    %v2161 = vshrl.u32 %v2160, 7
    %v2162 = vsub.s32 %v2159, %v2161
    %v2163 = vrot.slane %v2149, %v2162
    %v2164 = vcombine.high %v2156, %v2156
    %v2165 = vcombine.high %v2163, %v2163
    %v2174 = vsel %vm2082, %v2097, %v2139
    %v2175 = vsel %vm2083, %v2105, %v2147
    %v2176 = vsel %vm2084, %v2104, %v2146
    %v2177 = vsel %vm2085, %v2106, %v2148
    %v2178 = vsel %vm2086, %v2114, %v2156
    %v2179 = vsel %vm2087, %v2122, %v2164
    %v2180 = vsel %vm2088, %v2121, %v2163
    %v2181 = vsel %vm2089, %v2123, %v2165
    %v2182 = vxor.u32 %v2174, 2147483648
    %v2183 = vxor.u32 %v2175, 2147483648
    %v2184 = vmul.f32 %v2182, 1.442695
    %v2185 = vpow.pop %v2184
    %v2186 = vmul.f32 %v2183, 1.442695
    %v2187 = vpow.pop %v2186
    %v2188 = vadd.f32 %v2185, 1.0
    %v2189 = vadd.f32 %v2187, 1.0
    %v2190 = vrcp.pop %v2188
    %v2191 = vmul.f32 1.0, %v2190
    %v2192 = vrcp.pop %v2189
    %v2193 = vmul.f32 1.0, %v2192
    %v2194 = vxor.u32 %v2176, 2147483648
    %v2195 = vxor.u32 %v2177, 2147483648
    %v2196 = vmul.f32 %v2194, 1.442695
    %v2197 = vpow.pop %v2196
    %v2198 = vmul.f32 %v2195, 1.442695
    %v2199 = vpow.pop %v2198
    %v2200 = vadd.f32 %v2197, 1.0
    %v2201 = vadd.f32 %v2199, 1.0
    %v2202 = vrcp.pop %v2200
    %v2203 = vmul.f32 1.0, %v2202
    %v2204 = vrcp.pop %v2201
    %v2205 = vmul.f32 1.0, %v2204
    %v2206 = vtanh.pop %v2178
    %v2207 = vtanh.pop %v2179
    %v2208 = vxor.u32 %v2180, 2147483648
    %v2209 = vxor.u32 %v2181, 2147483648
    %v2210 = vmul.f32 %v2208, 1.442695
    %v2211 = vpow.pop %v2210
    %v2212 = vmul.f32 %v2209, 1.442695
    %v2213 = vpow.pop %v2212
    %v2214 = vadd.f32 %v2211, 1.0
    %v2215 = vadd.f32 %v2213, 1.0
    %v2216 = vrcp.pop %v2214
    %v2217 = vmul.f32 1.0, %v2216
    %v2218 = vrcp.pop %v2215
    %v2219 = vmul.f32 1.0, %v2218
    %v2220 = vmul.f32 %v2203, 0.0
    %v2221 = vmul.f32 %v2205, 0.0
    %v2222 = vmul.f32 %v2191, %v2206
    %v2223 = vmul.f32 %v2193, %v2207
    %v2224 = vadd.f32 %v2220, %v2222
    %v2225 = vadd.f32 %v2221, %v2223
    %v2226 = vtanh.pop %v2224
    %v2227 = vtanh.pop %v2225
    %v2228 = vmul.f32 %v2217, %v2226
    %v2229 = vmul.f32 %v2219, %v2227
    %v2230 = vsel %vm2031, %v2228, 0.0
    %v2231 = vsel %vm2032, %v2229, 0.0
    %v2232 = vsel %vm2058, %v2228, 0.0
    %v2233 = vsel %vm2059, %v2229, 0.0
    %v2234 = vsel %vm2058, %v2224, 0.0
    %v2235 = vsel %vm2059, %v2225, 0.0
    %v2236 = vcombine.high %v1537, %v1537
    %v2238 = vunpack.c.l.s4 1983009808
    %v2239 = vunpack.c.0.s8 %v2238
    %v2240 = vlaneseq
    %v2241 = vshrl.u32 %v2240, 7
    %v2242 = vsub.s32 %v2239, %v2241
    %v2243 = vrot.slane %v1537, %v2242
    %v2245 = vunpack.c.l.s4 1983009808
    %v2246 = vunpack.c.0.s8 %v2245
    %v2247 = vlaneseq
    %v2248 = vshrl.u32 %v2247, 7
    %v2249 = vsub.s32 %v2246, %v2248
    %v2250 = vrot.slane %v2236, %v2249
    %v2251 = vcombine.high %v2243, %v2243
    %v2252 = vcombine.high %v2250, %v2250
    %v2253 = vcombine.high %v1573, %v1573
    %v2255 = vunpack.c.l.s4 1983009808
    %v2256 = vunpack.c.0.s8 %v2255
    %v2257 = vlaneseq
    %v2258 = vshrl.u32 %v2257, 7
    %v2259 = vsub.s32 %v2256, %v2258
    %v2260 = vrot.slane %v1573, %v2259
    %v2262 = vunpack.c.l.s4 1983009808
    %v2263 = vunpack.c.0.s8 %v2262
    %v2264 = vlaneseq
    %v2265 = vshrl.u32 %v2264, 7
    %v2266 = vsub.s32 %v2263, %v2265
    %v2267 = vrot.slane %v2253, %v2266
    %v2268 = vcombine.high %v2260, %v2260
    %v2269 = vcombine.high %v2267, %v2267
    %v2278 = vcombine.high %v1610, %v1610
    %v2280 = vunpack.c.l.s4 1983009808
    %v2281 = vunpack.c.0.s8 %v2280
    %v2282 = vlaneseq
    %v2283 = vshrl.u32 %v2282, 7
    %v2284 = vsub.s32 %v2281, %v2283
    %v2285 = vrot.slane %v1610, %v2284
    %v2287 = vunpack.c.l.s4 1983009808
    %v2288 = vunpack.c.0.s8 %v2287
    %v2289 = vlaneseq
    %v2290 = vshrl.u32 %v2289, 7
    %v2291 = vsub.s32 %v2288, %v2290
    %v2292 = vrot.slane %v2278, %v2291
    %v2293 = vcombine.high %v2285, %v2285
    %v2294 = vcombine.high %v2292, %v2292
    %v2295 = vcombine.high %v1646, %v1646
    %v2297 = vunpack.c.l.s4 1983009808
    %v2298 = vunpack.c.0.s8 %v2297
    %v2299 = vlaneseq
    %v2300 = vshrl.u32 %v2299, 7
    %v2301 = vsub.s32 %v2298, %v2300
    %v2302 = vrot.slane %v1646, %v2301
    %v2304 = vunpack.c.l.s4 1983009808
    %v2305 = vunpack.c.0.s8 %v2304
    %v2306 = vlaneseq
    %v2307 = vshrl.u32 %v2306, 7
    %v2308 = vsub.s32 %v2305, %v2307
    %v2309 = vrot.slane %v2295, %v2308
    %v2310 = vcombine.high %v2302, %v2302
    %v2311 = vcombine.high %v2309, %v2309
    %v2320 = vsel %vm2082, %v2243, %v2285
    %v2321 = vsel %vm2083, %v2251, %v2293
    %v2322 = vsel %vm2084, %v2250, %v2292
    %v2323 = vsel %vm2085, %v2252, %v2294
    %v2324 = vsel %vm2086, %v2260, %v2302
    %v2325 = vsel %vm2087, %v2268, %v2310
    %v2326 = vsel %vm2088, %v2267, %v2309
    %v2327 = vsel %vm2089, %v2269, %v2311
    %2328 = vmatprep.subr.mxu0 %v1769
    %2329 = vmatpush1.msra.mxu0 %v1768
    %2330 = vmatprep.subr.mxu0 %v1761
    %2331 = vmatpush1.msra.mxu0 %v1760
    %2332 = vmatprep.subr.mxu0 %v1753
    %2333 = vmatpush1.msra.mxu0 %v1752
    %2334 = vmatprep.subr.mxu0 %v1745
    %2335 = vmatpush1.msra.mxu0 %v1744
    %2336 = vmatprep.subr.mxu0 %v1737
    %2337 = vmatpush1.msra.mxu0 %v1736
    %2338 = vmatprep.subr.mxu0 %v1729
    %2339 = vmatpush1.msra.mxu0 %v1728
    %2340 = vmatprep.subr.mxu0 %v1721
    %2341 = vmatpush1.msra.mxu0 %v1720
    %2342 = vmatprep.subr.mxu0 %v1713
    %2343 = vmatpush1.msra.mxu0 %v1712
    %2344 = vmatprep.subr.mxu0 %v1705
    %2345 = vmatpush1.msra.mxu0 %v1704
    %2346 = vmatprep.subr.mxu0 %v1697
    %2347 = vmatpush1.msra.mxu0 %v1696
    %2348 = vmatprep.subr.mxu0 %v1689
    %2349 = vmatpush1.msra.mxu0 %v1688
    %2350 = vmatprep.subr.mxu0 %v1681
    %2351 = vmatpush1.msra.mxu0 %v1680
    %2352 = vmatprep.subr.mxu0 %v1673
    %2353 = vmatpush1.msra.mxu0 %v1672
    %2354 = vmatprep.subr.mxu0 %v1665
    %2355 = vmatpush1.msra.mxu0 %v1664
    %2356 = vmatprep.subr.mxu0 %v1657
    %2357 = vmatpush1.msra.mxu0 %v1656
    %2358 = vmatprep.subr.mxu0 %v1649
    %2359 = vmatpush1.msra.mxu0 %v1648
    %2360 = vmatprep.subr.mxu0 %v1897
    %2361 = vmatpush2.msra.mxu0 %v1896
    %2362 = vmatprep.subr.mxu0 %v1889
    %2363 = vmatpush2.msra.mxu0 %v1888
    %2364 = vmatprep.subr.mxu0 %v1881
    %2365 = vmatpush2.msra.mxu0 %v1880
    %2366 = vmatprep.subr.mxu0 %v1873
    %2367 = vmatpush2.msra.mxu0 %v1872
    %2368 = vmatprep.subr.mxu0 %v1865
    %2369 = vmatpush2.msra.mxu0 %v1864
    %2370 = vmatprep.subr.mxu0 %v1857
    %2371 = vmatpush2.msra.mxu0 %v1856
    %2372 = vmatprep.subr.mxu0 %v1849
    %2373 = vmatpush2.msra.mxu0 %v1848
    %2374 = vmatprep.subr.mxu0 %v1841
    %2375 = vmatpush2.msra.mxu0 %v1840
    %2376 = vmatprep.subr.mxu0 %v1833
    %2377 = vmatpush2.msra.mxu0 %v1832
    %2378 = vmatprep.subr.mxu0 %v1825
    %2379 = vmatpush2.msra.mxu0 %v1824
    %2380 = vmatprep.subr.mxu0 %v1817
    %2381 = vmatpush2.msra.mxu0 %v1816
    %2382 = vmatprep.subr.mxu0 %v1809
    %2383 = vmatpush2.msra.mxu0 %v1808
    %2384 = vmatprep.subr.mxu0 %v1801
    %2385 = vmatpush2.msra.mxu0 %v1800
    %2386 = vmatprep.subr.mxu0 %v1793
    %2387 = vmatpush2.msra.mxu0 %v1792
    %2388 = vmatprep.subr.mxu0 %v1785
    %2389 = vmatpush2.msra.mxu0 %v1784
    %2390 = vmatprep.subr.mxu0 %v1777
    %2391 = vmatpush2.msra.mxu0 %v1776
    %2392 = vmatprep.mubr.f32.mxu0 %v2233
    %2393 = vmatmul.mubr.f32.gmra.mxu0 %v2232
    %v2394 = vpop.f32.mrf.mxu0
    %v2395 = vadd.f32 0.0, %v2394
    %v2396 = vpop.f32.mrf.mxu0
    %v2397 = vadd.f32 0.0, %v2396
    %2398 = vdwg.mxu0
    %2399 = vmatprep.subr.mxu0 %v1771
    %2400 = vmatpush1.msra.mxu0 %v1770
    %2401 = vmatprep.subr.mxu0 %v1763
    %2402 = vmatpush1.msra.mxu0 %v1762
    %2403 = vmatprep.subr.mxu0 %v1755
    %2404 = vmatpush1.msra.mxu0 %v1754
    %2405 = vmatprep.subr.mxu0 %v1747
    %2406 = vmatpush1.msra.mxu0 %v1746
    %2407 = vmatprep.subr.mxu0 %v1739
    %2408 = vmatpush1.msra.mxu0 %v1738
    %2409 = vmatprep.subr.mxu0 %v1731
    %2410 = vmatpush1.msra.mxu0 %v1730
    %2411 = vmatprep.subr.mxu0 %v1723
    %2412 = vmatpush1.msra.mxu0 %v1722
    %2413 = vmatprep.subr.mxu0 %v1715
    %2414 = vmatpush1.msra.mxu0 %v1714
    %2415 = vmatprep.subr.mxu0 %v1707
    %2416 = vmatpush1.msra.mxu0 %v1706
    %2417 = vmatprep.subr.mxu0 %v1699
    %2418 = vmatpush1.msra.mxu0 %v1698
    %2419 = vmatprep.subr.mxu0 %v1691
    %2420 = vmatpush1.msra.mxu0 %v1690
    %2421 = vmatprep.subr.mxu0 %v1683
    %2422 = vmatpush1.msra.mxu0 %v1682
    %2423 = vmatprep.subr.mxu0 %v1675
    %2424 = vmatpush1.msra.mxu0 %v1674
    %2425 = vmatprep.subr.mxu0 %v1667
    %2426 = vmatpush1.msra.mxu0 %v1666
    %2427 = vmatprep.subr.mxu0 %v1659
    %2428 = vmatpush1.msra.mxu0 %v1658
    %2429 = vmatprep.subr.mxu0 %v1651
    %2430 = vmatpush1.msra.mxu0 %v1650
    %2431 = vmatprep.subr.mxu0 %v1899
    %2432 = vmatpush2.msra.mxu0 %v1898
    %2433 = vmatprep.subr.mxu0 %v1891
    %2434 = vmatpush2.msra.mxu0 %v1890
    %2435 = vmatprep.subr.mxu0 %v1883
    %2436 = vmatpush2.msra.mxu0 %v1882
    %2437 = vmatprep.subr.mxu0 %v1875
    %2438 = vmatpush2.msra.mxu0 %v1874
    %2439 = vmatprep.subr.mxu0 %v1867
    %2440 = vmatpush2.msra.mxu0 %v1866
    %2441 = vmatprep.subr.mxu0 %v1859
    %2442 = vmatpush2.msra.mxu0 %v1858
    %2443 = vmatprep.subr.mxu0 %v1851
    %2444 = vmatpush2.msra.mxu0 %v1850
    %2445 = vmatprep.subr.mxu0 %v1843
    %2446 = vmatpush2.msra.mxu0 %v1842
    %2447 = vmatprep.subr.mxu0 %v1835
    %2448 = vmatpush2.msra.mxu0 %v1834
    %2449 = vmatprep.subr.mxu0 %v1827
    %2450 = vmatpush2.msra.mxu0 %v1826
    %2451 = vmatprep.subr.mxu0 %v1819
    %2452 = vmatpush2.msra.mxu0 %v1818
    %2453 = vmatprep.subr.mxu0 %v1811
    %2454 = vmatpush2.msra.mxu0 %v1810
    %2455 = vmatprep.subr.mxu0 %v1803
    %2456 = vmatpush2.msra.mxu0 %v1802
    %2457 = vmatprep.subr.mxu0 %v1795
    %2458 = vmatpush2.msra.mxu0 %v1794
    %2459 = vmatprep.subr.mxu0 %v1787
    %2460 = vmatpush2.msra.mxu0 %v1786
    %2461 = vmatprep.subr.mxu0 %v1779
    %2462 = vmatpush2.msra.mxu0 %v1778
    %2463 = vmatprep.mubr.f32.mxu0 %v2233
    %2464 = vmatmul.mubr.f32.gmra.mxu0 %v2232
    %v2465 = vpop.f32.mrf.mxu0
    %v2466 = vadd.f32 0.0, %v2465
    %v2467 = vpop.f32.mrf.mxu0
    %v2468 = vadd.f32 0.0, %v2467
    %2469 = vdwg.mxu0
    %2470 = vmatprep.subr.mxu0 %v1773
    %2471 = vmatpush1.msra.mxu0 %v1772
    %2472 = vmatprep.subr.mxu0 %v1765
    %2473 = vmatpush1.msra.mxu0 %v1764
    %2474 = vmatprep.subr.mxu0 %v1757
    %2475 = vmatpush1.msra.mxu0 %v1756
    %2476 = vmatprep.subr.mxu0 %v1749
    %2477 = vmatpush1.msra.mxu0 %v1748
    %2478 = vmatprep.subr.mxu0 %v1741
    %2479 = vmatpush1.msra.mxu0 %v1740
    %2480 = vmatprep.subr.mxu0 %v1733
    %2481 = vmatpush1.msra.mxu0 %v1732
    %2482 = vmatprep.subr.mxu0 %v1725
    %2483 = vmatpush1.msra.mxu0 %v1724
    %2484 = vmatprep.subr.mxu0 %v1717
    %2485 = vmatpush1.msra.mxu0 %v1716
    %2486 = vmatprep.subr.mxu0 %v1709
    %2487 = vmatpush1.msra.mxu0 %v1708
    %2488 = vmatprep.subr.mxu0 %v1701
    %2489 = vmatpush1.msra.mxu0 %v1700
    %2490 = vmatprep.subr.mxu0 %v1693
    %2491 = vmatpush1.msra.mxu0 %v1692
    %2492 = vmatprep.subr.mxu0 %v1685
    %2493 = vmatpush1.msra.mxu0 %v1684
    %2494 = vmatprep.subr.mxu0 %v1677
    %2495 = vmatpush1.msra.mxu0 %v1676
    %2496 = vmatprep.subr.mxu0 %v1669
    %2497 = vmatpush1.msra.mxu0 %v1668
    %2498 = vmatprep.subr.mxu0 %v1661
    %2499 = vmatpush1.msra.mxu0 %v1660
    %2500 = vmatprep.subr.mxu0 %v1653
    %2501 = vmatpush1.msra.mxu0 %v1652
    %2502 = vmatprep.subr.mxu0 %v1901
    %2503 = vmatpush2.msra.mxu0 %v1900
    %2504 = vmatprep.subr.mxu0 %v1893
    %2505 = vmatpush2.msra.mxu0 %v1892
    %2506 = vmatprep.subr.mxu0 %v1885
    %2507 = vmatpush2.msra.mxu0 %v1884
    %2508 = vmatprep.subr.mxu0 %v1877
    %2509 = vmatpush2.msra.mxu0 %v1876
    %2510 = vmatprep.subr.mxu0 %v1869
    %2511 = vmatpush2.msra.mxu0 %v1868
    %2512 = vmatprep.subr.mxu0 %v1861
    %2513 = vmatpush2.msra.mxu0 %v1860
    %2514 = vmatprep.subr.mxu0 %v1853
    %2515 = vmatpush2.msra.mxu0 %v1852
    %2516 = vmatprep.subr.mxu0 %v1845
    %2517 = vmatpush2.msra.mxu0 %v1844
    %2518 = vmatprep.subr.mxu0 %v1837
    %2519 = vmatpush2.msra.mxu0 %v1836
    %2520 = vmatprep.subr.mxu0 %v1829
    %2521 = vmatpush2.msra.mxu0 %v1828
    %2522 = vmatprep.subr.mxu0 %v1821
    %2523 = vmatpush2.msra.mxu0 %v1820
    %2524 = vmatprep.subr.mxu0 %v1813
    %2525 = vmatpush2.msra.mxu0 %v1812
    %2526 = vmatprep.subr.mxu0 %v1805
    %2527 = vmatpush2.msra.mxu0 %v1804
    %2528 = vmatprep.subr.mxu0 %v1797
    %2529 = vmatpush2.msra.mxu0 %v1796
    %2530 = vmatprep.subr.mxu0 %v1789
    %2531 = vmatpush2.msra.mxu0 %v1788
    %2532 = vmatprep.subr.mxu0 %v1781
    %2533 = vmatpush2.msra.mxu0 %v1780
    %2534 = vmatprep.mubr.f32.mxu0 %v2233
    %2535 = vmatmul.mubr.f32.gmra.mxu0 %v2232
    %v2536 = vpop.f32.mrf.mxu0
    %v2537 = vadd.f32 0.0, %v2536
    %v2538 = vpop.f32.mrf.mxu0
    %v2539 = vadd.f32 0.0, %v2538
    %2540 = vdwg.mxu0
    %2541 = vmatprep.subr.mxu0 %v1775
    %2542 = vmatpush1.msra.mxu0 %v1774
    %2543 = vmatprep.subr.mxu0 %v1767
    %2544 = vmatpush1.msra.mxu0 %v1766
    %2545 = vmatprep.subr.mxu0 %v1759
    %2546 = vmatpush1.msra.mxu0 %v1758
    %2547 = vmatprep.subr.mxu0 %v1751
    %2548 = vmatpush1.msra.mxu0 %v1750
    %2549 = vmatprep.subr.mxu0 %v1743
    %2550 = vmatpush1.msra.mxu0 %v1742
    %2551 = vmatprep.subr.mxu0 %v1735
    %2552 = vmatpush1.msra.mxu0 %v1734
    %2553 = vmatprep.subr.mxu0 %v1727
    %2554 = vmatpush1.msra.mxu0 %v1726
    %2555 = vmatprep.subr.mxu0 %v1719
    %2556 = vmatpush1.msra.mxu0 %v1718
    %2557 = vmatprep.subr.mxu0 %v1711
    %2558 = vmatpush1.msra.mxu0 %v1710
    %2559 = vmatprep.subr.mxu0 %v1703
    %2560 = vmatpush1.msra.mxu0 %v1702
    %2561 = vmatprep.subr.mxu0 %v1695
    %2562 = vmatpush1.msra.mxu0 %v1694
    %2563 = vmatprep.subr.mxu0 %v1687
    %2564 = vmatpush1.msra.mxu0 %v1686
    %2565 = vmatprep.subr.mxu0 %v1679
    %2566 = vmatpush1.msra.mxu0 %v1678
    %2567 = vmatprep.subr.mxu0 %v1671
    %2568 = vmatpush1.msra.mxu0 %v1670
    %2569 = vmatprep.subr.mxu0 %v1663
    %2570 = vmatpush1.msra.mxu0 %v1662
    %2571 = vmatprep.subr.mxu0 %v1655
    %2572 = vmatpush1.msra.mxu0 %v1654
    %2573 = vmatprep.subr.mxu0 %v1903
    %2574 = vmatpush2.msra.mxu0 %v1902
    %2575 = vmatprep.subr.mxu0 %v1895
    %2576 = vmatpush2.msra.mxu0 %v1894
    %2577 = vmatprep.subr.mxu0 %v1887
    %2578 = vmatpush2.msra.mxu0 %v1886
    %2579 = vmatprep.subr.mxu0 %v1879
    %2580 = vmatpush2.msra.mxu0 %v1878
    %2581 = vmatprep.subr.mxu0 %v1871
    %2582 = vmatpush2.msra.mxu0 %v1870
    %2583 = vmatprep.subr.mxu0 %v1863
    %2584 = vmatpush2.msra.mxu0 %v1862
    %2585 = vmatprep.subr.mxu0 %v1855
    %2586 = vmatpush2.msra.mxu0 %v1854
    %2587 = vmatprep.subr.mxu0 %v1847
    %2588 = vmatpush2.msra.mxu0 %v1846
    %2589 = vmatprep.subr.mxu0 %v1839
    %2590 = vmatpush2.msra.mxu0 %v1838
    %2591 = vmatprep.subr.mxu0 %v1831
    %2592 = vmatpush2.msra.mxu0 %v1830
    %2593 = vmatprep.subr.mxu0 %v1823
    %2594 = vmatpush2.msra.mxu0 %v1822
    %2595 = vmatprep.subr.mxu0 %v1815
    %2596 = vmatpush2.msra.mxu0 %v1814
    %2597 = vmatprep.subr.mxu0 %v1807
    %2598 = vmatpush2.msra.mxu0 %v1806
    %2599 = vmatprep.subr.mxu0 %v1799
    %2600 = vmatpush2.msra.mxu0 %v1798
    %2601 = vmatprep.subr.mxu0 %v1791
    %2602 = vmatpush2.msra.mxu0 %v1790
    %2603 = vmatprep.subr.mxu0 %v1783
    %2604 = vmatpush2.msra.mxu0 %v1782
    %2605 = vmatprep.mubr.f32.mxu0 %v2233
    %2606 = vmatmul.mubr.f32.gmra.mxu0 %v2232
    %v2607 = vpop.f32.mrf.mxu0
    %v2608 = vadd.f32 0.0, %v2607
    %v2609 = vpop.f32.mrf.mxu0
    %v2610 = vadd.f32 0.0, %v2609
    %2611 = vdwg.mxu0
    %v2612 = vadd.f32 %v2320, %v2395
    %v2613 = vadd.f32 %v2321, %v2397
    %v2614 = vadd.f32 %v2322, %v2466
    %v2615 = vadd.f32 %v2323, %v2468
    %v2616 = vadd.f32 %v2324, %v2537
    %v2617 = vadd.f32 %v2325, %v2539
    %v2618 = vadd.f32 %v2326, %v2608
    %v2619 = vadd.f32 %v2327, %v2610
    %v2620 = vxor.u32 %v2612, 2147483648
    %v2621 = vxor.u32 %v2613, 2147483648
    %v2622 = vmul.f32 %v2620, 1.442695
    %v2623 = vpow.pop %v2622
    %v2624 = vmul.f32 %v2621, 1.442695
    %v2625 = vpow.pop %v2624
    %v2626 = vadd.f32 %v2623, 1.0
    %v2627 = vadd.f32 %v2625, 1.0
    %v2628 = vrcp.pop %v2626
    %v2629 = vmul.f32 1.0, %v2628
    %v2630 = vrcp.pop %v2627
    %v2631 = vmul.f32 1.0, %v2630
    %v2632 = vxor.u32 %v2614, 2147483648
    %v2633 = vxor.u32 %v2615, 2147483648
    %v2634 = vmul.f32 %v2632, 1.442695
    %v2635 = vpow.pop %v2634
    %v2636 = vmul.f32 %v2633, 1.442695
    %v2637 = vpow.pop %v2636
    %v2638 = vadd.f32 %v2635, 1.0
    %v2639 = vadd.f32 %v2637, 1.0
    %v2640 = vrcp.pop %v2638
    %v2641 = vmul.f32 1.0, %v2640
    %v2642 = vrcp.pop %v2639
    %v2643 = vmul.f32 1.0, %v2642
    %v2644 = vtanh.pop %v2616
    %v2645 = vtanh.pop %v2617
    %v2646 = vxor.u32 %v2618, 2147483648
    %v2647 = vxor.u32 %v2619, 2147483648
    %v2648 = vmul.f32 %v2646, 1.442695
    %v2649 = vpow.pop %v2648
    %v2650 = vmul.f32 %v2647, 1.442695
    %v2651 = vpow.pop %v2650
    %v2652 = vadd.f32 %v2649, 1.0
    %v2653 = vadd.f32 %v2651, 1.0
    %v2654 = vrcp.pop %v2652
    %v2655 = vmul.f32 1.0, %v2654
    %v2656 = vrcp.pop %v2653
    %v2657 = vmul.f32 1.0, %v2656
    %v2658 = vmul.f32 %v2641, %v2234
    %v2659 = vmul.f32 %v2643, %v2235
    %v2660 = vmul.f32 %v2629, %v2644
    %v2661 = vmul.f32 %v2631, %v2645
    %v2662 = vadd.f32 %v2658, %v2660
    %v2663 = vadd.f32 %v2659, %v2661
    %v2664 = vtanh.pop %v2662
    %v2665 = vtanh.pop %v2663
    %v2666 = vmul.f32 %v2655, %v2664
    %v2667 = vmul.f32 %v2657, %v2665
    %v2668 = vsel %vm2033, %v2666, %v2230
    %v2669 = vsel %vm2034, %v2667, %v2231
    %v2670 = vsel %vm2060, %v2666, %v2232
    %v2671 = vsel %vm2061, %v2667, %v2233
    %v2672 = vsel %vm2060, %v2662, %v2234
    %v2673 = vsel %vm2061, %v2663, %v2235
    %v2674 = vcombine.high %v1538, %v1538
    %v2676 = vunpack.c.l.s4 1983009808
    %v2677 = vunpack.c.0.s8 %v2676
    %v2678 = vlaneseq
    %v2679 = vshrl.u32 %v2678, 7
    %v2680 = vsub.s32 %v2677, %v2679
    %v2681 = vrot.slane %v1538, %v2680
    %v2683 = vunpack.c.l.s4 1983009808
    %v2684 = vunpack.c.0.s8 %v2683
    %v2685 = vlaneseq
    %v2686 = vshrl.u32 %v2685, 7
    %v2687 = vsub.s32 %v2684, %v2686
    %v2688 = vrot.slane %v2674, %v2687
    %v2689 = vcombine.high %v2681, %v2681
    %v2690 = vcombine.high %v2688, %v2688
    %v2691 = vcombine.high %v1574, %v1574
    %v2693 = vunpack.c.l.s4 1983009808
    %v2694 = vunpack.c.0.s8 %v2693
    %v2695 = vlaneseq
    %v2696 = vshrl.u32 %v2695, 7
    %v2697 = vsub.s32 %v2694, %v2696
    %v2698 = vrot.slane %v1574, %v2697
    %v2700 = vunpack.c.l.s4 1983009808
    %v2701 = vunpack.c.0.s8 %v2700
    %v2702 = vlaneseq
    %v2703 = vshrl.u32 %v2702, 7
    %v2704 = vsub.s32 %v2701, %v2703
    %v2705 = vrot.slane %v2691, %v2704
    %v2706 = vcombine.high %v2698, %v2698
    %v2707 = vcombine.high %v2705, %v2705
    %v2716 = vcombine.high %v1609, %v1609
    %v2718 = vunpack.c.l.s4 1983009808
    %v2719 = vunpack.c.0.s8 %v2718
    %v2720 = vlaneseq
    %v2721 = vshrl.u32 %v2720, 7
    %v2722 = vsub.s32 %v2719, %v2721
    %v2723 = vrot.slane %v1609, %v2722
    %v2725 = vunpack.c.l.s4 1983009808
    %v2726 = vunpack.c.0.s8 %v2725
    %v2727 = vlaneseq
    %v2728 = vshrl.u32 %v2727, 7
    %v2729 = vsub.s32 %v2726, %v2728
    %v2730 = vrot.slane %v2716, %v2729
    %v2731 = vcombine.high %v2723, %v2723
    %v2732 = vcombine.high %v2730, %v2730
    %v2733 = vcombine.high %v1645, %v1645
    %v2735 = vunpack.c.l.s4 1983009808
    %v2736 = vunpack.c.0.s8 %v2735
    %v2737 = vlaneseq
    %v2738 = vshrl.u32 %v2737, 7
    %v2739 = vsub.s32 %v2736, %v2738
    %v2740 = vrot.slane %v1645, %v2739
    %v2742 = vunpack.c.l.s4 1983009808
    %v2743 = vunpack.c.0.s8 %v2742
    %v2744 = vlaneseq
    %v2745 = vshrl.u32 %v2744, 7
    %v2746 = vsub.s32 %v2743, %v2745
    %v2747 = vrot.slane %v2733, %v2746
    %v2748 = vcombine.high %v2740, %v2740
    %v2749 = vcombine.high %v2747, %v2747
    %v2758 = vsel %vm2082, %v2681, %v2723
    %v2759 = vsel %vm2083, %v2689, %v2731
    %v2760 = vsel %vm2084, %v2688, %v2730
    %v2761 = vsel %vm2085, %v2690, %v2732
    %v2762 = vsel %vm2086, %v2698, %v2740
    %v2763 = vsel %vm2087, %v2706, %v2748
    %v2764 = vsel %vm2088, %v2705, %v2747
    %v2765 = vsel %vm2089, %v2707, %v2749
    %2766 = vmatprep.subr.mxu0 %v1769
    %2767 = vmatpush1.msra.mxu0 %v1768
    %2768 = vmatprep.subr.mxu0 %v1761
    %2769 = vmatpush1.msra.mxu0 %v1760
    %2770 = vmatprep.subr.mxu0 %v1753
    %2771 = vmatpush1.msra.mxu0 %v1752
    %2772 = vmatprep.subr.mxu0 %v1745
    %2773 = vmatpush1.msra.mxu0 %v1744
    %2774 = vmatprep.subr.mxu0 %v1737
    %2775 = vmatpush1.msra.mxu0 %v1736
    %2776 = vmatprep.subr.mxu0 %v1729
    %2777 = vmatpush1.msra.mxu0 %v1728
    %2778 = vmatprep.subr.mxu0 %v1721
    %2779 = vmatpush1.msra.mxu0 %v1720
    %2780 = vmatprep.subr.mxu0 %v1713
    %2781 = vmatpush1.msra.mxu0 %v1712
    %2782 = vmatprep.subr.mxu0 %v1705
    %2783 = vmatpush1.msra.mxu0 %v1704
    %2784 = vmatprep.subr.mxu0 %v1697
    %2785 = vmatpush1.msra.mxu0 %v1696
    %2786 = vmatprep.subr.mxu0 %v1689
    %2787 = vmatpush1.msra.mxu0 %v1688
    %2788 = vmatprep.subr.mxu0 %v1681
    %2789 = vmatpush1.msra.mxu0 %v1680
    %2790 = vmatprep.subr.mxu0 %v1673
    %2791 = vmatpush1.msra.mxu0 %v1672
    %2792 = vmatprep.subr.mxu0 %v1665
    %2793 = vmatpush1.msra.mxu0 %v1664
    %2794 = vmatprep.subr.mxu0 %v1657
    %2795 = vmatpush1.msra.mxu0 %v1656
    %2796 = vmatprep.subr.mxu0 %v1649
    %2797 = vmatpush1.msra.mxu0 %v1648
    %2798 = vmatprep.subr.mxu0 %v1897
    %2799 = vmatpush2.msra.mxu0 %v1896
    %2800 = vmatprep.subr.mxu0 %v1889
    %2801 = vmatpush2.msra.mxu0 %v1888
    %2802 = vmatprep.subr.mxu0 %v1881
    %2803 = vmatpush2.msra.mxu0 %v1880
    %2804 = vmatprep.subr.mxu0 %v1873
    %2805 = vmatpush2.msra.mxu0 %v1872
    %2806 = vmatprep.subr.mxu0 %v1865
    %2807 = vmatpush2.msra.mxu0 %v1864
    %2808 = vmatprep.subr.mxu0 %v1857
    %2809 = vmatpush2.msra.mxu0 %v1856
    %2810 = vmatprep.subr.mxu0 %v1849
    %2811 = vmatpush2.msra.mxu0 %v1848
    %2812 = vmatprep.subr.mxu0 %v1841
    %2813 = vmatpush2.msra.mxu0 %v1840
    %2814 = vmatprep.subr.mxu0 %v1833
    %2815 = vmatpush2.msra.mxu0 %v1832
    %2816 = vmatprep.subr.mxu0 %v1825
    %2817 = vmatpush2.msra.mxu0 %v1824
    %2818 = vmatprep.subr.mxu0 %v1817
    %2819 = vmatpush2.msra.mxu0 %v1816
    %2820 = vmatprep.subr.mxu0 %v1809
    %2821 = vmatpush2.msra.mxu0 %v1808
    %2822 = vmatprep.subr.mxu0 %v1801
    %2823 = vmatpush2.msra.mxu0 %v1800
    %2824 = vmatprep.subr.mxu0 %v1793
    %2825 = vmatpush2.msra.mxu0 %v1792
    %2826 = vmatprep.subr.mxu0 %v1785
    %2827 = vmatpush2.msra.mxu0 %v1784
    %2828 = vmatprep.subr.mxu0 %v1777
    %2829 = vmatpush2.msra.mxu0 %v1776
    %2830 = vmatprep.mubr.f32.mxu0 %v2671
    %2831 = vmatmul.mubr.f32.gmra.mxu0 %v2670
    %v2832 = vpop.f32.mrf.mxu0
    %v2833 = vadd.f32 0.0, %v2832
    %v2834 = vpop.f32.mrf.mxu0
    %v2835 = vadd.f32 0.0, %v2834
    %2836 = vdwg.mxu0
    %2837 = vmatprep.subr.mxu0 %v1771
    %2838 = vmatpush1.msra.mxu0 %v1770
    %2839 = vmatprep.subr.mxu0 %v1763
    %2840 = vmatpush1.msra.mxu0 %v1762
    %2841 = vmatprep.subr.mxu0 %v1755
    %2842 = vmatpush1.msra.mxu0 %v1754
    %2843 = vmatprep.subr.mxu0 %v1747
    %2844 = vmatpush1.msra.mxu0 %v1746
    %2845 = vmatprep.subr.mxu0 %v1739
    %2846 = vmatpush1.msra.mxu0 %v1738
    %2847 = vmatprep.subr.mxu0 %v1731
    %2848 = vmatpush1.msra.mxu0 %v1730
    %2849 = vmatprep.subr.mxu0 %v1723
    %2850 = vmatpush1.msra.mxu0 %v1722
    %2851 = vmatprep.subr.mxu0 %v1715
    %2852 = vmatpush1.msra.mxu0 %v1714
    %2853 = vmatprep.subr.mxu0 %v1707
    %2854 = vmatpush1.msra.mxu0 %v1706
    %2855 = vmatprep.subr.mxu0 %v1699
    %2856 = vmatpush1.msra.mxu0 %v1698
    %2857 = vmatprep.subr.mxu0 %v1691
    %2858 = vmatpush1.msra.mxu0 %v1690
    %2859 = vmatprep.subr.mxu0 %v1683
    %2860 = vmatpush1.msra.mxu0 %v1682
    %2861 = vmatprep.subr.mxu0 %v1675
    %2862 = vmatpush1.msra.mxu0 %v1674
    %2863 = vmatprep.subr.mxu0 %v1667
    %2864 = vmatpush1.msra.mxu0 %v1666
    %2865 = vmatprep.subr.mxu0 %v1659
    %2866 = vmatpush1.msra.mxu0 %v1658
    %2867 = vmatprep.subr.mxu0 %v1651
    %2868 = vmatpush1.msra.mxu0 %v1650
    %2869 = vmatprep.subr.mxu0 %v1899
    %2870 = vmatpush2.msra.mxu0 %v1898
    %2871 = vmatprep.subr.mxu0 %v1891
    %2872 = vmatpush2.msra.mxu0 %v1890
    %2873 = vmatprep.subr.mxu0 %v1883
    %2874 = vmatpush2.msra.mxu0 %v1882
    %2875 = vmatprep.subr.mxu0 %v1875
    %2876 = vmatpush2.msra.mxu0 %v1874
    %2877 = vmatprep.subr.mxu0 %v1867
    %2878 = vmatpush2.msra.mxu0 %v1866
    %2879 = vmatprep.subr.mxu0 %v1859
    %2880 = vmatpush2.msra.mxu0 %v1858
    %2881 = vmatprep.subr.mxu0 %v1851
    %2882 = vmatpush2.msra.mxu0 %v1850
    %2883 = vmatprep.subr.mxu0 %v1843
    %2884 = vmatpush2.msra.mxu0 %v1842
    %2885 = vmatprep.subr.mxu0 %v1835
    %2886 = vmatpush2.msra.mxu0 %v1834
    %2887 = vmatprep.subr.mxu0 %v1827
    %2888 = vmatpush2.msra.mxu0 %v1826
    %2889 = vmatprep.subr.mxu0 %v1819
    %2890 = vmatpush2.msra.mxu0 %v1818
    %2891 = vmatprep.subr.mxu0 %v1811
    %2892 = vmatpush2.msra.mxu0 %v1810
    %2893 = vmatprep.subr.mxu0 %v1803
    %2894 = vmatpush2.msra.mxu0 %v1802
    %2895 = vmatprep.subr.mxu0 %v1795
    %2896 = vmatpush2.msra.mxu0 %v1794
    %2897 = vmatprep.subr.mxu0 %v1787
    %2898 = vmatpush2.msra.mxu0 %v1786
    %2899 = vmatprep.subr.mxu0 %v1779
    %2900 = vmatpush2.msra.mxu0 %v1778
    %2901 = vmatprep.mubr.f32.mxu0 %v2671
    %2902 = vmatmul.mubr.f32.gmra.mxu0 %v2670
    %v2903 = vpop.f32.mrf.mxu0
    %v2904 = vadd.f32 0.0, %v2903
    %v2905 = vpop.f32.mrf.mxu0
    %v2906 = vadd.f32 0.0, %v2905
    %2907 = vdwg.mxu0
    %2908 = vmatprep.subr.mxu0 %v1773
    %2909 = vmatpush1.msra.mxu0 %v1772
    %2910 = vmatprep.subr.mxu0 %v1765
    %2911 = vmatpush1.msra.mxu0 %v1764
    %2912 = vmatprep.subr.mxu0 %v1757
    %2913 = vmatpush1.msra.mxu0 %v1756
    %2914 = vmatprep.subr.mxu0 %v1749
    %2915 = vmatpush1.msra.mxu0 %v1748
    %2916 = vmatprep.subr.mxu0 %v1741
    %2917 = vmatpush1.msra.mxu0 %v1740
    %2918 = vmatprep.subr.mxu0 %v1733
    %2919 = vmatpush1.msra.mxu0 %v1732
    %2920 = vmatprep.subr.mxu0 %v1725
    %2921 = vmatpush1.msra.mxu0 %v1724
    %2922 = vmatprep.subr.mxu0 %v1717
    %2923 = vmatpush1.msra.mxu0 %v1716
    %2924 = vmatprep.subr.mxu0 %v1709
    %2925 = vmatpush1.msra.mxu0 %v1708
    %2926 = vmatprep.subr.mxu0 %v1701
    %2927 = vmatpush1.msra.mxu0 %v1700
    %2928 = vmatprep.subr.mxu0 %v1693
    %2929 = vmatpush1.msra.mxu0 %v1692
    %2930 = vmatprep.subr.mxu0 %v1685
    %2931 = vmatpush1.msra.mxu0 %v1684
    %2932 = vmatprep.subr.mxu0 %v1677
    %2933 = vmatpush1.msra.mxu0 %v1676
    %2934 = vmatprep.subr.mxu0 %v1669
    %2935 = vmatpush1.msra.mxu0 %v1668
    %2936 = vmatprep.subr.mxu0 %v1661
    %2937 = vmatpush1.msra.mxu0 %v1660
    %2938 = vmatprep.subr.mxu0 %v1653
    %2939 = vmatpush1.msra.mxu0 %v1652
    %2940 = vmatprep.subr.mxu0 %v1901
    %2941 = vmatpush2.msra.mxu0 %v1900
    %2942 = vmatprep.subr.mxu0 %v1893
    %2943 = vmatpush2.msra.mxu0 %v1892
    %2944 = vmatprep.subr.mxu0 %v1885
    %2945 = vmatpush2.msra.mxu0 %v1884
    %2946 = vmatprep.subr.mxu0 %v1877
    %2947 = vmatpush2.msra.mxu0 %v1876
    %2948 = vmatprep.subr.mxu0 %v1869
    %2949 = vmatpush2.msra.mxu0 %v1868
    %2950 = vmatprep.subr.mxu0 %v1861
    %2951 = vmatpush2.msra.mxu0 %v1860
    %2952 = vmatprep.subr.mxu0 %v1853
    %2953 = vmatpush2.msra.mxu0 %v1852
    %2954 = vmatprep.subr.mxu0 %v1845
    %2955 = vmatpush2.msra.mxu0 %v1844
    %2956 = vmatprep.subr.mxu0 %v1837
    %2957 = vmatpush2.msra.mxu0 %v1836
    %2958 = vmatprep.subr.mxu0 %v1829
    %2959 = vmatpush2.msra.mxu0 %v1828
    %2960 = vmatprep.subr.mxu0 %v1821
    %2961 = vmatpush2.msra.mxu0 %v1820
    %2962 = vmatprep.subr.mxu0 %v1813
    %2963 = vmatpush2.msra.mxu0 %v1812
    %2964 = vmatprep.subr.mxu0 %v1805
    %2965 = vmatpush2.msra.mxu0 %v1804
    %2966 = vmatprep.subr.mxu0 %v1797
    %2967 = vmatpush2.msra.mxu0 %v1796
    %2968 = vmatprep.subr.mxu0 %v1789
    %2969 = vmatpush2.msra.mxu0 %v1788
    %2970 = vmatprep.subr.mxu0 %v1781
    %2971 = vmatpush2.msra.mxu0 %v1780
    %2972 = vmatprep.mubr.f32.mxu0 %v2671
    %2973 = vmatmul.mubr.f32.gmra.mxu0 %v2670
    %v2974 = vpop.f32.mrf.mxu0
    %v2975 = vadd.f32 0.0, %v2974
    %v2976 = vpop.f32.mrf.mxu0
    %v2977 = vadd.f32 0.0, %v2976
    %2978 = vdwg.mxu0
    %2979 = vmatprep.subr.mxu0 %v1775
    %2980 = vmatpush1.msra.mxu0 %v1774
    %2981 = vmatprep.subr.mxu0 %v1767
    %2982 = vmatpush1.msra.mxu0 %v1766
    %2983 = vmatprep.subr.mxu0 %v1759
    %2984 = vmatpush1.msra.mxu0 %v1758
    %2985 = vmatprep.subr.mxu0 %v1751
    %2986 = vmatpush1.msra.mxu0 %v1750
    %2987 = vmatprep.subr.mxu0 %v1743
    %2988 = vmatpush1.msra.mxu0 %v1742
    %2989 = vmatprep.subr.mxu0 %v1735
    %2990 = vmatpush1.msra.mxu0 %v1734
    %2991 = vmatprep.subr.mxu0 %v1727
    %2992 = vmatpush1.msra.mxu0 %v1726
    %2993 = vmatprep.subr.mxu0 %v1719
    %2994 = vmatpush1.msra.mxu0 %v1718
    %2995 = vmatprep.subr.mxu0 %v1711
    %2996 = vmatpush1.msra.mxu0 %v1710
    %2997 = vmatprep.subr.mxu0 %v1703
    %2998 = vmatpush1.msra.mxu0 %v1702
    %2999 = vmatprep.subr.mxu0 %v1695
    %3000 = vmatpush1.msra.mxu0 %v1694
    %3001 = vmatprep.subr.mxu0 %v1687
    %3002 = vmatpush1.msra.mxu0 %v1686
    %3003 = vmatprep.subr.mxu0 %v1679
    %3004 = vmatpush1.msra.mxu0 %v1678
    %3005 = vmatprep.subr.mxu0 %v1671
    %3006 = vmatpush1.msra.mxu0 %v1670
    %3007 = vmatprep.subr.mxu0 %v1663
    %3008 = vmatpush1.msra.mxu0 %v1662
    %3009 = vmatprep.subr.mxu0 %v1655
    %3010 = vmatpush1.msra.mxu0 %v1654
    %3011 = vmatprep.subr.mxu0 %v1903
    %3012 = vmatpush2.msra.mxu0 %v1902
    %3013 = vmatprep.subr.mxu0 %v1895
    %3014 = vmatpush2.msra.mxu0 %v1894
    %3015 = vmatprep.subr.mxu0 %v1887
    %3016 = vmatpush2.msra.mxu0 %v1886
    %3017 = vmatprep.subr.mxu0 %v1879
    %3018 = vmatpush2.msra.mxu0 %v1878
    %3019 = vmatprep.subr.mxu0 %v1871
    %3020 = vmatpush2.msra.mxu0 %v1870
    %3021 = vmatprep.subr.mxu0 %v1863
    %3022 = vmatpush2.msra.mxu0 %v1862
    %3023 = vmatprep.subr.mxu0 %v1855
    %3024 = vmatpush2.msra.mxu0 %v1854
    %3025 = vmatprep.subr.mxu0 %v1847
    %3026 = vmatpush2.msra.mxu0 %v1846
    %3027 = vmatprep.subr.mxu0 %v1839
    %3028 = vmatpush2.msra.mxu0 %v1838
    %3029 = vmatprep.subr.mxu0 %v1831
    %3030 = vmatpush2.msra.mxu0 %v1830
    %3031 = vmatprep.subr.mxu0 %v1823
    %3032 = vmatpush2.msra.mxu0 %v1822
    %3033 = vmatprep.subr.mxu0 %v1815
    %3034 = vmatpush2.msra.mxu0 %v1814
    %3035 = vmatprep.subr.mxu0 %v1807
    %3036 = vmatpush2.msra.mxu0 %v1806
    %3037 = vmatprep.subr.mxu0 %v1799
    %3038 = vmatpush2.msra.mxu0 %v1798
    %3039 = vmatprep.subr.mxu0 %v1791
    %3040 = vmatpush2.msra.mxu0 %v1790
    %3041 = vmatprep.subr.mxu0 %v1783
    %3042 = vmatpush2.msra.mxu0 %v1782
    %3043 = vmatprep.mubr.f32.mxu0 %v2671
    %3044 = vmatmul.mubr.f32.gmra.mxu0 %v2670
    %v3045 = vpop.f32.mrf.mxu0
    %v3046 = vadd.f32 0.0, %v3045
    %v3047 = vpop.f32.mrf.mxu0
    %v3048 = vadd.f32 0.0, %v3047
    %3049 = vdwg.mxu0
    %v3050 = vadd.f32 %v2758, %v2833
    %v3051 = vadd.f32 %v2759, %v2835
    %v3052 = vadd.f32 %v2760, %v2904
    %v3053 = vadd.f32 %v2761, %v2906
    %v3054 = vadd.f32 %v2762, %v2975
    %v3055 = vadd.f32 %v2763, %v2977
    %v3056 = vadd.f32 %v2764, %v3046
    %v3057 = vadd.f32 %v2765, %v3048
    %v3058 = vxor.u32 %v3050, 2147483648
    %v3059 = vxor.u32 %v3051, 2147483648
    %v3060 = vmul.f32 %v3058, 1.442695
    %v3061 = vpow.pop %v3060
    %v3062 = vmul.f32 %v3059, 1.442695
    %v3063 = vpow.pop %v3062
    %v3064 = vadd.f32 %v3061, 1.0
    %v3065 = vadd.f32 %v3063, 1.0
    %v3066 = vrcp.pop %v3064
    %v3067 = vmul.f32 1.0, %v3066
    %v3068 = vrcp.pop %v3065
    %v3069 = vmul.f32 1.0, %v3068
    %v3070 = vxor.u32 %v3052, 2147483648
    %v3071 = vxor.u32 %v3053, 2147483648
    %v3072 = vmul.f32 %v3070, 1.442695
    %v3073 = vpow.pop %v3072
    %v3074 = vmul.f32 %v3071, 1.442695
    %v3075 = vpow.pop %v3074
    %v3076 = vadd.f32 %v3073, 1.0
    %v3077 = vadd.f32 %v3075, 1.0
    %v3078 = vrcp.pop %v3076
    %v3079 = vmul.f32 1.0, %v3078
    %v3080 = vrcp.pop %v3077
    %v3081 = vmul.f32 1.0, %v3080
    %v3082 = vtanh.pop %v3054
    %v3083 = vtanh.pop %v3055
    %v3084 = vxor.u32 %v3056, 2147483648
    %v3085 = vxor.u32 %v3057, 2147483648
    %v3086 = vmul.f32 %v3084, 1.442695
    %v3087 = vpow.pop %v3086
    %v3088 = vmul.f32 %v3085, 1.442695
    %v3089 = vpow.pop %v3088
    %v3090 = vadd.f32 %v3087, 1.0
    %v3091 = vadd.f32 %v3089, 1.0
    %v3092 = vrcp.pop %v3090
    %v3093 = vmul.f32 1.0, %v3092
    %v3094 = vrcp.pop %v3091
    %v3095 = vmul.f32 1.0, %v3094
    %v3096 = vmul.f32 %v3079, %v2672
    %v3097 = vmul.f32 %v3081, %v2673
    %v3098 = vmul.f32 %v3067, %v3082
    %v3099 = vmul.f32 %v3069, %v3083
    %v3100 = vadd.f32 %v3096, %v3098
    %v3101 = vadd.f32 %v3097, %v3099
    %v3102 = vtanh.pop %v3100
    %v3103 = vtanh.pop %v3101
    %v3104 = vmul.f32 %v3093, %v3102
    %v3105 = vmul.f32 %v3095, %v3103
    %v3106 = vsel %vm2035, %v3104, %v2668
    %v3107 = vsel %vm2036, %v3105, %v2669
    %v3108 = vsel %vm2062, %v3104, %v2670
    %v3109 = vsel %vm2063, %v3105, %v2671
    %v3110 = vsel %vm2062, %v3100, %v2672
    %v3111 = vsel %vm2063, %v3101, %v2673
    %v3112 = vcombine.high %v1539, %v1539
    %v3114 = vunpack.c.l.s4 1983009808
    %v3115 = vunpack.c.0.s8 %v3114
    %v3116 = vlaneseq
    %v3117 = vshrl.u32 %v3116, 7
    %v3118 = vsub.s32 %v3115, %v3117
    %v3119 = vrot.slane %v1539, %v3118
    %v3121 = vunpack.c.l.s4 1983009808
    %v3122 = vunpack.c.0.s8 %v3121
    %v3123 = vlaneseq
    %v3124 = vshrl.u32 %v3123, 7
    %v3125 = vsub.s32 %v3122, %v3124
    %v3126 = vrot.slane %v3112, %v3125
    %v3127 = vcombine.high %v3119, %v3119
    %v3128 = vcombine.high %v3126, %v3126
    %v3129 = vcombine.high %v1575, %v1575
    %v3131 = vunpack.c.l.s4 1983009808
    %v3132 = vunpack.c.0.s8 %v3131
    %v3133 = vlaneseq
    %v3134 = vshrl.u32 %v3133, 7
    %v3135 = vsub.s32 %v3132, %v3134
    %v3136 = vrot.slane %v1575, %v3135
    %v3138 = vunpack.c.l.s4 1983009808
    %v3139 = vunpack.c.0.s8 %v3138
    %v3140 = vlaneseq
    %v3141 = vshrl.u32 %v3140, 7
    %v3142 = vsub.s32 %v3139, %v3141
    %v3143 = vrot.slane %v3129, %v3142
    %v3144 = vcombine.high %v3136, %v3136
    %v3145 = vcombine.high %v3143, %v3143
    %v3154 = vcombine.high %v1608, %v1608
    %v3156 = vunpack.c.l.s4 1983009808
    %v3157 = vunpack.c.0.s8 %v3156
    %v3158 = vlaneseq
    %v3159 = vshrl.u32 %v3158, 7
    %v3160 = vsub.s32 %v3157, %v3159
    %v3161 = vrot.slane %v1608, %v3160
    %v3163 = vunpack.c.l.s4 1983009808
    %v3164 = vunpack.c.0.s8 %v3163
    %v3165 = vlaneseq
    %v3166 = vshrl.u32 %v3165, 7
    %v3167 = vsub.s32 %v3164, %v3166
    %v3168 = vrot.slane %v3154, %v3167
    %v3169 = vcombine.high %v3161, %v3161
    %v3170 = vcombine.high %v3168, %v3168
    %v3171 = vcombine.high %v1644, %v1644
    %v3173 = vunpack.c.l.s4 1983009808
    %v3174 = vunpack.c.0.s8 %v3173
    %v3175 = vlaneseq
    %v3176 = vshrl.u32 %v3175, 7
    %v3177 = vsub.s32 %v3174, %v3176
    %v3178 = vrot.slane %v1644, %v3177
    %v3180 = vunpack.c.l.s4 1983009808
    %v3181 = vunpack.c.0.s8 %v3180
    %v3182 = vlaneseq
    %v3183 = vshrl.u32 %v3182, 7
    %v3184 = vsub.s32 %v3181, %v3183
    %v3185 = vrot.slane %v3171, %v3184
    %v3186 = vcombine.high %v3178, %v3178
    %v3187 = vcombine.high %v3185, %v3185
    %v3196 = vsel %vm2082, %v3119, %v3161
    %v3197 = vsel %vm2083, %v3127, %v3169
    %v3198 = vsel %vm2084, %v3126, %v3168
    %v3199 = vsel %vm2085, %v3128, %v3170
    %v3200 = vsel %vm2086, %v3136, %v3178
    %v3201 = vsel %vm2087, %v3144, %v3186
    %v3202 = vsel %vm2088, %v3143, %v3185
    %v3203 = vsel %vm2089, %v3145, %v3187
    %3204 = vmatprep.subr.mxu0 %v1769
    %3205 = vmatpush1.msra.mxu0 %v1768
    %3206 = vmatprep.subr.mxu0 %v1761
    %3207 = vmatpush1.msra.mxu0 %v1760
    %3208 = vmatprep.subr.mxu0 %v1753
    %3209 = vmatpush1.msra.mxu0 %v1752
    %3210 = vmatprep.subr.mxu0 %v1745
    %3211 = vmatpush1.msra.mxu0 %v1744
    %3212 = vmatprep.subr.mxu0 %v1737
    %3213 = vmatpush1.msra.mxu0 %v1736
    %3214 = vmatprep.subr.mxu0 %v1729
    %3215 = vmatpush1.msra.mxu0 %v1728
    %3216 = vmatprep.subr.mxu0 %v1721
    %3217 = vmatpush1.msra.mxu0 %v1720
    %3218 = vmatprep.subr.mxu0 %v1713
    %3219 = vmatpush1.msra.mxu0 %v1712
    %3220 = vmatprep.subr.mxu0 %v1705
    %3221 = vmatpush1.msra.mxu0 %v1704
    %3222 = vmatprep.subr.mxu0 %v1697
    %3223 = vmatpush1.msra.mxu0 %v1696
    %3224 = vmatprep.subr.mxu0 %v1689
    %3225 = vmatpush1.msra.mxu0 %v1688
    %3226 = vmatprep.subr.mxu0 %v1681
    %3227 = vmatpush1.msra.mxu0 %v1680
    %3228 = vmatprep.subr.mxu0 %v1673
    %3229 = vmatpush1.msra.mxu0 %v1672
    %3230 = vmatprep.subr.mxu0 %v1665
    %3231 = vmatpush1.msra.mxu0 %v1664
    %3232 = vmatprep.subr.mxu0 %v1657
    %3233 = vmatpush1.msra.mxu0 %v1656
    %3234 = vmatprep.subr.mxu0 %v1649
    %3235 = vmatpush1.msra.mxu0 %v1648
    %3236 = vmatprep.subr.mxu0 %v1897
    %3237 = vmatpush2.msra.mxu0 %v1896
    %3238 = vmatprep.subr.mxu0 %v1889
    %3239 = vmatpush2.msra.mxu0 %v1888
    %3240 = vmatprep.subr.mxu0 %v1881
    %3241 = vmatpush2.msra.mxu0 %v1880
    %3242 = vmatprep.subr.mxu0 %v1873
    %3243 = vmatpush2.msra.mxu0 %v1872
    %3244 = vmatprep.subr.mxu0 %v1865
    %3245 = vmatpush2.msra.mxu0 %v1864
    %3246 = vmatprep.subr.mxu0 %v1857
    %3247 = vmatpush2.msra.mxu0 %v1856
    %3248 = vmatprep.subr.mxu0 %v1849
    %3249 = vmatpush2.msra.mxu0 %v1848
    %3250 = vmatprep.subr.mxu0 %v1841
    %3251 = vmatpush2.msra.mxu0 %v1840
    %3252 = vmatprep.subr.mxu0 %v1833
    %3253 = vmatpush2.msra.mxu0 %v1832
    %3254 = vmatprep.subr.mxu0 %v1825
    %3255 = vmatpush2.msra.mxu0 %v1824
    %3256 = vmatprep.subr.mxu0 %v1817
    %3257 = vmatpush2.msra.mxu0 %v1816
    %3258 = vmatprep.subr.mxu0 %v1809
    %3259 = vmatpush2.msra.mxu0 %v1808
    %3260 = vmatprep.subr.mxu0 %v1801
    %3261 = vmatpush2.msra.mxu0 %v1800
    %3262 = vmatprep.subr.mxu0 %v1793
    %3263 = vmatpush2.msra.mxu0 %v1792
    %3264 = vmatprep.subr.mxu0 %v1785
    %3265 = vmatpush2.msra.mxu0 %v1784
    %3266 = vmatprep.subr.mxu0 %v1777
    %3267 = vmatpush2.msra.mxu0 %v1776
    %3268 = vmatprep.mubr.f32.mxu0 %v3109
    %3269 = vmatmul.mubr.f32.gmra.mxu0 %v3108
    %v3270 = vpop.f32.mrf.mxu0
    %v3271 = vadd.f32 0.0, %v3270
    %v3272 = vpop.f32.mrf.mxu0
    %v3273 = vadd.f32 0.0, %v3272
    %3274 = vdwg.mxu0
    %3275 = vmatprep.subr.mxu0 %v1771
    %3276 = vmatpush1.msra.mxu0 %v1770
    %3277 = vmatprep.subr.mxu0 %v1763
    %3278 = vmatpush1.msra.mxu0 %v1762
    %3279 = vmatprep.subr.mxu0 %v1755
    %3280 = vmatpush1.msra.mxu0 %v1754
    %3281 = vmatprep.subr.mxu0 %v1747
    %3282 = vmatpush1.msra.mxu0 %v1746
    %3283 = vmatprep.subr.mxu0 %v1739
    %3284 = vmatpush1.msra.mxu0 %v1738
    %3285 = vmatprep.subr.mxu0 %v1731
    %3286 = vmatpush1.msra.mxu0 %v1730
    %3287 = vmatprep.subr.mxu0 %v1723
    %3288 = vmatpush1.msra.mxu0 %v1722
    %3289 = vmatprep.subr.mxu0 %v1715
    %3290 = vmatpush1.msra.mxu0 %v1714
    %3291 = vmatprep.subr.mxu0 %v1707
    %3292 = vmatpush1.msra.mxu0 %v1706
    %3293 = vmatprep.subr.mxu0 %v1699
    %3294 = vmatpush1.msra.mxu0 %v1698
    %3295 = vmatprep.subr.mxu0 %v1691
    %3296 = vmatpush1.msra.mxu0 %v1690
    %3297 = vmatprep.subr.mxu0 %v1683
    %3298 = vmatpush1.msra.mxu0 %v1682
    %3299 = vmatprep.subr.mxu0 %v1675
    %3300 = vmatpush1.msra.mxu0 %v1674
    %3301 = vmatprep.subr.mxu0 %v1667
    %3302 = vmatpush1.msra.mxu0 %v1666
    %3303 = vmatprep.subr.mxu0 %v1659
    %3304 = vmatpush1.msra.mxu0 %v1658
    %3305 = vmatprep.subr.mxu0 %v1651
    %3306 = vmatpush1.msra.mxu0 %v1650
    %3307 = vmatprep.subr.mxu0 %v1899
    %3308 = vmatpush2.msra.mxu0 %v1898
    %3309 = vmatprep.subr.mxu0 %v1891
    %3310 = vmatpush2.msra.mxu0 %v1890
    %3311 = vmatprep.subr.mxu0 %v1883
    %3312 = vmatpush2.msra.mxu0 %v1882
    %3313 = vmatprep.subr.mxu0 %v1875
    %3314 = vmatpush2.msra.mxu0 %v1874
    %3315 = vmatprep.subr.mxu0 %v1867
    %3316 = vmatpush2.msra.mxu0 %v1866
    %3317 = vmatprep.subr.mxu0 %v1859
    %3318 = vmatpush2.msra.mxu0 %v1858
    %3319 = vmatprep.subr.mxu0 %v1851
    %3320 = vmatpush2.msra.mxu0 %v1850
    %3321 = vmatprep.subr.mxu0 %v1843
    %3322 = vmatpush2.msra.mxu0 %v1842
    %3323 = vmatprep.subr.mxu0 %v1835
    %3324 = vmatpush2.msra.mxu0 %v1834
    %3325 = vmatprep.subr.mxu0 %v1827
    %3326 = vmatpush2.msra.mxu0 %v1826
    %3327 = vmatprep.subr.mxu0 %v1819
    %3328 = vmatpush2.msra.mxu0 %v1818
    %3329 = vmatprep.subr.mxu0 %v1811
    %3330 = vmatpush2.msra.mxu0 %v1810
    %3331 = vmatprep.subr.mxu0 %v1803
    %3332 = vmatpush2.msra.mxu0 %v1802
    %3333 = vmatprep.subr.mxu0 %v1795
    %3334 = vmatpush2.msra.mxu0 %v1794
    %3335 = vmatprep.subr.mxu0 %v1787
    %3336 = vmatpush2.msra.mxu0 %v1786
    %3337 = vmatprep.subr.mxu0 %v1779
    %3338 = vmatpush2.msra.mxu0 %v1778
    %3339 = vmatprep.mubr.f32.mxu0 %v3109
    %3340 = vmatmul.mubr.f32.gmra.mxu0 %v3108
    %v3341 = vpop.f32.mrf.mxu0
    %v3342 = vadd.f32 0.0, %v3341
    %v3343 = vpop.f32.mrf.mxu0
    %v3344 = vadd.f32 0.0, %v3343
    %3345 = vdwg.mxu0
    %3346 = vmatprep.subr.mxu0 %v1773
    %3347 = vmatpush1.msra.mxu0 %v1772
    %3348 = vmatprep.subr.mxu0 %v1765
    %3349 = vmatpush1.msra.mxu0 %v1764
    %3350 = vmatprep.subr.mxu0 %v1757
    %3351 = vmatpush1.msra.mxu0 %v1756
    %3352 = vmatprep.subr.mxu0 %v1749
    %3353 = vmatpush1.msra.mxu0 %v1748
    %3354 = vmatprep.subr.mxu0 %v1741
    %3355 = vmatpush1.msra.mxu0 %v1740
    %3356 = vmatprep.subr.mxu0 %v1733
    %3357 = vmatpush1.msra.mxu0 %v1732
    %3358 = vmatprep.subr.mxu0 %v1725
    %3359 = vmatpush1.msra.mxu0 %v1724
    %3360 = vmatprep.subr.mxu0 %v1717
    %3361 = vmatpush1.msra.mxu0 %v1716
    %3362 = vmatprep.subr.mxu0 %v1709
    %3363 = vmatpush1.msra.mxu0 %v1708
    %3364 = vmatprep.subr.mxu0 %v1701
    %3365 = vmatpush1.msra.mxu0 %v1700
    %3366 = vmatprep.subr.mxu0 %v1693
    %3367 = vmatpush1.msra.mxu0 %v1692
    %3368 = vmatprep.subr.mxu0 %v1685
    %3369 = vmatpush1.msra.mxu0 %v1684
    %3370 = vmatprep.subr.mxu0 %v1677
    %3371 = vmatpush1.msra.mxu0 %v1676
    %3372 = vmatprep.subr.mxu0 %v1669
    %3373 = vmatpush1.msra.mxu0 %v1668
    %3374 = vmatprep.subr.mxu0 %v1661
    %3375 = vmatpush1.msra.mxu0 %v1660
    %3376 = vmatprep.subr.mxu0 %v1653
    %3377 = vmatpush1.msra.mxu0 %v1652
    %3378 = vmatprep.subr.mxu0 %v1901
    %3379 = vmatpush2.msra.mxu0 %v1900
    %3380 = vmatprep.subr.mxu0 %v1893
    %3381 = vmatpush2.msra.mxu0 %v1892
    %3382 = vmatprep.subr.mxu0 %v1885
    %3383 = vmatpush2.msra.mxu0 %v1884
    %3384 = vmatprep.subr.mxu0 %v1877
    %3385 = vmatpush2.msra.mxu0 %v1876
    %3386 = vmatprep.subr.mxu0 %v1869
    %3387 = vmatpush2.msra.mxu0 %v1868
    %3388 = vmatprep.subr.mxu0 %v1861
    %3389 = vmatpush2.msra.mxu0 %v1860
    %3390 = vmatprep.subr.mxu0 %v1853
    %3391 = vmatpush2.msra.mxu0 %v1852
    %3392 = vmatprep.subr.mxu0 %v1845
    %3393 = vmatpush2.msra.mxu0 %v1844
    %3394 = vmatprep.subr.mxu0 %v1837
    %3395 = vmatpush2.msra.mxu0 %v1836
    %3396 = vmatprep.subr.mxu0 %v1829
    %3397 = vmatpush2.msra.mxu0 %v1828
    %3398 = vmatprep.subr.mxu0 %v1821
    %3399 = vmatpush2.msra.mxu0 %v1820
    %3400 = vmatprep.subr.mxu0 %v1813
    %3401 = vmatpush2.msra.mxu0 %v1812
    %3402 = vmatprep.subr.mxu0 %v1805
    %3403 = vmatpush2.msra.mxu0 %v1804
    %3404 = vmatprep.subr.mxu0 %v1797
    %3405 = vmatpush2.msra.mxu0 %v1796
    %3406 = vmatprep.subr.mxu0 %v1789
    %3407 = vmatpush2.msra.mxu0 %v1788
    %3408 = vmatprep.subr.mxu0 %v1781
    %3409 = vmatpush2.msra.mxu0 %v1780
    %3410 = vmatprep.mubr.f32.mxu0 %v3109
    %3411 = vmatmul.mubr.f32.gmra.mxu0 %v3108
    %v3412 = vpop.f32.mrf.mxu0
    %v3413 = vadd.f32 0.0, %v3412
    %v3414 = vpop.f32.mrf.mxu0
    %v3415 = vadd.f32 0.0, %v3414
    %3416 = vdwg.mxu0
    %3417 = vmatprep.subr.mxu0 %v1775
    %3418 = vmatpush1.msra.mxu0 %v1774
    %3419 = vmatprep.subr.mxu0 %v1767
    %3420 = vmatpush1.msra.mxu0 %v1766
    %3421 = vmatprep.subr.mxu0 %v1759
    %3422 = vmatpush1.msra.mxu0 %v1758
    %3423 = vmatprep.subr.mxu0 %v1751
    %3424 = vmatpush1.msra.mxu0 %v1750
    %3425 = vmatprep.subr.mxu0 %v1743
    %3426 = vmatpush1.msra.mxu0 %v1742
    %3427 = vmatprep.subr.mxu0 %v1735
    %3428 = vmatpush1.msra.mxu0 %v1734
    %3429 = vmatprep.subr.mxu0 %v1727
    %3430 = vmatpush1.msra.mxu0 %v1726
    %3431 = vmatprep.subr.mxu0 %v1719
    %3432 = vmatpush1.msra.mxu0 %v1718
    %3433 = vmatprep.subr.mxu0 %v1711
    %3434 = vmatpush1.msra.mxu0 %v1710
    %3435 = vmatprep.subr.mxu0 %v1703
    %3436 = vmatpush1.msra.mxu0 %v1702
    %3437 = vmatprep.subr.mxu0 %v1695
    %3438 = vmatpush1.msra.mxu0 %v1694
    %3439 = vmatprep.subr.mxu0 %v1687
    %3440 = vmatpush1.msra.mxu0 %v1686
    %3441 = vmatprep.subr.mxu0 %v1679
    %3442 = vmatpush1.msra.mxu0 %v1678
    %3443 = vmatprep.subr.mxu0 %v1671
    %3444 = vmatpush1.msra.mxu0 %v1670
    %3445 = vmatprep.subr.mxu0 %v1663
    %3446 = vmatpush1.msra.mxu0 %v1662
    %3447 = vmatprep.subr.mxu0 %v1655
    %3448 = vmatpush1.msra.mxu0 %v1654
    %3449 = vmatprep.subr.mxu0 %v1903
    %3450 = vmatpush2.msra.mxu0 %v1902
    %3451 = vmatprep.subr.mxu0 %v1895
    %3452 = vmatpush2.msra.mxu0 %v1894
    %3453 = vmatprep.subr.mxu0 %v1887
    %3454 = vmatpush2.msra.mxu0 %v1886
    %3455 = vmatprep.subr.mxu0 %v1879
    %3456 = vmatpush2.msra.mxu0 %v1878
    %3457 = vmatprep.subr.mxu0 %v1871
    %3458 = vmatpush2.msra.mxu0 %v1870
    %3459 = vmatprep.subr.mxu0 %v1863
    %3460 = vmatpush2.msra.mxu0 %v1862
    %3461 = vmatprep.subr.mxu0 %v1855
    %3462 = vmatpush2.msra.mxu0 %v1854
    %3463 = vmatprep.subr.mxu0 %v1847
    %3464 = vmatpush2.msra.mxu0 %v1846
    %3465 = vmatprep.subr.mxu0 %v1839
    %3466 = vmatpush2.msra.mxu0 %v1838
    %3467 = vmatprep.subr.mxu0 %v1831
    %3468 = vmatpush2.msra.mxu0 %v1830
    %3469 = vmatprep.subr.mxu0 %v1823
    %3470 = vmatpush2.msra.mxu0 %v1822
    %3471 = vmatprep.subr.mxu0 %v1815
    %3472 = vmatpush2.msra.mxu0 %v1814
    %3473 = vmatprep.subr.mxu0 %v1807
    %3474 = vmatpush2.msra.mxu0 %v1806
    %3475 = vmatprep.subr.mxu0 %v1799
    %3476 = vmatpush2.msra.mxu0 %v1798
    %3477 = vmatprep.subr.mxu0 %v1791
    %3478 = vmatpush2.msra.mxu0 %v1790
    %3479 = vmatprep.subr.mxu0 %v1783
    %3480 = vmatpush2.msra.mxu0 %v1782
    %3481 = vmatprep.mubr.f32.mxu0 %v3109
    %3482 = vmatmul.mubr.f32.gmra.mxu0 %v3108
    %v3483 = vpop.f32.mrf.mxu0
    %v3484 = vadd.f32 0.0, %v3483
    %v3485 = vpop.f32.mrf.mxu0
    %v3486 = vadd.f32 0.0, %v3485
    %3487 = vdwg.mxu0
    %v3488 = vadd.f32 %v3196, %v3271
    %v3489 = vadd.f32 %v3197, %v3273
    %v3490 = vadd.f32 %v3198, %v3342
    %v3491 = vadd.f32 %v3199, %v3344
    %v3492 = vadd.f32 %v3200, %v3413
    %v3493 = vadd.f32 %v3201, %v3415
    %v3494 = vadd.f32 %v3202, %v3484
    %v3495 = vadd.f32 %v3203, %v3486
    %v3496 = vxor.u32 %v3488, 2147483648
    %v3497 = vxor.u32 %v3489, 2147483648
    %v3498 = vmul.f32 %v3496, 1.442695
    %v3499 = vpow.pop %v3498
    %v3500 = vmul.f32 %v3497, 1.442695
    %v3501 = vpow.pop %v3500
    %v3502 = vadd.f32 %v3499, 1.0
    %v3503 = vadd.f32 %v3501, 1.0
    %v3504 = vrcp.pop %v3502
    %v3505 = vmul.f32 1.0, %v3504
    %v3506 = vrcp.pop %v3503
    %v3507 = vmul.f32 1.0, %v3506
    %v3508 = vxor.u32 %v3490, 2147483648
    %v3509 = vxor.u32 %v3491, 2147483648
    %v3510 = vmul.f32 %v3508, 1.442695
    %v3511 = vpow.pop %v3510
    %v3512 = vmul.f32 %v3509, 1.442695
    %v3513 = vpow.pop %v3512
    %v3514 = vadd.f32 %v3511, 1.0
    %v3515 = vadd.f32 %v3513, 1.0
    %v3516 = vrcp.pop %v3514
    %v3517 = vmul.f32 1.0, %v3516
    %v3518 = vrcp.pop %v3515
    %v3519 = vmul.f32 1.0, %v3518
    %v3520 = vtanh.pop %v3492
    %v3521 = vtanh.pop %v3493
    %v3522 = vxor.u32 %v3494, 2147483648
    %v3523 = vxor.u32 %v3495, 2147483648
    %v3524 = vmul.f32 %v3522, 1.442695
    %v3525 = vpow.pop %v3524
    %v3526 = vmul.f32 %v3523, 1.442695
    %v3527 = vpow.pop %v3526
    %v3528 = vadd.f32 %v3525, 1.0
    %v3529 = vadd.f32 %v3527, 1.0
    %v3530 = vrcp.pop %v3528
    %v3531 = vmul.f32 1.0, %v3530
    %v3532 = vrcp.pop %v3529
    %v3533 = vmul.f32 1.0, %v3532
    %v3534 = vmul.f32 %v3517, %v3110
    %v3535 = vmul.f32 %v3519, %v3111
    %v3536 = vmul.f32 %v3505, %v3520
    %v3537 = vmul.f32 %v3507, %v3521
    %v3538 = vadd.f32 %v3534, %v3536
    %v3539 = vadd.f32 %v3535, %v3537
    %v3540 = vtanh.pop %v3538
    %v3541 = vtanh.pop %v3539
    %v3542 = vmul.f32 %v3531, %v3540
    %v3543 = vmul.f32 %v3533, %v3541
    %v3544 = vsel %vm2037, %v3542, %v3106
    %v3545 = vsel %vm2038, %v3543, %v3107
    %v3546 = vsel %vm2064, %v3542, %v3108
    %v3547 = vsel %vm2065, %v3543, %v3109
    %v3548 = vsel %vm2064, %v3538, %v3110
    %v3549 = vsel %vm2065, %v3539, %v3111
    %v3550 = vsel %vm2082, %v3161, %v3119
    %v3551 = vsel %vm2083, %v3169, %v3127
    %v3552 = vsel %vm2084, %v3168, %v3126
    %v3553 = vsel %vm2085, %v3170, %v3128
    %v3554 = vsel %vm2086, %v3178, %v3136
    %v3555 = vsel %vm2087, %v3186, %v3144
    %v3556 = vsel %vm2088, %v3185, %v3143
    %v3557 = vsel %vm2089, %v3187, %v3145
    %3558 = vmatprep.subr.mxu0 %v1769
    %3559 = vmatpush1.msra.mxu0 %v1768
    %3560 = vmatprep.subr.mxu0 %v1761
    %3561 = vmatpush1.msra.mxu0 %v1760
    %3562 = vmatprep.subr.mxu0 %v1753
    %3563 = vmatpush1.msra.mxu0 %v1752
    %3564 = vmatprep.subr.mxu0 %v1745
    %3565 = vmatpush1.msra.mxu0 %v1744
    %3566 = vmatprep.subr.mxu0 %v1737
    %3567 = vmatpush1.msra.mxu0 %v1736
    %3568 = vmatprep.subr.mxu0 %v1729
    %3569 = vmatpush1.msra.mxu0 %v1728
    %3570 = vmatprep.subr.mxu0 %v1721
    %3571 = vmatpush1.msra.mxu0 %v1720
    %3572 = vmatprep.subr.mxu0 %v1713
    %3573 = vmatpush1.msra.mxu0 %v1712
    %3574 = vmatprep.subr.mxu0 %v1705
    %3575 = vmatpush1.msra.mxu0 %v1704
    %3576 = vmatprep.subr.mxu0 %v1697
    %3577 = vmatpush1.msra.mxu0 %v1696
    %3578 = vmatprep.subr.mxu0 %v1689
    %3579 = vmatpush1.msra.mxu0 %v1688
    %3580 = vmatprep.subr.mxu0 %v1681
    %3581 = vmatpush1.msra.mxu0 %v1680
    %3582 = vmatprep.subr.mxu0 %v1673
    %3583 = vmatpush1.msra.mxu0 %v1672
    %3584 = vmatprep.subr.mxu0 %v1665
    %3585 = vmatpush1.msra.mxu0 %v1664
    %3586 = vmatprep.subr.mxu0 %v1657
    %3587 = vmatpush1.msra.mxu0 %v1656
    %3588 = vmatprep.subr.mxu0 %v1649
    %3589 = vmatpush1.msra.mxu0 %v1648
    %3590 = vmatprep.subr.mxu0 %v1897
    %3591 = vmatpush2.msra.mxu0 %v1896
    %3592 = vmatprep.subr.mxu0 %v1889
    %3593 = vmatpush2.msra.mxu0 %v1888
    %3594 = vmatprep.subr.mxu0 %v1881
    %3595 = vmatpush2.msra.mxu0 %v1880
    %3596 = vmatprep.subr.mxu0 %v1873
    %3597 = vmatpush2.msra.mxu0 %v1872
    %3598 = vmatprep.subr.mxu0 %v1865
    %3599 = vmatpush2.msra.mxu0 %v1864
    %3600 = vmatprep.subr.mxu0 %v1857
    %3601 = vmatpush2.msra.mxu0 %v1856
    %3602 = vmatprep.subr.mxu0 %v1849
    %3603 = vmatpush2.msra.mxu0 %v1848
    %3604 = vmatprep.subr.mxu0 %v1841
    %3605 = vmatpush2.msra.mxu0 %v1840
    %3606 = vmatprep.subr.mxu0 %v1833
    %3607 = vmatpush2.msra.mxu0 %v1832
    %3608 = vmatprep.subr.mxu0 %v1825
    %3609 = vmatpush2.msra.mxu0 %v1824
    %3610 = vmatprep.subr.mxu0 %v1817
    %3611 = vmatpush2.msra.mxu0 %v1816
    %3612 = vmatprep.subr.mxu0 %v1809
    %3613 = vmatpush2.msra.mxu0 %v1808
    %3614 = vmatprep.subr.mxu0 %v1801
    %3615 = vmatpush2.msra.mxu0 %v1800
    %3616 = vmatprep.subr.mxu0 %v1793
    %3617 = vmatpush2.msra.mxu0 %v1792
    %3618 = vmatprep.subr.mxu0 %v1785
    %3619 = vmatpush2.msra.mxu0 %v1784
    %3620 = vmatprep.subr.mxu0 %v1777
    %3621 = vmatpush2.msra.mxu0 %v1776
    %3622 = vmatprep.mubr.f32.mxu0 %v3547
    %3623 = vmatmul.mubr.f32.gmra.mxu0 %v3546
    %v3624 = vpop.f32.mrf.mxu0
    %v3625 = vadd.f32 0.0, %v3624
    %v3626 = vpop.f32.mrf.mxu0
    %v3627 = vadd.f32 0.0, %v3626
    %3628 = vdwg.mxu0
    %3629 = vmatprep.subr.mxu0 %v1771
    %3630 = vmatpush1.msra.mxu0 %v1770
    %3631 = vmatprep.subr.mxu0 %v1763
    %3632 = vmatpush1.msra.mxu0 %v1762
    %3633 = vmatprep.subr.mxu0 %v1755
    %3634 = vmatpush1.msra.mxu0 %v1754
    %3635 = vmatprep.subr.mxu0 %v1747
    %3636 = vmatpush1.msra.mxu0 %v1746
    %3637 = vmatprep.subr.mxu0 %v1739
    %3638 = vmatpush1.msra.mxu0 %v1738
    %3639 = vmatprep.subr.mxu0 %v1731
    %3640 = vmatpush1.msra.mxu0 %v1730
    %3641 = vmatprep.subr.mxu0 %v1723
    %3642 = vmatpush1.msra.mxu0 %v1722
    %3643 = vmatprep.subr.mxu0 %v1715
    %3644 = vmatpush1.msra.mxu0 %v1714
    %3645 = vmatprep.subr.mxu0 %v1707
    %3646 = vmatpush1.msra.mxu0 %v1706
    %3647 = vmatprep.subr.mxu0 %v1699
    %3648 = vmatpush1.msra.mxu0 %v1698
    %3649 = vmatprep.subr.mxu0 %v1691
    %3650 = vmatpush1.msra.mxu0 %v1690
    %3651 = vmatprep.subr.mxu0 %v1683
    %3652 = vmatpush1.msra.mxu0 %v1682
    %3653 = vmatprep.subr.mxu0 %v1675
    %3654 = vmatpush1.msra.mxu0 %v1674
    %3655 = vmatprep.subr.mxu0 %v1667
    %3656 = vmatpush1.msra.mxu0 %v1666
    %3657 = vmatprep.subr.mxu0 %v1659
    %3658 = vmatpush1.msra.mxu0 %v1658
    %3659 = vmatprep.subr.mxu0 %v1651
    %3660 = vmatpush1.msra.mxu0 %v1650
    %3661 = vmatprep.subr.mxu0 %v1899
    %3662 = vmatpush2.msra.mxu0 %v1898
    %3663 = vmatprep.subr.mxu0 %v1891
    %3664 = vmatpush2.msra.mxu0 %v1890
    %3665 = vmatprep.subr.mxu0 %v1883
    %3666 = vmatpush2.msra.mxu0 %v1882
    %3667 = vmatprep.subr.mxu0 %v1875
    %3668 = vmatpush2.msra.mxu0 %v1874
    %3669 = vmatprep.subr.mxu0 %v1867
    %3670 = vmatpush2.msra.mxu0 %v1866
    %3671 = vmatprep.subr.mxu0 %v1859
    %3672 = vmatpush2.msra.mxu0 %v1858
    %3673 = vmatprep.subr.mxu0 %v1851
    %3674 = vmatpush2.msra.mxu0 %v1850
    %3675 = vmatprep.subr.mxu0 %v1843
    %3676 = vmatpush2.msra.mxu0 %v1842
    %3677 = vmatprep.subr.mxu0 %v1835
    %3678 = vmatpush2.msra.mxu0 %v1834
    %3679 = vmatprep.subr.mxu0 %v1827
    %3680 = vmatpush2.msra.mxu0 %v1826
    %3681 = vmatprep.subr.mxu0 %v1819
    %3682 = vmatpush2.msra.mxu0 %v1818
    %3683 = vmatprep.subr.mxu0 %v1811
    %3684 = vmatpush2.msra.mxu0 %v1810
    %3685 = vmatprep.subr.mxu0 %v1803
    %3686 = vmatpush2.msra.mxu0 %v1802
    %3687 = vmatprep.subr.mxu0 %v1795
    %3688 = vmatpush2.msra.mxu0 %v1794
    %3689 = vmatprep.subr.mxu0 %v1787
    %3690 = vmatpush2.msra.mxu0 %v1786
    %3691 = vmatprep.subr.mxu0 %v1779
    %3692 = vmatpush2.msra.mxu0 %v1778
    %3693 = vmatprep.mubr.f32.mxu0 %v3547
    %3694 = vmatmul.mubr.f32.gmra.mxu0 %v3546
    %v3695 = vpop.f32.mrf.mxu0
    %v3696 = vadd.f32 0.0, %v3695
    %v3697 = vpop.f32.mrf.mxu0
    %v3698 = vadd.f32 0.0, %v3697
    %3699 = vdwg.mxu0
    %3700 = vmatprep.subr.mxu0 %v1773
    %3701 = vmatpush1.msra.mxu0 %v1772
    %3702 = vmatprep.subr.mxu0 %v1765
    %3703 = vmatpush1.msra.mxu0 %v1764
    %3704 = vmatprep.subr.mxu0 %v1757
    %3705 = vmatpush1.msra.mxu0 %v1756
    %3706 = vmatprep.subr.mxu0 %v1749
    %3707 = vmatpush1.msra.mxu0 %v1748
    %3708 = vmatprep.subr.mxu0 %v1741
    %3709 = vmatpush1.msra.mxu0 %v1740
    %3710 = vmatprep.subr.mxu0 %v1733
    %3711 = vmatpush1.msra.mxu0 %v1732
    %3712 = vmatprep.subr.mxu0 %v1725
    %3713 = vmatpush1.msra.mxu0 %v1724
    %3714 = vmatprep.subr.mxu0 %v1717
    %3715 = vmatpush1.msra.mxu0 %v1716
    %3716 = vmatprep.subr.mxu0 %v1709
    %3717 = vmatpush1.msra.mxu0 %v1708
    %3718 = vmatprep.subr.mxu0 %v1701
    %3719 = vmatpush1.msra.mxu0 %v1700
    %3720 = vmatprep.subr.mxu0 %v1693
    %3721 = vmatpush1.msra.mxu0 %v1692
    %3722 = vmatprep.subr.mxu0 %v1685
    %3723 = vmatpush1.msra.mxu0 %v1684
    %3724 = vmatprep.subr.mxu0 %v1677
    %3725 = vmatpush1.msra.mxu0 %v1676
    %3726 = vmatprep.subr.mxu0 %v1669
    %3727 = vmatpush1.msra.mxu0 %v1668
    %3728 = vmatprep.subr.mxu0 %v1661
    %3729 = vmatpush1.msra.mxu0 %v1660
    %3730 = vmatprep.subr.mxu0 %v1653
    %3731 = vmatpush1.msra.mxu0 %v1652
    %3732 = vmatprep.subr.mxu0 %v1901
    %3733 = vmatpush2.msra.mxu0 %v1900
    %3734 = vmatprep.subr.mxu0 %v1893
    %3735 = vmatpush2.msra.mxu0 %v1892
    %3736 = vmatprep.subr.mxu0 %v1885
    %3737 = vmatpush2.msra.mxu0 %v1884
    %3738 = vmatprep.subr.mxu0 %v1877
    %3739 = vmatpush2.msra.mxu0 %v1876
    %3740 = vmatprep.subr.mxu0 %v1869
    %3741 = vmatpush2.msra.mxu0 %v1868
    %3742 = vmatprep.subr.mxu0 %v1861
    %3743 = vmatpush2.msra.mxu0 %v1860
    %3744 = vmatprep.subr.mxu0 %v1853
    %3745 = vmatpush2.msra.mxu0 %v1852
    %3746 = vmatprep.subr.mxu0 %v1845
    %3747 = vmatpush2.msra.mxu0 %v1844
    %3748 = vmatprep.subr.mxu0 %v1837
    %3749 = vmatpush2.msra.mxu0 %v1836
    %3750 = vmatprep.subr.mxu0 %v1829
    %3751 = vmatpush2.msra.mxu0 %v1828
    %3752 = vmatprep.subr.mxu0 %v1821
    %3753 = vmatpush2.msra.mxu0 %v1820
    %3754 = vmatprep.subr.mxu0 %v1813
    %3755 = vmatpush2.msra.mxu0 %v1812
    %3756 = vmatprep.subr.mxu0 %v1805
    %3757 = vmatpush2.msra.mxu0 %v1804
    %3758 = vmatprep.subr.mxu0 %v1797
    %3759 = vmatpush2.msra.mxu0 %v1796
    %3760 = vmatprep.subr.mxu0 %v1789
    %3761 = vmatpush2.msra.mxu0 %v1788
    %3762 = vmatprep.subr.mxu0 %v1781
    %3763 = vmatpush2.msra.mxu0 %v1780
    %3764 = vmatprep.mubr.f32.mxu0 %v3547
    %3765 = vmatmul.mubr.f32.gmra.mxu0 %v3546
    %v3766 = vpop.f32.mrf.mxu0
    %v3767 = vadd.f32 0.0, %v3766
    %v3768 = vpop.f32.mrf.mxu0
    %v3769 = vadd.f32 0.0, %v3768
    %3770 = vdwg.mxu0
    %3771 = vmatprep.subr.mxu0 %v1775
    %3772 = vmatpush1.msra.mxu0 %v1774
    %3773 = vmatprep.subr.mxu0 %v1767
    %3774 = vmatpush1.msra.mxu0 %v1766
    %3775 = vmatprep.subr.mxu0 %v1759
    %3776 = vmatpush1.msra.mxu0 %v1758
    %3777 = vmatprep.subr.mxu0 %v1751
    %3778 = vmatpush1.msra.mxu0 %v1750
    %3779 = vmatprep.subr.mxu0 %v1743
    %3780 = vmatpush1.msra.mxu0 %v1742
    %3781 = vmatprep.subr.mxu0 %v1735
    %3782 = vmatpush1.msra.mxu0 %v1734
    %3783 = vmatprep.subr.mxu0 %v1727
    %3784 = vmatpush1.msra.mxu0 %v1726
    %3785 = vmatprep.subr.mxu0 %v1719
    %3786 = vmatpush1.msra.mxu0 %v1718
    %3787 = vmatprep.subr.mxu0 %v1711
    %3788 = vmatpush1.msra.mxu0 %v1710
    %3789 = vmatprep.subr.mxu0 %v1703
    %3790 = vmatpush1.msra.mxu0 %v1702
    %3791 = vmatprep.subr.mxu0 %v1695
    %3792 = vmatpush1.msra.mxu0 %v1694
    %3793 = vmatprep.subr.mxu0 %v1687
    %3794 = vmatpush1.msra.mxu0 %v1686
    %3795 = vmatprep.subr.mxu0 %v1679
    %3796 = vmatpush1.msra.mxu0 %v1678
    %3797 = vmatprep.subr.mxu0 %v1671
    %3798 = vmatpush1.msra.mxu0 %v1670
    %3799 = vmatprep.subr.mxu0 %v1663
    %3800 = vmatpush1.msra.mxu0 %v1662
    %3801 = vmatprep.subr.mxu0 %v1655
    %3802 = vmatpush1.msra.mxu0 %v1654
    %3803 = vmatprep.subr.mxu0 %v1903
    %3804 = vmatpush2.msra.mxu0 %v1902
    %3805 = vmatprep.subr.mxu0 %v1895
    %3806 = vmatpush2.msra.mxu0 %v1894
    %3807 = vmatprep.subr.mxu0 %v1887
    %3808 = vmatpush2.msra.mxu0 %v1886
    %3809 = vmatprep.subr.mxu0 %v1879
    %3810 = vmatpush2.msra.mxu0 %v1878
    %3811 = vmatprep.subr.mxu0 %v1871
    %3812 = vmatpush2.msra.mxu0 %v1870
    %3813 = vmatprep.subr.mxu0 %v1863
    %3814 = vmatpush2.msra.mxu0 %v1862
    %3815 = vmatprep.subr.mxu0 %v1855
    %3816 = vmatpush2.msra.mxu0 %v1854
    %3817 = vmatprep.subr.mxu0 %v1847
    %3818 = vmatpush2.msra.mxu0 %v1846
    %3819 = vmatprep.subr.mxu0 %v1839
    %3820 = vmatpush2.msra.mxu0 %v1838
    %3821 = vmatprep.subr.mxu0 %v1831
    %3822 = vmatpush2.msra.mxu0 %v1830
    %3823 = vmatprep.subr.mxu0 %v1823
    %3824 = vmatpush2.msra.mxu0 %v1822
    %3825 = vmatprep.subr.mxu0 %v1815
    %3826 = vmatpush2.msra.mxu0 %v1814
    %3827 = vmatprep.subr.mxu0 %v1807
    %3828 = vmatpush2.msra.mxu0 %v1806
    %3829 = vmatprep.subr.mxu0 %v1799
    %3830 = vmatpush2.msra.mxu0 %v1798
    %3831 = vmatprep.subr.mxu0 %v1791
    %3832 = vmatpush2.msra.mxu0 %v1790
    %3833 = vmatprep.subr.mxu0 %v1783
    %3834 = vmatpush2.msra.mxu0 %v1782
    %3835 = vmatprep.mubr.f32.mxu0 %v3547
    %3836 = vmatmul.mubr.f32.gmra.mxu0 %v3546
    %v3837 = vpop.f32.mrf.mxu0
    %v3838 = vadd.f32 0.0, %v3837
    %v3839 = vpop.f32.mrf.mxu0
    %v3840 = vadd.f32 0.0, %v3839
    %3841 = vdwg.mxu0
    %v3842 = vadd.f32 %v3550, %v3625
    %v3843 = vadd.f32 %v3551, %v3627
    %v3844 = vadd.f32 %v3552, %v3696
    %v3845 = vadd.f32 %v3553, %v3698
    %v3846 = vadd.f32 %v3554, %v3767
    %v3847 = vadd.f32 %v3555, %v3769
    %v3848 = vadd.f32 %v3556, %v3838
    %v3849 = vadd.f32 %v3557, %v3840
    %v3850 = vxor.u32 %v3842, 2147483648
    %v3851 = vxor.u32 %v3843, 2147483648
    %v3852 = vmul.f32 %v3850, 1.442695
    %v3853 = vpow.pop %v3852
    %v3854 = vmul.f32 %v3851, 1.442695
    %v3855 = vpow.pop %v3854
    %v3856 = vadd.f32 %v3853, 1.0
    %v3857 = vadd.f32 %v3855, 1.0
    %v3858 = vrcp.pop %v3856
    %v3859 = vmul.f32 1.0, %v3858
    %v3860 = vrcp.pop %v3857
    %v3861 = vmul.f32 1.0, %v3860
    %v3862 = vxor.u32 %v3844, 2147483648
    %v3863 = vxor.u32 %v3845, 2147483648
    %v3864 = vmul.f32 %v3862, 1.442695
    %v3865 = vpow.pop %v3864
    %v3866 = vmul.f32 %v3863, 1.442695
    %v3867 = vpow.pop %v3866
    %v3868 = vadd.f32 %v3865, 1.0
    %v3869 = vadd.f32 %v3867, 1.0
    %v3870 = vrcp.pop %v3868
    %v3871 = vmul.f32 1.0, %v3870
    %v3872 = vrcp.pop %v3869
    %v3873 = vmul.f32 1.0, %v3872
    %v3874 = vtanh.pop %v3846
    %v3875 = vtanh.pop %v3847
    %v3876 = vxor.u32 %v3848, 2147483648
    %v3877 = vxor.u32 %v3849, 2147483648
    %v3878 = vmul.f32 %v3876, 1.442695
    %v3879 = vpow.pop %v3878
    %v3880 = vmul.f32 %v3877, 1.442695
    %v3881 = vpow.pop %v3880
    %v3882 = vadd.f32 %v3879, 1.0
    %v3883 = vadd.f32 %v3881, 1.0
    %v3884 = vrcp.pop %v3882
    %v3885 = vmul.f32 1.0, %v3884
    %v3886 = vrcp.pop %v3883
    %v3887 = vmul.f32 1.0, %v3886
    %v3888 = vmul.f32 %v3871, %v3548
    %v3889 = vmul.f32 %v3873, %v3549
    %v3890 = vmul.f32 %v3859, %v3874
    %v3891 = vmul.f32 %v3861, %v3875
    %v3892 = vadd.f32 %v3888, %v3890
    %v3893 = vadd.f32 %v3889, %v3891
    %v3894 = vtanh.pop %v3892
    %v3895 = vtanh.pop %v3893
    %v3896 = vmul.f32 %v3885, %v3894
    %v3897 = vmul.f32 %v3887, %v3895
    %v3898 = vsel %vm2039, %v3896, %v3544
    %v3899 = vsel %vm2040, %v3897, %v3545
    %v3900 = vsel %vm2066, %v3896, %v3546
    %v3901 = vsel %vm2067, %v3897, %v3547
    %v3902 = vsel %vm2066, %v3892, %v3548
    %v3903 = vsel %vm2067, %v3893, %v3549
    %v3904 = vsel %vm2082, %v2723, %v2681
    %v3905 = vsel %vm2083, %v2731, %v2689
    %v3906 = vsel %vm2084, %v2730, %v2688
    %v3907 = vsel %vm2085, %v2732, %v2690
    %v3908 = vsel %vm2086, %v2740, %v2698
    %v3909 = vsel %vm2087, %v2748, %v2706
    %v3910 = vsel %vm2088, %v2747, %v2705
    %v3911 = vsel %vm2089, %v2749, %v2707
    %3912 = vmatprep.subr.mxu0 %v1769
    %3913 = vmatpush1.msra.mxu0 %v1768
    %3914 = vmatprep.subr.mxu0 %v1761
    %3915 = vmatpush1.msra.mxu0 %v1760
    %3916 = vmatprep.subr.mxu0 %v1753
    %3917 = vmatpush1.msra.mxu0 %v1752
    %3918 = vmatprep.subr.mxu0 %v1745
    %3919 = vmatpush1.msra.mxu0 %v1744
    %3920 = vmatprep.subr.mxu0 %v1737
    %3921 = vmatpush1.msra.mxu0 %v1736
    %3922 = vmatprep.subr.mxu0 %v1729
    %3923 = vmatpush1.msra.mxu0 %v1728
    %3924 = vmatprep.subr.mxu0 %v1721
    %3925 = vmatpush1.msra.mxu0 %v1720
    %3926 = vmatprep.subr.mxu0 %v1713
    %3927 = vmatpush1.msra.mxu0 %v1712
    %3928 = vmatprep.subr.mxu0 %v1705
    %3929 = vmatpush1.msra.mxu0 %v1704
    %3930 = vmatprep.subr.mxu0 %v1697
    %3931 = vmatpush1.msra.mxu0 %v1696
    %3932 = vmatprep.subr.mxu0 %v1689
    %3933 = vmatpush1.msra.mxu0 %v1688
    %3934 = vmatprep.subr.mxu0 %v1681
    %3935 = vmatpush1.msra.mxu0 %v1680
    %3936 = vmatprep.subr.mxu0 %v1673
    %3937 = vmatpush1.msra.mxu0 %v1672
    %3938 = vmatprep.subr.mxu0 %v1665
    %3939 = vmatpush1.msra.mxu0 %v1664
    %3940 = vmatprep.subr.mxu0 %v1657
    %3941 = vmatpush1.msra.mxu0 %v1656
    %3942 = vmatprep.subr.mxu0 %v1649
    %3943 = vmatpush1.msra.mxu0 %v1648
    %3944 = vmatprep.subr.mxu0 %v1897
    %3945 = vmatpush2.msra.mxu0 %v1896
    %3946 = vmatprep.subr.mxu0 %v1889
    %3947 = vmatpush2.msra.mxu0 %v1888
    %3948 = vmatprep.subr.mxu0 %v1881
    %3949 = vmatpush2.msra.mxu0 %v1880
    %3950 = vmatprep.subr.mxu0 %v1873
    %3951 = vmatpush2.msra.mxu0 %v1872
    %3952 = vmatprep.subr.mxu0 %v1865
    %3953 = vmatpush2.msra.mxu0 %v1864
    %3954 = vmatprep.subr.mxu0 %v1857
    %3955 = vmatpush2.msra.mxu0 %v1856
    %3956 = vmatprep.subr.mxu0 %v1849
    %3957 = vmatpush2.msra.mxu0 %v1848
    %3958 = vmatprep.subr.mxu0 %v1841
    %3959 = vmatpush2.msra.mxu0 %v1840
    %3960 = vmatprep.subr.mxu0 %v1833
    %3961 = vmatpush2.msra.mxu0 %v1832
    %3962 = vmatprep.subr.mxu0 %v1825
    %3963 = vmatpush2.msra.mxu0 %v1824
    %3964 = vmatprep.subr.mxu0 %v1817
    %3965 = vmatpush2.msra.mxu0 %v1816
    %3966 = vmatprep.subr.mxu0 %v1809
    %3967 = vmatpush2.msra.mxu0 %v1808
    %3968 = vmatprep.subr.mxu0 %v1801
    %3969 = vmatpush2.msra.mxu0 %v1800
    %3970 = vmatprep.subr.mxu0 %v1793
    %3971 = vmatpush2.msra.mxu0 %v1792
    %3972 = vmatprep.subr.mxu0 %v1785
    %3973 = vmatpush2.msra.mxu0 %v1784
    %3974 = vmatprep.subr.mxu0 %v1777
    %3975 = vmatpush2.msra.mxu0 %v1776
    %3976 = vmatprep.mubr.f32.mxu0 %v3901
    %3977 = vmatmul.mubr.f32.gmra.mxu0 %v3900
    %v3978 = vpop.f32.mrf.mxu0
    %v3979 = vadd.f32 0.0, %v3978
    %v3980 = vpop.f32.mrf.mxu0
    %v3981 = vadd.f32 0.0, %v3980
    %3982 = vdwg.mxu0
    %3983 = vmatprep.subr.mxu0 %v1771
    %3984 = vmatpush1.msra.mxu0 %v1770
    %3985 = vmatprep.subr.mxu0 %v1763
    %3986 = vmatpush1.msra.mxu0 %v1762
    %3987 = vmatprep.subr.mxu0 %v1755
    %3988 = vmatpush1.msra.mxu0 %v1754
    %3989 = vmatprep.subr.mxu0 %v1747
    %3990 = vmatpush1.msra.mxu0 %v1746
    %3991 = vmatprep.subr.mxu0 %v1739
    %3992 = vmatpush1.msra.mxu0 %v1738
    %3993 = vmatprep.subr.mxu0 %v1731
    %3994 = vmatpush1.msra.mxu0 %v1730
    %3995 = vmatprep.subr.mxu0 %v1723
    %3996 = vmatpush1.msra.mxu0 %v1722
    %3997 = vmatprep.subr.mxu0 %v1715
    %3998 = vmatpush1.msra.mxu0 %v1714
    %3999 = vmatprep.subr.mxu0 %v1707
    %4000 = vmatpush1.msra.mxu0 %v1706
    %4001 = vmatprep.subr.mxu0 %v1699
    %4002 = vmatpush1.msra.mxu0 %v1698
    %4003 = vmatprep.subr.mxu0 %v1691
    %4004 = vmatpush1.msra.mxu0 %v1690
    %4005 = vmatprep.subr.mxu0 %v1683
    %4006 = vmatpush1.msra.mxu0 %v1682
    %4007 = vmatprep.subr.mxu0 %v1675
    %4008 = vmatpush1.msra.mxu0 %v1674
    %4009 = vmatprep.subr.mxu0 %v1667
    %4010 = vmatpush1.msra.mxu0 %v1666
    %4011 = vmatprep.subr.mxu0 %v1659
    %4012 = vmatpush1.msra.mxu0 %v1658
    %4013 = vmatprep.subr.mxu0 %v1651
    %4014 = vmatpush1.msra.mxu0 %v1650
    %4015 = vmatprep.subr.mxu0 %v1899
    %4016 = vmatpush2.msra.mxu0 %v1898
    %4017 = vmatprep.subr.mxu0 %v1891
    %4018 = vmatpush2.msra.mxu0 %v1890
    %4019 = vmatprep.subr.mxu0 %v1883
    %4020 = vmatpush2.msra.mxu0 %v1882
    %4021 = vmatprep.subr.mxu0 %v1875
    %4022 = vmatpush2.msra.mxu0 %v1874
    %4023 = vmatprep.subr.mxu0 %v1867
    %4024 = vmatpush2.msra.mxu0 %v1866
    %4025 = vmatprep.subr.mxu0 %v1859
    %4026 = vmatpush2.msra.mxu0 %v1858
    %4027 = vmatprep.subr.mxu0 %v1851
    %4028 = vmatpush2.msra.mxu0 %v1850
    %4029 = vmatprep.subr.mxu0 %v1843
    %4030 = vmatpush2.msra.mxu0 %v1842
    %4031 = vmatprep.subr.mxu0 %v1835
    %4032 = vmatpush2.msra.mxu0 %v1834
    %4033 = vmatprep.subr.mxu0 %v1827
    %4034 = vmatpush2.msra.mxu0 %v1826
    %4035 = vmatprep.subr.mxu0 %v1819
    %4036 = vmatpush2.msra.mxu0 %v1818
    %4037 = vmatprep.subr.mxu0 %v1811
    %4038 = vmatpush2.msra.mxu0 %v1810
    %4039 = vmatprep.subr.mxu0 %v1803
    %4040 = vmatpush2.msra.mxu0 %v1802
    %4041 = vmatprep.subr.mxu0 %v1795
    %4042 = vmatpush2.msra.mxu0 %v1794
    %4043 = vmatprep.subr.mxu0 %v1787
    %4044 = vmatpush2.msra.mxu0 %v1786
    %4045 = vmatprep.subr.mxu0 %v1779
    %4046 = vmatpush2.msra.mxu0 %v1778
    %4047 = vmatprep.mubr.f32.mxu0 %v3901
    %4048 = vmatmul.mubr.f32.gmra.mxu0 %v3900
    %v4049 = vpop.f32.mrf.mxu0
    %v4050 = vadd.f32 0.0, %v4049
    %v4051 = vpop.f32.mrf.mxu0
    %v4052 = vadd.f32 0.0, %v4051
    %4053 = vdwg.mxu0
    %4054 = vmatprep.subr.mxu0 %v1773
    %4055 = vmatpush1.msra.mxu0 %v1772
    %4056 = vmatprep.subr.mxu0 %v1765
    %4057 = vmatpush1.msra.mxu0 %v1764
    %4058 = vmatprep.subr.mxu0 %v1757
    %4059 = vmatpush1.msra.mxu0 %v1756
    %4060 = vmatprep.subr.mxu0 %v1749
    %4061 = vmatpush1.msra.mxu0 %v1748
    %4062 = vmatprep.subr.mxu0 %v1741
    %4063 = vmatpush1.msra.mxu0 %v1740
    %4064 = vmatprep.subr.mxu0 %v1733
    %4065 = vmatpush1.msra.mxu0 %v1732
    %4066 = vmatprep.subr.mxu0 %v1725
    %4067 = vmatpush1.msra.mxu0 %v1724
    %4068 = vmatprep.subr.mxu0 %v1717
    %4069 = vmatpush1.msra.mxu0 %v1716
    %4070 = vmatprep.subr.mxu0 %v1709
    %4071 = vmatpush1.msra.mxu0 %v1708
    %4072 = vmatprep.subr.mxu0 %v1701
    %4073 = vmatpush1.msra.mxu0 %v1700
    %4074 = vmatprep.subr.mxu0 %v1693
    %4075 = vmatpush1.msra.mxu0 %v1692
    %4076 = vmatprep.subr.mxu0 %v1685
    %4077 = vmatpush1.msra.mxu0 %v1684
    %4078 = vmatprep.subr.mxu0 %v1677
    %4079 = vmatpush1.msra.mxu0 %v1676
    %4080 = vmatprep.subr.mxu0 %v1669
    %4081 = vmatpush1.msra.mxu0 %v1668
    %4082 = vmatprep.subr.mxu0 %v1661
    %4083 = vmatpush1.msra.mxu0 %v1660
    %4084 = vmatprep.subr.mxu0 %v1653
    %4085 = vmatpush1.msra.mxu0 %v1652
    %4086 = vmatprep.subr.mxu0 %v1901
    %4087 = vmatpush2.msra.mxu0 %v1900
    %4088 = vmatprep.subr.mxu0 %v1893
    %4089 = vmatpush2.msra.mxu0 %v1892
    %4090 = vmatprep.subr.mxu0 %v1885
    %4091 = vmatpush2.msra.mxu0 %v1884
    %4092 = vmatprep.subr.mxu0 %v1877
    %4093 = vmatpush2.msra.mxu0 %v1876
    %4094 = vmatprep.subr.mxu0 %v1869
    %4095 = vmatpush2.msra.mxu0 %v1868
    %4096 = vmatprep.subr.mxu0 %v1861
    %4097 = vmatpush2.msra.mxu0 %v1860
    %4098 = vmatprep.subr.mxu0 %v1853
    %4099 = vmatpush2.msra.mxu0 %v1852
    %4100 = vmatprep.subr.mxu0 %v1845
    %4101 = vmatpush2.msra.mxu0 %v1844
    %4102 = vmatprep.subr.mxu0 %v1837
    %4103 = vmatpush2.msra.mxu0 %v1836
    %4104 = vmatprep.subr.mxu0 %v1829
    %4105 = vmatpush2.msra.mxu0 %v1828
    %4106 = vmatprep.subr.mxu0 %v1821
    %4107 = vmatpush2.msra.mxu0 %v1820
    %4108 = vmatprep.subr.mxu0 %v1813
    %4109 = vmatpush2.msra.mxu0 %v1812
    %4110 = vmatprep.subr.mxu0 %v1805
    %4111 = vmatpush2.msra.mxu0 %v1804
    %4112 = vmatprep.subr.mxu0 %v1797
    %4113 = vmatpush2.msra.mxu0 %v1796
    %4114 = vmatprep.subr.mxu0 %v1789
    %4115 = vmatpush2.msra.mxu0 %v1788
    %4116 = vmatprep.subr.mxu0 %v1781
    %4117 = vmatpush2.msra.mxu0 %v1780
    %4118 = vmatprep.mubr.f32.mxu0 %v3901
    %4119 = vmatmul.mubr.f32.gmra.mxu0 %v3900
    %v4120 = vpop.f32.mrf.mxu0
    %v4121 = vadd.f32 0.0, %v4120
    %v4122 = vpop.f32.mrf.mxu0
    %v4123 = vadd.f32 0.0, %v4122
    %4124 = vdwg.mxu0
    %4125 = vmatprep.subr.mxu0 %v1775
    %4126 = vmatpush1.msra.mxu0 %v1774
    %4127 = vmatprep.subr.mxu0 %v1767
    %4128 = vmatpush1.msra.mxu0 %v1766
    %4129 = vmatprep.subr.mxu0 %v1759
    %4130 = vmatpush1.msra.mxu0 %v1758
    %4131 = vmatprep.subr.mxu0 %v1751
    %4132 = vmatpush1.msra.mxu0 %v1750
    %4133 = vmatprep.subr.mxu0 %v1743
    %4134 = vmatpush1.msra.mxu0 %v1742
    %4135 = vmatprep.subr.mxu0 %v1735
    %4136 = vmatpush1.msra.mxu0 %v1734
    %4137 = vmatprep.subr.mxu0 %v1727
    %4138 = vmatpush1.msra.mxu0 %v1726
    %4139 = vmatprep.subr.mxu0 %v1719
    %4140 = vmatpush1.msra.mxu0 %v1718
    %4141 = vmatprep.subr.mxu0 %v1711
    %4142 = vmatpush1.msra.mxu0 %v1710
    %4143 = vmatprep.subr.mxu0 %v1703
    %4144 = vmatpush1.msra.mxu0 %v1702
    %4145 = vmatprep.subr.mxu0 %v1695
    %4146 = vmatpush1.msra.mxu0 %v1694
    %4147 = vmatprep.subr.mxu0 %v1687
    %4148 = vmatpush1.msra.mxu0 %v1686
    %4149 = vmatprep.subr.mxu0 %v1679
    %4150 = vmatpush1.msra.mxu0 %v1678
    %4151 = vmatprep.subr.mxu0 %v1671
    %4152 = vmatpush1.msra.mxu0 %v1670
    %4153 = vmatprep.subr.mxu0 %v1663
    %4154 = vmatpush1.msra.mxu0 %v1662
    %4155 = vmatprep.subr.mxu0 %v1655
    %4156 = vmatpush1.msra.mxu0 %v1654
    %4157 = vmatprep.subr.mxu0 %v1903
    %4158 = vmatpush2.msra.mxu0 %v1902
    %4159 = vmatprep.subr.mxu0 %v1895
    %4160 = vmatpush2.msra.mxu0 %v1894
    %4161 = vmatprep.subr.mxu0 %v1887
    %4162 = vmatpush2.msra.mxu0 %v1886
    %4163 = vmatprep.subr.mxu0 %v1879
    %4164 = vmatpush2.msra.mxu0 %v1878
    %4165 = vmatprep.subr.mxu0 %v1871
    %4166 = vmatpush2.msra.mxu0 %v1870
    %4167 = vmatprep.subr.mxu0 %v1863
    %4168 = vmatpush2.msra.mxu0 %v1862
    %4169 = vmatprep.subr.mxu0 %v1855
    %4170 = vmatpush2.msra.mxu0 %v1854
    %4171 = vmatprep.subr.mxu0 %v1847
    %4172 = vmatpush2.msra.mxu0 %v1846
    %4173 = vmatprep.subr.mxu0 %v1839
    %4174 = vmatpush2.msra.mxu0 %v1838
    %4175 = vmatprep.subr.mxu0 %v1831
    %4176 = vmatpush2.msra.mxu0 %v1830
    %4177 = vmatprep.subr.mxu0 %v1823
    %4178 = vmatpush2.msra.mxu0 %v1822
    %4179 = vmatprep.subr.mxu0 %v1815
    %4180 = vmatpush2.msra.mxu0 %v1814
    %4181 = vmatprep.subr.mxu0 %v1807
    %4182 = vmatpush2.msra.mxu0 %v1806
    %4183 = vmatprep.subr.mxu0 %v1799
    %4184 = vmatpush2.msra.mxu0 %v1798
    %4185 = vmatprep.subr.mxu0 %v1791
    %4186 = vmatpush2.msra.mxu0 %v1790
    %4187 = vmatprep.subr.mxu0 %v1783
    %4188 = vmatpush2.msra.mxu0 %v1782
    %4189 = vmatprep.mubr.f32.mxu0 %v3901
    %4190 = vmatmul.mubr.f32.gmra.mxu0 %v3900
    %v4191 = vpop.f32.mrf.mxu0
    %v4192 = vadd.f32 0.0, %v4191
    %v4193 = vpop.f32.mrf.mxu0
    %v4194 = vadd.f32 0.0, %v4193
    %4195 = vdwg.mxu0
    %v4196 = vadd.f32 %v3904, %v3979
    %v4197 = vadd.f32 %v3905, %v3981
    %v4198 = vadd.f32 %v3906, %v4050
    %v4199 = vadd.f32 %v3907, %v4052
    %v4200 = vadd.f32 %v3908, %v4121
    %v4201 = vadd.f32 %v3909, %v4123
    %v4202 = vadd.f32 %v3910, %v4192
    %v4203 = vadd.f32 %v3911, %v4194
    %v4204 = vxor.u32 %v4196, 2147483648
    %v4205 = vxor.u32 %v4197, 2147483648
    %v4206 = vmul.f32 %v4204, 1.442695
    %v4207 = vpow.pop %v4206
    %v4208 = vmul.f32 %v4205, 1.442695
    %v4209 = vpow.pop %v4208
    %v4210 = vadd.f32 %v4207, 1.0
    %v4211 = vadd.f32 %v4209, 1.0
    %v4212 = vrcp.pop %v4210
    %v4213 = vmul.f32 1.0, %v4212
    %v4214 = vrcp.pop %v4211
    %v4215 = vmul.f32 1.0, %v4214
    %v4216 = vxor.u32 %v4198, 2147483648
    %v4217 = vxor.u32 %v4199, 2147483648
    %v4218 = vmul.f32 %v4216, 1.442695
    %v4219 = vpow.pop %v4218
    %v4220 = vmul.f32 %v4217, 1.442695
    %v4221 = vpow.pop %v4220
    %v4222 = vadd.f32 %v4219, 1.0
    %v4223 = vadd.f32 %v4221, 1.0
    %v4224 = vrcp.pop %v4222
    %v4225 = vmul.f32 1.0, %v4224
    %v4226 = vrcp.pop %v4223
    %v4227 = vmul.f32 1.0, %v4226
    %v4228 = vtanh.pop %v4200
    %v4229 = vtanh.pop %v4201
    %v4230 = vxor.u32 %v4202, 2147483648
    %v4231 = vxor.u32 %v4203, 2147483648
    %v4232 = vmul.f32 %v4230, 1.442695
    %v4233 = vpow.pop %v4232
    %v4234 = vmul.f32 %v4231, 1.442695
    %v4235 = vpow.pop %v4234
    %v4236 = vadd.f32 %v4233, 1.0
    %v4237 = vadd.f32 %v4235, 1.0
    %v4238 = vrcp.pop %v4236
    %v4239 = vmul.f32 1.0, %v4238
    %v4240 = vrcp.pop %v4237
    %v4241 = vmul.f32 1.0, %v4240
    %v4242 = vmul.f32 %v4225, %v3902
    %v4243 = vmul.f32 %v4227, %v3903
    %v4244 = vmul.f32 %v4213, %v4228
    %v4245 = vmul.f32 %v4215, %v4229
    %v4246 = vadd.f32 %v4242, %v4244
    %v4247 = vadd.f32 %v4243, %v4245
    %v4248 = vtanh.pop %v4246
    %v4249 = vtanh.pop %v4247
    %v4250 = vmul.f32 %v4239, %v4248
    %v4251 = vmul.f32 %v4241, %v4249
    %v4252 = vsel %vm2041, %v4250, %v3898
    %v4253 = vsel %vm2042, %v4251, %v3899
    %v4254 = vsel %vm2068, %v4250, %v3900
    %v4255 = vsel %vm2069, %v4251, %v3901
    %v4256 = vsel %vm2068, %v4246, %v3902
    %v4257 = vsel %vm2069, %v4247, %v3903
    %v4258 = vsel %vm2082, %v2285, %v2243
    %v4259 = vsel %vm2083, %v2293, %v2251
    %v4260 = vsel %vm2084, %v2292, %v2250
    %v4261 = vsel %vm2085, %v2294, %v2252
    %v4262 = vsel %vm2086, %v2302, %v2260
    %v4263 = vsel %vm2087, %v2310, %v2268
    %v4264 = vsel %vm2088, %v2309, %v2267
    %v4265 = vsel %vm2089, %v2311, %v2269
    %4266 = vmatprep.subr.mxu0 %v1769
    %4267 = vmatpush1.msra.mxu0 %v1768
    %4268 = vmatprep.subr.mxu0 %v1761
    %4269 = vmatpush1.msra.mxu0 %v1760
    %4270 = vmatprep.subr.mxu0 %v1753
    %4271 = vmatpush1.msra.mxu0 %v1752
    %4272 = vmatprep.subr.mxu0 %v1745
    %4273 = vmatpush1.msra.mxu0 %v1744
    %4274 = vmatprep.subr.mxu0 %v1737
    %4275 = vmatpush1.msra.mxu0 %v1736
    %4276 = vmatprep.subr.mxu0 %v1729
    %4277 = vmatpush1.msra.mxu0 %v1728
    %4278 = vmatprep.subr.mxu0 %v1721
    %4279 = vmatpush1.msra.mxu0 %v1720
    %4280 = vmatprep.subr.mxu0 %v1713
    %4281 = vmatpush1.msra.mxu0 %v1712
    %4282 = vmatprep.subr.mxu0 %v1705
    %4283 = vmatpush1.msra.mxu0 %v1704
    %4284 = vmatprep.subr.mxu0 %v1697
    %4285 = vmatpush1.msra.mxu0 %v1696
    %4286 = vmatprep.subr.mxu0 %v1689
    %4287 = vmatpush1.msra.mxu0 %v1688
    %4288 = vmatprep.subr.mxu0 %v1681
    %4289 = vmatpush1.msra.mxu0 %v1680
    %4290 = vmatprep.subr.mxu0 %v1673
    %4291 = vmatpush1.msra.mxu0 %v1672
    %4292 = vmatprep.subr.mxu0 %v1665
    %4293 = vmatpush1.msra.mxu0 %v1664
    %4294 = vmatprep.subr.mxu0 %v1657
    %4295 = vmatpush1.msra.mxu0 %v1656
    %4296 = vmatprep.subr.mxu0 %v1649
    %4297 = vmatpush1.msra.mxu0 %v1648
    %4298 = vmatprep.subr.mxu0 %v1897
    %4299 = vmatpush2.msra.mxu0 %v1896
    %4300 = vmatprep.subr.mxu0 %v1889
    %4301 = vmatpush2.msra.mxu0 %v1888
    %4302 = vmatprep.subr.mxu0 %v1881
    %4303 = vmatpush2.msra.mxu0 %v1880
    %4304 = vmatprep.subr.mxu0 %v1873
    %4305 = vmatpush2.msra.mxu0 %v1872
    %4306 = vmatprep.subr.mxu0 %v1865
    %4307 = vmatpush2.msra.mxu0 %v1864
    %4308 = vmatprep.subr.mxu0 %v1857
    %4309 = vmatpush2.msra.mxu0 %v1856
    %4310 = vmatprep.subr.mxu0 %v1849
    %4311 = vmatpush2.msra.mxu0 %v1848
    %4312 = vmatprep.subr.mxu0 %v1841
    %4313 = vmatpush2.msra.mxu0 %v1840
    %4314 = vmatprep.subr.mxu0 %v1833
    %4315 = vmatpush2.msra.mxu0 %v1832
    %4316 = vmatprep.subr.mxu0 %v1825
    %4317 = vmatpush2.msra.mxu0 %v1824
    %4318 = vmatprep.subr.mxu0 %v1817
    %4319 = vmatpush2.msra.mxu0 %v1816
    %4320 = vmatprep.subr.mxu0 %v1809
    %4321 = vmatpush2.msra.mxu0 %v1808
    %4322 = vmatprep.subr.mxu0 %v1801
    %4323 = vmatpush2.msra.mxu0 %v1800
    %4324 = vmatprep.subr.mxu0 %v1793
    %4325 = vmatpush2.msra.mxu0 %v1792
    %4326 = vmatprep.subr.mxu0 %v1785
    %4327 = vmatpush2.msra.mxu0 %v1784
    %4328 = vmatprep.subr.mxu0 %v1777
    %4329 = vmatpush2.msra.mxu0 %v1776
    %4330 = vmatprep.mubr.f32.mxu0 %v4255
    %4331 = vmatmul.mubr.f32.gmra.mxu0 %v4254
    %v4332 = vpop.f32.mrf.mxu0
    %v4333 = vadd.f32 0.0, %v4332
    %v4334 = vpop.f32.mrf.mxu0
    %v4335 = vadd.f32 0.0, %v4334
    %4336 = vdwg.mxu0
    %4337 = vmatprep.subr.mxu0 %v1771
    %4338 = vmatpush1.msra.mxu0 %v1770
    %4339 = vmatprep.subr.mxu0 %v1763
    %4340 = vmatpush1.msra.mxu0 %v1762
    %4341 = vmatprep.subr.mxu0 %v1755
    %4342 = vmatpush1.msra.mxu0 %v1754
    %4343 = vmatprep.subr.mxu0 %v1747
    %4344 = vmatpush1.msra.mxu0 %v1746
    %4345 = vmatprep.subr.mxu0 %v1739
    %4346 = vmatpush1.msra.mxu0 %v1738
    %4347 = vmatprep.subr.mxu0 %v1731
    %4348 = vmatpush1.msra.mxu0 %v1730
    %4349 = vmatprep.subr.mxu0 %v1723
    %4350 = vmatpush1.msra.mxu0 %v1722
    %4351 = vmatprep.subr.mxu0 %v1715
    %4352 = vmatpush1.msra.mxu0 %v1714
    %4353 = vmatprep.subr.mxu0 %v1707
    %4354 = vmatpush1.msra.mxu0 %v1706
    %4355 = vmatprep.subr.mxu0 %v1699
    %4356 = vmatpush1.msra.mxu0 %v1698
    %4357 = vmatprep.subr.mxu0 %v1691
    %4358 = vmatpush1.msra.mxu0 %v1690
    %4359 = vmatprep.subr.mxu0 %v1683
    %4360 = vmatpush1.msra.mxu0 %v1682
    %4361 = vmatprep.subr.mxu0 %v1675
    %4362 = vmatpush1.msra.mxu0 %v1674
    %4363 = vmatprep.subr.mxu0 %v1667
    %4364 = vmatpush1.msra.mxu0 %v1666
    %4365 = vmatprep.subr.mxu0 %v1659
    %4366 = vmatpush1.msra.mxu0 %v1658
    %4367 = vmatprep.subr.mxu0 %v1651
    %4368 = vmatpush1.msra.mxu0 %v1650
    %4369 = vmatprep.subr.mxu0 %v1899
    %4370 = vmatpush2.msra.mxu0 %v1898
    %4371 = vmatprep.subr.mxu0 %v1891
    %4372 = vmatpush2.msra.mxu0 %v1890
    %4373 = vmatprep.subr.mxu0 %v1883
    %4374 = vmatpush2.msra.mxu0 %v1882
    %4375 = vmatprep.subr.mxu0 %v1875
    %4376 = vmatpush2.msra.mxu0 %v1874
    %4377 = vmatprep.subr.mxu0 %v1867
    %4378 = vmatpush2.msra.mxu0 %v1866
    %4379 = vmatprep.subr.mxu0 %v1859
    %4380 = vmatpush2.msra.mxu0 %v1858
    %4381 = vmatprep.subr.mxu0 %v1851
    %4382 = vmatpush2.msra.mxu0 %v1850
    %4383 = vmatprep.subr.mxu0 %v1843
    %4384 = vmatpush2.msra.mxu0 %v1842
    %4385 = vmatprep.subr.mxu0 %v1835
    %4386 = vmatpush2.msra.mxu0 %v1834
    %4387 = vmatprep.subr.mxu0 %v1827
    %4388 = vmatpush2.msra.mxu0 %v1826
    %4389 = vmatprep.subr.mxu0 %v1819
    %4390 = vmatpush2.msra.mxu0 %v1818
    %4391 = vmatprep.subr.mxu0 %v1811
    %4392 = vmatpush2.msra.mxu0 %v1810
    %4393 = vmatprep.subr.mxu0 %v1803
    %4394 = vmatpush2.msra.mxu0 %v1802
    %4395 = vmatprep.subr.mxu0 %v1795
    %4396 = vmatpush2.msra.mxu0 %v1794
    %4397 = vmatprep.subr.mxu0 %v1787
    %4398 = vmatpush2.msra.mxu0 %v1786
    %4399 = vmatprep.subr.mxu0 %v1779
    %4400 = vmatpush2.msra.mxu0 %v1778
    %4401 = vmatprep.mubr.f32.mxu0 %v4255
    %4402 = vmatmul.mubr.f32.gmra.mxu0 %v4254
    %v4403 = vpop.f32.mrf.mxu0
    %v4404 = vadd.f32 0.0, %v4403
    %v4405 = vpop.f32.mrf.mxu0
    %v4406 = vadd.f32 0.0, %v4405
    %4407 = vdwg.mxu0
    %4408 = vmatprep.subr.mxu0 %v1773
    %4409 = vmatpush1.msra.mxu0 %v1772
    %4410 = vmatprep.subr.mxu0 %v1765
    %4411 = vmatpush1.msra.mxu0 %v1764
    %4412 = vmatprep.subr.mxu0 %v1757
    %4413 = vmatpush1.msra.mxu0 %v1756
    %4414 = vmatprep.subr.mxu0 %v1749
    %4415 = vmatpush1.msra.mxu0 %v1748
    %4416 = vmatprep.subr.mxu0 %v1741
    %4417 = vmatpush1.msra.mxu0 %v1740
    %4418 = vmatprep.subr.mxu0 %v1733
    %4419 = vmatpush1.msra.mxu0 %v1732
    %4420 = vmatprep.subr.mxu0 %v1725
    %4421 = vmatpush1.msra.mxu0 %v1724
    %4422 = vmatprep.subr.mxu0 %v1717
    %4423 = vmatpush1.msra.mxu0 %v1716
    %4424 = vmatprep.subr.mxu0 %v1709
    %4425 = vmatpush1.msra.mxu0 %v1708
    %4426 = vmatprep.subr.mxu0 %v1701
    %4427 = vmatpush1.msra.mxu0 %v1700
    %4428 = vmatprep.subr.mxu0 %v1693
    %4429 = vmatpush1.msra.mxu0 %v1692
    %4430 = vmatprep.subr.mxu0 %v1685
    %4431 = vmatpush1.msra.mxu0 %v1684
    %4432 = vmatprep.subr.mxu0 %v1677
    %4433 = vmatpush1.msra.mxu0 %v1676
    %4434 = vmatprep.subr.mxu0 %v1669
    %4435 = vmatpush1.msra.mxu0 %v1668
    %4436 = vmatprep.subr.mxu0 %v1661
    %4437 = vmatpush1.msra.mxu0 %v1660
    %4438 = vmatprep.subr.mxu0 %v1653
    %4439 = vmatpush1.msra.mxu0 %v1652
    %4440 = vmatprep.subr.mxu0 %v1901
    %4441 = vmatpush2.msra.mxu0 %v1900
    %4442 = vmatprep.subr.mxu0 %v1893
    %4443 = vmatpush2.msra.mxu0 %v1892
    %4444 = vmatprep.subr.mxu0 %v1885
    %4445 = vmatpush2.msra.mxu0 %v1884
    %4446 = vmatprep.subr.mxu0 %v1877
    %4447 = vmatpush2.msra.mxu0 %v1876
    %4448 = vmatprep.subr.mxu0 %v1869
    %4449 = vmatpush2.msra.mxu0 %v1868
    %4450 = vmatprep.subr.mxu0 %v1861
    %4451 = vmatpush2.msra.mxu0 %v1860
    %4452 = vmatprep.subr.mxu0 %v1853
    %4453 = vmatpush2.msra.mxu0 %v1852
    %4454 = vmatprep.subr.mxu0 %v1845
    %4455 = vmatpush2.msra.mxu0 %v1844
    %4456 = vmatprep.subr.mxu0 %v1837
    %4457 = vmatpush2.msra.mxu0 %v1836
    %4458 = vmatprep.subr.mxu0 %v1829
    %4459 = vmatpush2.msra.mxu0 %v1828
    %4460 = vmatprep.subr.mxu0 %v1821
    %4461 = vmatpush2.msra.mxu0 %v1820
    %4462 = vmatprep.subr.mxu0 %v1813
    %4463 = vmatpush2.msra.mxu0 %v1812
    %4464 = vmatprep.subr.mxu0 %v1805
    %4465 = vmatpush2.msra.mxu0 %v1804
    %4466 = vmatprep.subr.mxu0 %v1797
    %4467 = vmatpush2.msra.mxu0 %v1796
    %4468 = vmatprep.subr.mxu0 %v1789
    %4469 = vmatpush2.msra.mxu0 %v1788
    %4470 = vmatprep.subr.mxu0 %v1781
    %4471 = vmatpush2.msra.mxu0 %v1780
    %4472 = vmatprep.mubr.f32.mxu0 %v4255
    %4473 = vmatmul.mubr.f32.gmra.mxu0 %v4254
    %v4474 = vpop.f32.mrf.mxu0
    %v4475 = vadd.f32 0.0, %v4474
    %v4476 = vpop.f32.mrf.mxu0
    %v4477 = vadd.f32 0.0, %v4476
    %4478 = vdwg.mxu0
    %4479 = vmatprep.subr.mxu0 %v1775
    %4480 = vmatpush1.msra.mxu0 %v1774
    %4481 = vmatprep.subr.mxu0 %v1767
    %4482 = vmatpush1.msra.mxu0 %v1766
    %4483 = vmatprep.subr.mxu0 %v1759
    %4484 = vmatpush1.msra.mxu0 %v1758
    %4485 = vmatprep.subr.mxu0 %v1751
    %4486 = vmatpush1.msra.mxu0 %v1750
    %4487 = vmatprep.subr.mxu0 %v1743
    %4488 = vmatpush1.msra.mxu0 %v1742
    %4489 = vmatprep.subr.mxu0 %v1735
    %4490 = vmatpush1.msra.mxu0 %v1734
    %4491 = vmatprep.subr.mxu0 %v1727
    %4492 = vmatpush1.msra.mxu0 %v1726
    %4493 = vmatprep.subr.mxu0 %v1719
    %4494 = vmatpush1.msra.mxu0 %v1718
    %4495 = vmatprep.subr.mxu0 %v1711
    %4496 = vmatpush1.msra.mxu0 %v1710
    %4497 = vmatprep.subr.mxu0 %v1703
    %4498 = vmatpush1.msra.mxu0 %v1702
    %4499 = vmatprep.subr.mxu0 %v1695
    %4500 = vmatpush1.msra.mxu0 %v1694
    %4501 = vmatprep.subr.mxu0 %v1687
    %4502 = vmatpush1.msra.mxu0 %v1686
    %4503 = vmatprep.subr.mxu0 %v1679
    %4504 = vmatpush1.msra.mxu0 %v1678
    %4505 = vmatprep.subr.mxu0 %v1671
    %4506 = vmatpush1.msra.mxu0 %v1670
    %4507 = vmatprep.subr.mxu0 %v1663
    %4508 = vmatpush1.msra.mxu0 %v1662
    %4509 = vmatprep.subr.mxu0 %v1655
    %4510 = vmatpush1.msra.mxu0 %v1654
    %4511 = vmatprep.subr.mxu0 %v1903
    %4512 = vmatpush2.msra.mxu0 %v1902
    %4513 = vmatprep.subr.mxu0 %v1895
    %4514 = vmatpush2.msra.mxu0 %v1894
    %4515 = vmatprep.subr.mxu0 %v1887
    %4516 = vmatpush2.msra.mxu0 %v1886
    %4517 = vmatprep.subr.mxu0 %v1879
    %4518 = vmatpush2.msra.mxu0 %v1878
    %4519 = vmatprep.subr.mxu0 %v1871
    %4520 = vmatpush2.msra.mxu0 %v1870
    %4521 = vmatprep.subr.mxu0 %v1863
    %4522 = vmatpush2.msra.mxu0 %v1862
    %4523 = vmatprep.subr.mxu0 %v1855
    %4524 = vmatpush2.msra.mxu0 %v1854
    %4525 = vmatprep.subr.mxu0 %v1847
    %4526 = vmatpush2.msra.mxu0 %v1846
    %4527 = vmatprep.subr.mxu0 %v1839
    %4528 = vmatpush2.msra.mxu0 %v1838
    %4529 = vmatprep.subr.mxu0 %v1831
    %4530 = vmatpush2.msra.mxu0 %v1830
    %4531 = vmatprep.subr.mxu0 %v1823
    %4532 = vmatpush2.msra.mxu0 %v1822
    %4533 = vmatprep.subr.mxu0 %v1815
    %4534 = vmatpush2.msra.mxu0 %v1814
    %4535 = vmatprep.subr.mxu0 %v1807
    %4536 = vmatpush2.msra.mxu0 %v1806
    %4537 = vmatprep.subr.mxu0 %v1799
    %4538 = vmatpush2.msra.mxu0 %v1798
    %4539 = vmatprep.subr.mxu0 %v1791
    %4540 = vmatpush2.msra.mxu0 %v1790
    %4541 = vmatprep.subr.mxu0 %v1783
    %4542 = vmatpush2.msra.mxu0 %v1782
    %4543 = vmatprep.mubr.f32.mxu0 %v4255
    %4544 = vmatmul.mubr.f32.gmra.mxu0 %v4254
    %v4545 = vpop.f32.mrf.mxu0
    %v4546 = vadd.f32 0.0, %v4545
    %v4547 = vpop.f32.mrf.mxu0
    %v4548 = vadd.f32 0.0, %v4547
    %4549 = vdwg.mxu0
    %v4550 = vadd.f32 %v4258, %v4333
    %v4551 = vadd.f32 %v4259, %v4335
    %v4552 = vadd.f32 %v4260, %v4404
    %v4553 = vadd.f32 %v4261, %v4406
    %v4554 = vadd.f32 %v4262, %v4475
    %v4555 = vadd.f32 %v4263, %v4477
    %v4556 = vadd.f32 %v4264, %v4546
    %v4557 = vadd.f32 %v4265, %v4548
    %v4558 = vxor.u32 %v4550, 2147483648
    %v4559 = vxor.u32 %v4551, 2147483648
    %v4560 = vmul.f32 %v4558, 1.442695
    %v4561 = vpow.pop %v4560
    %v4562 = vmul.f32 %v4559, 1.442695
    %v4563 = vpow.pop %v4562
    %v4564 = vadd.f32 %v4561, 1.0
    %v4565 = vadd.f32 %v4563, 1.0
    %v4566 = vrcp.pop %v4564
    %v4567 = vmul.f32 1.0, %v4566
    %v4568 = vrcp.pop %v4565
    %v4569 = vmul.f32 1.0, %v4568
    %v4570 = vxor.u32 %v4552, 2147483648
    %v4571 = vxor.u32 %v4553, 2147483648
    %v4572 = vmul.f32 %v4570, 1.442695
    %v4573 = vpow.pop %v4572
    %v4574 = vmul.f32 %v4571, 1.442695
    %v4575 = vpow.pop %v4574
    %v4576 = vadd.f32 %v4573, 1.0
    %v4577 = vadd.f32 %v4575, 1.0
    %v4578 = vrcp.pop %v4576
    %v4579 = vmul.f32 1.0, %v4578
    %v4580 = vrcp.pop %v4577
    %v4581 = vmul.f32 1.0, %v4580
    %v4582 = vtanh.pop %v4554
    %v4583 = vtanh.pop %v4555
    %v4584 = vxor.u32 %v4556, 2147483648
    %v4585 = vxor.u32 %v4557, 2147483648
    %v4586 = vmul.f32 %v4584, 1.442695
    %v4587 = vpow.pop %v4586
    %v4588 = vmul.f32 %v4585, 1.442695
    %v4589 = vpow.pop %v4588
    %v4590 = vadd.f32 %v4587, 1.0
    %v4591 = vadd.f32 %v4589, 1.0
    %v4592 = vrcp.pop %v4590
    %v4593 = vmul.f32 1.0, %v4592
    %v4594 = vrcp.pop %v4591
    %v4595 = vmul.f32 1.0, %v4594
    %v4596 = vmul.f32 %v4579, %v4256
    %v4597 = vmul.f32 %v4581, %v4257
    %v4598 = vmul.f32 %v4567, %v4582
    %v4599 = vmul.f32 %v4569, %v4583
    %v4600 = vadd.f32 %v4596, %v4598
    %v4601 = vadd.f32 %v4597, %v4599
    %v4602 = vtanh.pop %v4600
    %v4603 = vtanh.pop %v4601
    %v4604 = vmul.f32 %v4593, %v4602
    %v4605 = vmul.f32 %v4595, %v4603
    %v4606 = vsel %vm2043, %v4604, %v4252
    %v4607 = vsel %vm2044, %v4605, %v4253
    %v4608 = vsel %vm2070, %v4604, %v4254
    %v4609 = vsel %vm2071, %v4605, %v4255
    %v4610 = vsel %vm2070, %v4600, %v4256
    %v4611 = vsel %vm2071, %v4601, %v4257
    %v4612 = vsel %vm2082, %v2139, %v2097
    %v4613 = vsel %vm2083, %v2147, %v2105
    %v4614 = vsel %vm2084, %v2146, %v2104
    %v4615 = vsel %vm2085, %v2148, %v2106
    %v4616 = vsel %vm2086, %v2156, %v2114
    %v4617 = vsel %vm2087, %v2164, %v2122
    %v4618 = vsel %vm2088, %v2163, %v2121
    %v4619 = vsel %vm2089, %v2165, %v2123
    %4620 = vmatprep.subr.mxu0 %v1769
    %4621 = vmatpush1.msra.mxu0 %v1768
    %4622 = vmatprep.subr.mxu0 %v1761
    %4623 = vmatpush1.msra.mxu0 %v1760
    %4624 = vmatprep.subr.mxu0 %v1753
    %4625 = vmatpush1.msra.mxu0 %v1752
    %4626 = vmatprep.subr.mxu0 %v1745
    %4627 = vmatpush1.msra.mxu0 %v1744
    %4628 = vmatprep.subr.mxu0 %v1737
    %4629 = vmatpush1.msra.mxu0 %v1736
    %4630 = vmatprep.subr.mxu0 %v1729
    %4631 = vmatpush1.msra.mxu0 %v1728
    %4632 = vmatprep.subr.mxu0 %v1721
    %4633 = vmatpush1.msra.mxu0 %v1720
    %4634 = vmatprep.subr.mxu0 %v1713
    %4635 = vmatpush1.msra.mxu0 %v1712
    %4636 = vmatprep.subr.mxu0 %v1705
    %4637 = vmatpush1.msra.mxu0 %v1704
    %4638 = vmatprep.subr.mxu0 %v1697
    %4639 = vmatpush1.msra.mxu0 %v1696
    %4640 = vmatprep.subr.mxu0 %v1689
    %4641 = vmatpush1.msra.mxu0 %v1688
    %4642 = vmatprep.subr.mxu0 %v1681
    %4643 = vmatpush1.msra.mxu0 %v1680
    %4644 = vmatprep.subr.mxu0 %v1673
    %4645 = vmatpush1.msra.mxu0 %v1672
    %4646 = vmatprep.subr.mxu0 %v1665
    %4647 = vmatpush1.msra.mxu0 %v1664
    %4648 = vmatprep.subr.mxu0 %v1657
    %4649 = vmatpush1.msra.mxu0 %v1656
    %4650 = vmatprep.subr.mxu0 %v1649
    %4651 = vmatpush1.msra.mxu0 %v1648
    %4652 = vmatprep.subr.mxu0 %v1897
    %4653 = vmatpush2.msra.mxu0 %v1896
    %4654 = vmatprep.subr.mxu0 %v1889
    %4655 = vmatpush2.msra.mxu0 %v1888
    %4656 = vmatprep.subr.mxu0 %v1881
    %4657 = vmatpush2.msra.mxu0 %v1880
    %4658 = vmatprep.subr.mxu0 %v1873
    %4659 = vmatpush2.msra.mxu0 %v1872
    %4660 = vmatprep.subr.mxu0 %v1865
    %4661 = vmatpush2.msra.mxu0 %v1864
    %4662 = vmatprep.subr.mxu0 %v1857
    %4663 = vmatpush2.msra.mxu0 %v1856
    %4664 = vmatprep.subr.mxu0 %v1849
    %4665 = vmatpush2.msra.mxu0 %v1848
    %4666 = vmatprep.subr.mxu0 %v1841
    %4667 = vmatpush2.msra.mxu0 %v1840
    %4668 = vmatprep.subr.mxu0 %v1833
    %4669 = vmatpush2.msra.mxu0 %v1832
    %4670 = vmatprep.subr.mxu0 %v1825
    %4671 = vmatpush2.msra.mxu0 %v1824
    %4672 = vmatprep.subr.mxu0 %v1817
    %4673 = vmatpush2.msra.mxu0 %v1816
    %4674 = vmatprep.subr.mxu0 %v1809
    %4675 = vmatpush2.msra.mxu0 %v1808
    %4676 = vmatprep.subr.mxu0 %v1801
    %4677 = vmatpush2.msra.mxu0 %v1800
    %4678 = vmatprep.subr.mxu0 %v1793
    %4679 = vmatpush2.msra.mxu0 %v1792
    %4680 = vmatprep.subr.mxu0 %v1785
    %4681 = vmatpush2.msra.mxu0 %v1784
    %4682 = vmatprep.subr.mxu0 %v1777
    %4683 = vmatpush2.msra.mxu0 %v1776
    %4684 = vmatprep.mubr.f32.mxu0 %v4609
    %4685 = vmatmul.mubr.f32.gmra.mxu0 %v4608
    %v4686 = vpop.f32.mrf.mxu0
    %v4687 = vadd.f32 0.0, %v4686
    %v4688 = vpop.f32.mrf.mxu0
    %v4689 = vadd.f32 0.0, %v4688
    %4690 = vdwg.mxu0
    %4691 = vmatprep.subr.mxu0 %v1771
    %4692 = vmatpush1.msra.mxu0 %v1770
    %4693 = vmatprep.subr.mxu0 %v1763
    %4694 = vmatpush1.msra.mxu0 %v1762
    %4695 = vmatprep.subr.mxu0 %v1755
    %4696 = vmatpush1.msra.mxu0 %v1754
    %4697 = vmatprep.subr.mxu0 %v1747
    %4698 = vmatpush1.msra.mxu0 %v1746
    %4699 = vmatprep.subr.mxu0 %v1739
    %4700 = vmatpush1.msra.mxu0 %v1738
    %4701 = vmatprep.subr.mxu0 %v1731
    %4702 = vmatpush1.msra.mxu0 %v1730
    %4703 = vmatprep.subr.mxu0 %v1723
    %4704 = vmatpush1.msra.mxu0 %v1722
    %4705 = vmatprep.subr.mxu0 %v1715
    %4706 = vmatpush1.msra.mxu0 %v1714
    %4707 = vmatprep.subr.mxu0 %v1707
    %4708 = vmatpush1.msra.mxu0 %v1706
    %4709 = vmatprep.subr.mxu0 %v1699
    %4710 = vmatpush1.msra.mxu0 %v1698
    %4711 = vmatprep.subr.mxu0 %v1691
    %4712 = vmatpush1.msra.mxu0 %v1690
    %4713 = vmatprep.subr.mxu0 %v1683
    %4714 = vmatpush1.msra.mxu0 %v1682
    %4715 = vmatprep.subr.mxu0 %v1675
    %4716 = vmatpush1.msra.mxu0 %v1674
    %4717 = vmatprep.subr.mxu0 %v1667
    %4718 = vmatpush1.msra.mxu0 %v1666
    %4719 = vmatprep.subr.mxu0 %v1659
    %4720 = vmatpush1.msra.mxu0 %v1658
    %4721 = vmatprep.subr.mxu0 %v1651
    %4722 = vmatpush1.msra.mxu0 %v1650
    %4723 = vmatprep.subr.mxu0 %v1899
    %4724 = vmatpush2.msra.mxu0 %v1898
    %4725 = vmatprep.subr.mxu0 %v1891
    %4726 = vmatpush2.msra.mxu0 %v1890
    %4727 = vmatprep.subr.mxu0 %v1883
    %4728 = vmatpush2.msra.mxu0 %v1882
    %4729 = vmatprep.subr.mxu0 %v1875
    %4730 = vmatpush2.msra.mxu0 %v1874
    %4731 = vmatprep.subr.mxu0 %v1867
    %4732 = vmatpush2.msra.mxu0 %v1866
    %4733 = vmatprep.subr.mxu0 %v1859
    %4734 = vmatpush2.msra.mxu0 %v1858
    %4735 = vmatprep.subr.mxu0 %v1851
    %4736 = vmatpush2.msra.mxu0 %v1850
    %4737 = vmatprep.subr.mxu0 %v1843
    %4738 = vmatpush2.msra.mxu0 %v1842
    %4739 = vmatprep.subr.mxu0 %v1835
    %4740 = vmatpush2.msra.mxu0 %v1834
    %4741 = vmatprep.subr.mxu0 %v1827
    %4742 = vmatpush2.msra.mxu0 %v1826
    %4743 = vmatprep.subr.mxu0 %v1819
    %4744 = vmatpush2.msra.mxu0 %v1818
    %4745 = vmatprep.subr.mxu0 %v1811
    %4746 = vmatpush2.msra.mxu0 %v1810
    %4747 = vmatprep.subr.mxu0 %v1803
    %4748 = vmatpush2.msra.mxu0 %v1802
    %4749 = vmatprep.subr.mxu0 %v1795
    %4750 = vmatpush2.msra.mxu0 %v1794
    %4751 = vmatprep.subr.mxu0 %v1787
    %4752 = vmatpush2.msra.mxu0 %v1786
    %4753 = vmatprep.subr.mxu0 %v1779
    %4754 = vmatpush2.msra.mxu0 %v1778
    %4755 = vmatprep.mubr.f32.mxu0 %v4609
    %4756 = vmatmul.mubr.f32.gmra.mxu0 %v4608
    %v4757 = vpop.f32.mrf.mxu0
    %v4758 = vadd.f32 0.0, %v4757
    %v4759 = vpop.f32.mrf.mxu0
    %v4760 = vadd.f32 0.0, %v4759
    %4761 = vdwg.mxu0
    %4762 = vmatprep.subr.mxu0 %v1773
    %4763 = vmatpush1.msra.mxu0 %v1772
    %4764 = vmatprep.subr.mxu0 %v1765
    %4765 = vmatpush1.msra.mxu0 %v1764
    %4766 = vmatprep.subr.mxu0 %v1757
    %4767 = vmatpush1.msra.mxu0 %v1756
    %4768 = vmatprep.subr.mxu0 %v1749
    %4769 = vmatpush1.msra.mxu0 %v1748
    %4770 = vmatprep.subr.mxu0 %v1741
    %4771 = vmatpush1.msra.mxu0 %v1740
    %4772 = vmatprep.subr.mxu0 %v1733
    %4773 = vmatpush1.msra.mxu0 %v1732
    %4774 = vmatprep.subr.mxu0 %v1725
    %4775 = vmatpush1.msra.mxu0 %v1724
    %4776 = vmatprep.subr.mxu0 %v1717
    %4777 = vmatpush1.msra.mxu0 %v1716
    %4778 = vmatprep.subr.mxu0 %v1709
    %4779 = vmatpush1.msra.mxu0 %v1708
    %4780 = vmatprep.subr.mxu0 %v1701
    %4781 = vmatpush1.msra.mxu0 %v1700
    %4782 = vmatprep.subr.mxu0 %v1693
    %4783 = vmatpush1.msra.mxu0 %v1692
    %4784 = vmatprep.subr.mxu0 %v1685
    %4785 = vmatpush1.msra.mxu0 %v1684
    %4786 = vmatprep.subr.mxu0 %v1677
    %4787 = vmatpush1.msra.mxu0 %v1676
    %4788 = vmatprep.subr.mxu0 %v1669
    %4789 = vmatpush1.msra.mxu0 %v1668
    %4790 = vmatprep.subr.mxu0 %v1661
    %4791 = vmatpush1.msra.mxu0 %v1660
    %4792 = vmatprep.subr.mxu0 %v1653
    %4793 = vmatpush1.msra.mxu0 %v1652
    %4794 = vmatprep.subr.mxu0 %v1901
    %4795 = vmatpush2.msra.mxu0 %v1900
    %4796 = vmatprep.subr.mxu0 %v1893
    %4797 = vmatpush2.msra.mxu0 %v1892
    %4798 = vmatprep.subr.mxu0 %v1885
    %4799 = vmatpush2.msra.mxu0 %v1884
    %4800 = vmatprep.subr.mxu0 %v1877
    %4801 = vmatpush2.msra.mxu0 %v1876
    %4802 = vmatprep.subr.mxu0 %v1869
    %4803 = vmatpush2.msra.mxu0 %v1868
    %4804 = vmatprep.subr.mxu0 %v1861
    %4805 = vmatpush2.msra.mxu0 %v1860
    %4806 = vmatprep.subr.mxu0 %v1853
    %4807 = vmatpush2.msra.mxu0 %v1852
    %4808 = vmatprep.subr.mxu0 %v1845
    %4809 = vmatpush2.msra.mxu0 %v1844
    %4810 = vmatprep.subr.mxu0 %v1837
    %4811 = vmatpush2.msra.mxu0 %v1836
    %4812 = vmatprep.subr.mxu0 %v1829
    %4813 = vmatpush2.msra.mxu0 %v1828
    %4814 = vmatprep.subr.mxu0 %v1821
    %4815 = vmatpush2.msra.mxu0 %v1820
    %4816 = vmatprep.subr.mxu0 %v1813
    %4817 = vmatpush2.msra.mxu0 %v1812
    %4818 = vmatprep.subr.mxu0 %v1805
    %4819 = vmatpush2.msra.mxu0 %v1804
    %4820 = vmatprep.subr.mxu0 %v1797
    %4821 = vmatpush2.msra.mxu0 %v1796
    %4822 = vmatprep.subr.mxu0 %v1789
    %4823 = vmatpush2.msra.mxu0 %v1788
    %4824 = vmatprep.subr.mxu0 %v1781
    %4825 = vmatpush2.msra.mxu0 %v1780
    %4826 = vmatprep.mubr.f32.mxu0 %v4609
    %4827 = vmatmul.mubr.f32.gmra.mxu0 %v4608
    %v4828 = vpop.f32.mrf.mxu0
    %v4829 = vadd.f32 0.0, %v4828
    %v4830 = vpop.f32.mrf.mxu0
    %v4831 = vadd.f32 0.0, %v4830
    %4832 = vdwg.mxu0
    %4833 = vmatprep.subr.mxu0 %v1775
    %4834 = vmatpush1.msra.mxu0 %v1774
    %4835 = vmatprep.subr.mxu0 %v1767
    %4836 = vmatpush1.msra.mxu0 %v1766
    %4837 = vmatprep.subr.mxu0 %v1759
    %4838 = vmatpush1.msra.mxu0 %v1758
    %4839 = vmatprep.subr.mxu0 %v1751
    %4840 = vmatpush1.msra.mxu0 %v1750
    %4841 = vmatprep.subr.mxu0 %v1743
    %4842 = vmatpush1.msra.mxu0 %v1742
    %4843 = vmatprep.subr.mxu0 %v1735
    %4844 = vmatpush1.msra.mxu0 %v1734
    %4845 = vmatprep.subr.mxu0 %v1727
    %4846 = vmatpush1.msra.mxu0 %v1726
    %4847 = vmatprep.subr.mxu0 %v1719
    %4848 = vmatpush1.msra.mxu0 %v1718
    %4849 = vmatprep.subr.mxu0 %v1711
    %4850 = vmatpush1.msra.mxu0 %v1710
    %4851 = vmatprep.subr.mxu0 %v1703
    %4852 = vmatpush1.msra.mxu0 %v1702
    %4853 = vmatprep.subr.mxu0 %v1695
    %4854 = vmatpush1.msra.mxu0 %v1694
    %4855 = vmatprep.subr.mxu0 %v1687
    %4856 = vmatpush1.msra.mxu0 %v1686
    %4857 = vmatprep.subr.mxu0 %v1679
    %4858 = vmatpush1.msra.mxu0 %v1678
    %4859 = vmatprep.subr.mxu0 %v1671
    %4860 = vmatpush1.msra.mxu0 %v1670
    %4861 = vmatprep.subr.mxu0 %v1663
    %4862 = vmatpush1.msra.mxu0 %v1662
    %4863 = vmatprep.subr.mxu0 %v1655
    %4864 = vmatpush1.msra.mxu0 %v1654
    %4865 = vmatprep.subr.mxu0 %v1903
    %4866 = vmatpush2.msra.mxu0 %v1902
    %4867 = vmatprep.subr.mxu0 %v1895
    %4868 = vmatpush2.msra.mxu0 %v1894
    %4869 = vmatprep.subr.mxu0 %v1887
    %4870 = vmatpush2.msra.mxu0 %v1886
    %4871 = vmatprep.subr.mxu0 %v1879
    %4872 = vmatpush2.msra.mxu0 %v1878
    %4873 = vmatprep.subr.mxu0 %v1871
    %4874 = vmatpush2.msra.mxu0 %v1870
    %4875 = vmatprep.subr.mxu0 %v1863
    %4876 = vmatpush2.msra.mxu0 %v1862
    %4877 = vmatprep.subr.mxu0 %v1855
    %4878 = vmatpush2.msra.mxu0 %v1854
    %4879 = vmatprep.subr.mxu0 %v1847
    %4880 = vmatpush2.msra.mxu0 %v1846
    %4881 = vmatprep.subr.mxu0 %v1839
    %4882 = vmatpush2.msra.mxu0 %v1838
    %4883 = vmatprep.subr.mxu0 %v1831
    %4884 = vmatpush2.msra.mxu0 %v1830
    %4885 = vmatprep.subr.mxu0 %v1823
    %4886 = vmatpush2.msra.mxu0 %v1822
    %4887 = vmatprep.subr.mxu0 %v1815
    %4888 = vmatpush2.msra.mxu0 %v1814
    %4889 = vmatprep.subr.mxu0 %v1807
    %4890 = vmatpush2.msra.mxu0 %v1806
    %4891 = vmatprep.subr.mxu0 %v1799
    %4892 = vmatpush2.msra.mxu0 %v1798
    %4893 = vmatprep.subr.mxu0 %v1791
    %4894 = vmatpush2.msra.mxu0 %v1790
    %4895 = vmatprep.subr.mxu0 %v1783
    %4896 = vmatpush2.msra.mxu0 %v1782
    %4897 = vmatprep.mubr.f32.mxu0 %v4609
    %4898 = vmatmul.mubr.f32.gmra.mxu0 %v4608
    %v4899 = vpop.f32.mrf.mxu0
    %v4900 = vadd.f32 0.0, %v4899
    %v4901 = vpop.f32.mrf.mxu0
    %v4902 = vadd.f32 0.0, %v4901
    %4903 = vdwg.mxu0
    %v4904 = vadd.f32 %v4612, %v4687
    %v4905 = vadd.f32 %v4613, %v4689
    %v4906 = vadd.f32 %v4614, %v4758
    %v4907 = vadd.f32 %v4615, %v4760
    %v4908 = vadd.f32 %v4616, %v4829
    %v4909 = vadd.f32 %v4617, %v4831
    %v4910 = vadd.f32 %v4618, %v4900
    %v4911 = vadd.f32 %v4619, %v4902
    %v4912 = vxor.u32 %v4904, 2147483648
    %v4913 = vxor.u32 %v4905, 2147483648
    %v4914 = vmul.f32 %v4912, 1.442695
    %v4915 = vpow.pop %v4914
    %v4916 = vmul.f32 %v4913, 1.442695
    %v4917 = vpow.pop %v4916
    %v4918 = vadd.f32 %v4915, 1.0
    %v4919 = vadd.f32 %v4917, 1.0
    %v4920 = vrcp.pop %v4918
    %v4921 = vmul.f32 1.0, %v4920
    %v4922 = vrcp.pop %v4919
    %v4923 = vmul.f32 1.0, %v4922
    %v4924 = vxor.u32 %v4906, 2147483648
    %v4925 = vxor.u32 %v4907, 2147483648
    %v4926 = vmul.f32 %v4924, 1.442695
    %v4927 = vpow.pop %v4926
    %v4928 = vmul.f32 %v4925, 1.442695
    %v4929 = vpow.pop %v4928
    %v4930 = vadd.f32 %v4927, 1.0
    %v4931 = vadd.f32 %v4929, 1.0
    %v4932 = vrcp.pop %v4930
    %v4933 = vmul.f32 1.0, %v4932
    %v4934 = vrcp.pop %v4931
    %v4935 = vmul.f32 1.0, %v4934
    %v4936 = vtanh.pop %v4908
    %v4937 = vtanh.pop %v4909
    %v4938 = vxor.u32 %v4910, 2147483648
    %v4939 = vxor.u32 %v4911, 2147483648
    %v4940 = vmul.f32 %v4938, 1.442695
    %v4941 = vpow.pop %v4940
    %v4942 = vmul.f32 %v4939, 1.442695
    %v4943 = vpow.pop %v4942
    %v4944 = vadd.f32 %v4941, 1.0
    %v4945 = vadd.f32 %v4943, 1.0
    %v4946 = vrcp.pop %v4944
    %v4947 = vmul.f32 1.0, %v4946
    %v4948 = vrcp.pop %v4945
    %v4949 = vmul.f32 1.0, %v4948
    %v4950 = vmul.f32 %v4933, %v4610
    %v4951 = vmul.f32 %v4935, %v4611
    %v4952 = vmul.f32 %v4921, %v4936
    %v4953 = vmul.f32 %v4923, %v4937
    %v4954 = vadd.f32 %v4950, %v4952
    %v4955 = vadd.f32 %v4951, %v4953
    %v4956 = vtanh.pop %v4954
    %v4957 = vtanh.pop %v4955
    %v4958 = vmul.f32 %v4947, %v4956
    %v4959 = vmul.f32 %v4949, %v4957
    %v4960 = vsel %vm2045, %v4958, %v4606
    %v4961 = vsel %vm2046, %v4959, %v4607
    %v4962 = vsel %vm2072, %v4958, %v4608
    %v4963 = vsel %vm2073, %v4959, %v4609
    %v4964 = vsel %vm2017, 1, 0
    %v4965 = vsel %vm2018, 1, 0
    %vm4966 = vcmp.eq.s32.totalorder %v4964, 1
    %vm4967 = vcmp.eq.s32.totalorder %v4965, 1
    %v4968 = vsel %vm4966, %v4960, %v4962
    %v4969 = vsel %vm4967, %v4961, %v4963
    %v4970 = vld [vmem:[#allocation8] sm:$0xff]
    %v4971 = vld [vmem:[#allocation8 + $0x8] sm:$0xff]
    %v4972 = vld [vmem:[#allocation8 + $0x10] sm:$0xff]
    %v4973 = vld [vmem:[#allocation8 + $0x18] sm:$0xff]
    %v4974 = vld [vmem:[#allocation8 + $0x20] sm:$0xff]
    %v4975 = vld [vmem:[#allocation8 + $0x28] sm:$0xff]
    %v4976 = vld [vmem:[#allocation8 + $0x30] sm:$0xff]
    %v4977 = vld [vmem:[#allocation8 + $0x38] sm:$0xff]
    %v4978 = vld [vmem:[#allocation8 + $0x40] sm:$0xff]
    %v4979 = vld [vmem:[#allocation8 + $0x48] sm:$0xff]
    %v4980 = vld [vmem:[#allocation8 + $0x50] sm:$0xff]
    %v4981 = vld [vmem:[#allocation8 + $0x58] sm:$0xff]
    %v4982 = vld [vmem:[#allocation8 + $0x60] sm:$0xff]
    %v4983 = vld [vmem:[#allocation8 + $0x68] sm:$0xff]
    %v4984 = vld [vmem:[#allocation8 + $0x70] sm:$0xff]
    %v4985 = vld [vmem:[#allocation8 + $0x78] sm:$0xff]
    %v4986 = vld [vmem:[#allocation8 + $0x80] sm:$0xff]
    %v4987 = vld [vmem:[#allocation8 + $0x88] sm:$0xff]
    %v4988 = vld [vmem:[#allocation8 + $0x90] sm:$0xff]
    %v4989 = vld [vmem:[#allocation8 + $0x98] sm:$0xff]
    %v4990 = vld [vmem:[#allocation8 + $0xa0] sm:$0xff]
    %v4991 = vld [vmem:[#allocation8 + $0xa8] sm:$0xff]
    %v4992 = vld [vmem:[#allocation8 + $0xb0] sm:$0xff]
    %v4993 = vld [vmem:[#allocation8 + $0xb8] sm:$0xff]
    %v4994 = vld [vmem:[#allocation8 + $0xc0] sm:$0xff]
    %v4995 = vld [vmem:[#allocation8 + $0xc8] sm:$0xff]
    %v4996 = vld [vmem:[#allocation8 + $0xd0] sm:$0xff]
    %v4997 = vld [vmem:[#allocation8 + $0xd8] sm:$0xff]
    %v4998 = vld [vmem:[#allocation8 + $0xe0] sm:$0xff]
    %v4999 = vld [vmem:[#allocation8 + $0xe8] sm:$0xff]
    %v5000 = vld [vmem:[#allocation8 + $0xf0] sm:$0xff]
    %v5001 = vld [vmem:[#allocation8 + $0xf8] sm:$0xff]
    %v5002 = vld [vmem:[%s6] sm:$0x1]
    %v5004 = vlaneseq
    %v5005 = vshrl.u32 %v5004, 7
    %v5006 = vsub.s32 0, %v5005
    %v5007 = vrot.slane %v5002, %v5006
    %5009 = vmatprep.subr.mxu0 0.0
    %5010 = vmatpush1.msra.mxu0 %v4985
    %5011 = vmatprep.subr.mxu0 0.0
    %5012 = vmatpush1.msra.mxu0 %v4984
    %5013 = vmatprep.subr.mxu0 0.0
    %5014 = vmatpush1.msra.mxu0 %v4983
    %5015 = vmatprep.subr.mxu0 0.0
    %5016 = vmatpush1.msra.mxu0 %v4982
    %5017 = vmatprep.subr.mxu0 0.0
    %5018 = vmatpush1.msra.mxu0 %v4981
    %5019 = vmatprep.subr.mxu0 0.0
    %5020 = vmatpush1.msra.mxu0 %v4980
    %5021 = vmatprep.subr.mxu0 0.0
    %5022 = vmatpush1.msra.mxu0 %v4979
    %5023 = vmatprep.subr.mxu0 0.0
    %5024 = vmatpush1.msra.mxu0 %v4978
    %5025 = vmatprep.subr.mxu0 0.0
    %5026 = vmatpush1.msra.mxu0 %v4977
    %5027 = vmatprep.subr.mxu0 0.0
    %5028 = vmatpush1.msra.mxu0 %v4976
    %5029 = vmatprep.subr.mxu0 0.0
    %5030 = vmatpush1.msra.mxu0 %v4975
    %5031 = vmatprep.subr.mxu0 0.0
    %5032 = vmatpush1.msra.mxu0 %v4974
    %5033 = vmatprep.subr.mxu0 0.0
    %5034 = vmatpush1.msra.mxu0 %v4973
    %5035 = vmatprep.subr.mxu0 0.0
    %5036 = vmatpush1.msra.mxu0 %v4972
    %5037 = vmatprep.subr.mxu0 0.0
    %5038 = vmatpush1.msra.mxu0 %v4971
    %5039 = vmatprep.subr.mxu0 0.0
    %5040 = vmatpush1.msra.mxu0 %v4970
    %5041 = vmatprep.subr.mxu0 0.0
    %5042 = vmatpush2.msra.mxu0 %v5001
    %5043 = vmatprep.subr.mxu0 0.0
    %5044 = vmatpush2.msra.mxu0 %v5000
    %5045 = vmatprep.subr.mxu0 0.0
    %5046 = vmatpush2.msra.mxu0 %v4999
    %5047 = vmatprep.subr.mxu0 0.0
    %5048 = vmatpush2.msra.mxu0 %v4998
    %5049 = vmatprep.subr.mxu0 0.0
    %5050 = vmatpush2.msra.mxu0 %v4997
    %5051 = vmatprep.subr.mxu0 0.0
    %5052 = vmatpush2.msra.mxu0 %v4996
    %5053 = vmatprep.subr.mxu0 0.0
    %5054 = vmatpush2.msra.mxu0 %v4995
    %5055 = vmatprep.subr.mxu0 0.0
    %5056 = vmatpush2.msra.mxu0 %v4994
    %5057 = vmatprep.subr.mxu0 0.0
    %5058 = vmatpush2.msra.mxu0 %v4993
    %5059 = vmatprep.subr.mxu0 0.0
    %5060 = vmatpush2.msra.mxu0 %v4992
    %5061 = vmatprep.subr.mxu0 0.0
    %5062 = vmatpush2.msra.mxu0 %v4991
    %5063 = vmatprep.subr.mxu0 0.0
    %5064 = vmatpush2.msra.mxu0 %v4990
    %5065 = vmatprep.subr.mxu0 0.0
    %5066 = vmatpush2.msra.mxu0 %v4989
    %5067 = vmatprep.subr.mxu0 0.0
    %5068 = vmatpush2.msra.mxu0 %v4988
    %5069 = vmatprep.subr.mxu0 0.0
    %5070 = vmatpush2.msra.mxu0 %v4987
    %5071 = vmatprep.subr.mxu0 0.0
    %5072 = vmatpush2.msra.mxu0 %v4986
    %5073 = vmatprep.mubr.f32.mxu0 %v4969
    %5074 = vmatmul.mubr.f32.gmra.mxu0 %v4968
    %v5075 = vpop.f32.mrf.mxu0
    %v5076 = vadd.f32 %v5007, %v5075
    %v5077 = vpop.f32.mrf.mxu0
    %5078 = vdwg.mxu0
    %vm5079 = vcmask 1041408
    %v5080 = vsel %vm5079, %v5076, -inf
    %5081 = vmax.xlane.f32.xlu0 %v5080
    %v5082 = vpop.xlane.xlu0 %5081
    %v5083 = vsub.f32 %v5076, %v5082
    %v5084 = vmul.f32 %v5083, 1.442695
    %v5085 = vpow.pop %v5084
    %v5086 = vsel %vm5079, %v5085, 0.0
    %5087 = vadd.xlane.f32.xlu0 %v5086
    %v5088 = vpop.xlane.xlu0 %5087
    %v5089 = vrcp.pop %v5088
    %v5090 = vmul.f32 %v5085, %v5089
    %5091 = vst [vmem:[#allocation10] sm:$0x3] %v5090
    // Predicated region
    $region46: #{tpu_custom_call.1} parent=1 // pred_check
      _
    $region47: #{tpu_custom_call.1} parent=1 // pred_check_branch
      %5093 = sbr.rel (0) target = $region49
    $region48: #{tpu_custom_call.1} parent=1 // pred_region
      %s5095 = ssub.s32 32, 32
      %5096 = vsyncadd [#allocation4], %s5095
      %s5098 = sshll.u32 [#allocation10], 4
      %s5099 = int_to_ptr.vmem [resolvable:$true] %s5098
      %5101 = dma.vmem_to_hbm [thread:$0]  %s5099, 32, %s7, [#allocation4]
    $region49: #{tpu_custom_call.1} parent=1 // pred_fallthru
      _
    // Predicated region
    $region50: #{tpu_custom_call.1} parent=1 // pred_check
      _
    $region51: #{tpu_custom_call.1} parent=1 // pred_check_branch
      %5103 = sbr.rel (0) target = $region53
    $region52: #{tpu_custom_call.1} parent=1 // pred_region
      %5104 = dma.done [#allocation4], 32
    $region53: #{tpu_custom_call.1} parent=1 // pred_fallthru
      _
    %5105 = vsyncpa [#allocation3], 1
    %5106 = vsyncpa [#allocation6], 1
    %5107 = vsyncpa [#allocation9], 1
    %5108 = vsyncpa [#allocation4], 1

</llo_original>
